<compile_context>
chip_gen: v7x
topology: tpu7x:2x2x1
jax: 0.10.0
libtpu: 0.0.40
codegen_flags: <defaults>
</compile_context>

<pallas_src>
import jax
import jax.numpy as jnp
from jax.experimental import pallas as pl
from jax.experimental.pallas import tpu as pltpu

FEATURE_DIM = 64

# bias-pack lane offsets (each segment 128-lane aligned) for the gaussian kernel
B_FR1, B_FR2, B_FR3 = 0, 256, 384
B_LNG, B_LNB = 512, 640
B_BC1, B_BC2, B_BC3 = 768, 896, 1024
B_SR1, B_SR2, B_SR3 = 1152, 1408, 1664
B_TOTAL = 1792


def _round_up(n, m):
    return ((n + m - 1) // m) * m


def _relu(x):
    return jnp.maximum(x, 0.0)


def _dot_bf16(x, w):
    # bf16 operands on the MXU, f32 accumulate; elementwise math stays f32.
    return jnp.dot(x.astype(jnp.bfloat16), w, preferred_element_type=jnp.float32)


def _sigmoid(x):
    # exact (non-approx) sigmoid: user-visible outputs keep parity with torch.sigmoid
    return 1.0 / (1.0 + jnp.exp(-x))


# ----------------------------------------------------------------------------
# Kernel 1: pixel path — conv (im2col matmul) + ReLU + position_field MLP
# ----------------------------------------------------------------------------
def _pixel_kernel(patch_ref, cw_ref, w1_ref, w2_ref, w3_ref, b_ref,
                  feat_ref, pos_ref):
    # feature_net stand-in: 3x3 conv as matmul over im2col patches, + ReLU
    feat = _relu(jnp.dot(patch_ref[...], cw_ref[...],
                         preferred_element_type=jnp.float32) + b_ref[:, 0:64])
    # position_field: 64 -> 64 -> 64 -> 1 (+sigmoid on the single real lane)
    h = _relu(_dot_bf16(feat, w1_ref[...]) + b_ref[:, 64:128])
    h = _relu(_dot_bf16(h, w2_ref[...]) + b_ref[:, 128:192])
    logit = _dot_bf16(h, w3_ref[...])[:, 0:1] + b_ref[:, 192:193]
    feat_ref[...] = feat.astype(jnp.bfloat16)          # bf16 writeback (halves HBM)
    pos_ref[...] = _sigmoid(logit)                      # (tile,1) f32


def pixel_forward(pp, patches_bf16):
    n, din = patches_bf16.shape
    if n >= 2048:
        row_tile = 1024
    else:
        # guarantee >=2 grid steps when possible so v7x's two TensorCores both work
        row_tile = max(16, _round_up(max(n // 2, 8), 16))
    npad = _round_up(n, row_tile)
    xp = jnp.pad(patches_bf16, ((0, npad - n), (0, 0)))
    w1, w2, w3 = pp["pos_w"]
    const = lambda a: pl.BlockSpec(a.shape, lambda i: (0, 0))

    feat, pos = pl.pallas_call(
        _pixel_kernel,
        out_shape=(jax.ShapeDtypeStruct((npad, FEATURE_DIM), jnp.bfloat16),
                   jax.ShapeDtypeStruct((npad, 1), jnp.float32)),
        grid=(npad // row_tile,),
        in_specs=[pl.BlockSpec((row_tile, din), lambda i: (i, 0)),
                  const(pp["conv_w"]), const(w1), const(w2), const(w3),
                  const(pp["pix_b"])],
        out_specs=(pl.BlockSpec((row_tile, FEATURE_DIM), lambda i: (i, 0)),
                   pl.BlockSpec((row_tile, 1), lambda i: (i, 0))),
        compiler_params=pltpu.CompilerParams(dimension_semantics=("parallel",)),
    )(xp, pp["conv_w"], w1, w2, w3, pp["pix_b"])
    return feat[:n], pos[:n]            # (H*W,64) bf16, (H*W,1) f32


# ----------------------------------------------------------------------------
# Kernel 2: fused gaussian path
#   feature_reduction + LayerNorm + bc_field + softmax + xy + neighbor gather
#   + fused scale_rot_field||color_field + epilogue, in ONE pallas_call.
# ----------------------------------------------------------------------------
def _gauss_kernel(mapf_ref, aux_ref, nbr_ref, wfr_ref, wbc_ref, wsrc_ref, b_ref,
                  o_ref):
    n = mapf_ref.shape[0]
    bias = lambda off, d: b_ref[:, off:off + d]

    # feature_reduction MLP (256 -> 256 -> 128 -> 64) + LayerNorm
    h = _relu(_dot_bf16(mapf_ref[...], wfr_ref[:, 0:256]) + bias(B_FR1, 256))
    h = _relu(_dot_bf16(h, wfr_ref[:, 256:384]) + bias(B_FR2, 128))
    h = _dot_bf16(h, wfr_ref[0:128, 384:448]) + bias(B_FR3, 64)
    mu = jnp.mean(h, axis=-1, keepdims=True)
    var = jnp.mean((h - mu) ** 2, axis=-1, keepdims=True)
    reduced = (h - mu) * jax.lax.rsqrt(var + 1e-5) * bias(B_LNG, 64) + bias(B_LNB, 64)

    # mlp_feature = [ell_feature | tri_norm | color_feature | reduced]  -> (n, 86)
    mlp_feature = jnp.concatenate([aux_ref[:, 0:22], reduced], axis=-1)

    # bc_field MLP (86 -> 86 -> 86 -> 3) + softmax
    hb = _relu(_dot_bf16(mlp_feature, wbc_ref[:, 0:86]) + bias(B_BC1, 86))
    hb = _relu(_dot_bf16(hb, wbc_ref[:, 128:214]) + bias(B_BC2, 86))
    hb = _dot_bf16(hb, wbc_ref[:, 256:259]) + bias(B_BC3, 3)
    m = jnp.max(hb, axis=-1, keepdims=True)
    e = jnp.exp(hb - m)
    bc = e / jnp.sum(e, axis=-1, keepdims=True)                      # (n,3)

    # xy = bc @ triangles, clipped
    tx = aux_ref[:, 25:28]
    ty = aux_ref[:, 28:31]
    px = jnp.sum(bc * tx, axis=-1, keepdims=True)
    py = jnp.sum(bc * ty, axis=-1, keepdims=True)
    xy = jnp.clip(jnp.concatenate([px, py], axis=-1), -1.0 + 1e-6, 1.0 - 1e-6)

    # neighbor gather via one-hot matmul on the resident rows (== gather + bf16 cast,
    # since the downstream MXU operand is bf16 anyway)
    ids = nbr_ref[...]                                               # (n,3) int32
    col = jax.lax.broadcasted_iota(jnp.int32, (n, n), 1)
    xyb = xy.astype(jnp.bfloat16)
    nbr_xy = [jnp.dot((col == ids[:, k:k + 1]).astype(jnp.bfloat16), xyb,
                      preferred_element_type=jnp.float32)
              for k in range(3)]

    # mlp_feature2 = [xy | xy[n0] | xy[n1] | xy[n2] | mlp_feature | 0-pad] -> (n,188)
    x2 = jnp.concatenate([xy] + nbr_xy
                         + [mlp_feature, jnp.zeros((n, 94), jnp.float32)], axis=-1)

    # fused scale_rot_field || color_field (block-diagonal, 188 -> 188 -> 4)
    hs = _relu(_dot_bf16(x2, wsrc_ref[:, 0:188]) + bias(B_SR1, 188))
    hs = _relu(_dot_bf16(hs, wsrc_ref[:, 256:444]) + bias(B_SR2, 188))
    y2 = _dot_bf16(hs, wsrc_ref[:, 512:516]) + bias(B_SR3, 4)        # (n,4)
    sr = y2[:, 0:3]
    clogit = y2[:, 3:4]

    # scaling_activation(scale_rot[:, :2]) * e_size
    xs = 50.0 * jnp.tanh(0.02 * sr[:, 0:2])
    neg = 0.5 * jnp.exp(0.5 * xs)
    u = 0.25 * xs - 2.5                                  # softplus(beta=-2, threshold=4)
    sp = jnp.where(-2.0 * u > 4.0, u,
                   -0.5 * jnp.log(1.0 + jnp.exp(jnp.minimum(-2.0 * u, 30.0)))) + 3.0
    scaling = jnp.where(xs < 0.0, neg, sp) * aux_ref[:, 22:24]

    rotation = _sigmoid(jnp.tanh(sr[:, 2:3]) + aux_ref[:, 24:25])
    csig = _sigmoid(clogit)                              # color sigmoid; *sampled_color in JAX

    pad = jnp.zeros((n, 128 - 6), jnp.float32)
    o_ref[...] = jnp.concatenate([xy, scaling, rotation, csig, pad], axis=-1)


def gaussian_forward(pp, map_feature, aux, neighbors):
    n = map_feature.shape[0]
    npad = _round_up(n, 16)
    padr = lambda a: jnp.pad(a, ((0, npad - n), (0, 0)))
    mapf = padr(map_feature.astype(jnp.bfloat16))
    auxp = padr(aux.astype(jnp.float32))
    nbrp = padr(neighbors.astype(jnp.int32))
    full = lambda a: pl.BlockSpec(a.shape, lambda i: (0, 0))

    out = pl.pallas_call(
        _gauss_kernel,
        out_shape=jax.ShapeDtypeStruct((npad, 128), jnp.float32),
        grid=(1,),
        in_specs=[full(mapf), full(auxp), full(nbrp),
                  full(pp["w_fr"]), full(pp["w_bc"]), full(pp["w_src"]),
                  full(pp["g_bias"])],
        out_specs=pl.BlockSpec((npad, 128), lambda i: (i, 0)),
        compiler_params=pltpu.CompilerParams(dimension_semantics=("arbitrary",)),
    )(mapf, auxp, nbrp, pp["w_fr"], pp["w_bc"], pp["w_src"], pp["g_bias"])
    # xy, scaling, rotation, color-sigmoid
    return out[:n, 0:2], out[:n, 2:4], out[:n, 4:5], out[:n, 5:6]


# ----------------------------------------------------------------------------
# JAX glue: channel-last bilinear grid_sample (align_corners=False, zero pad), im2col
# ----------------------------------------------------------------------------
def grid_sample_hwc(img_hwc, grid):
    # img_hwc: (H,W,C); grid: (...,2), x->W, y->H in [-1,1].
    # TODO(synk): data-dependent gather kept in plain JAX (no clean Pallas TPU gather).
    h, w, _ = img_hwc.shape
    gx, gy = grid[..., 0], grid[..., 1]
    ix = ((gx + 1.0) * w - 1.0) / 2.0
    iy = ((gy + 1.0) * h - 1.0) / 2.0
    ix0 = jnp.floor(ix)
    iy0 = jnp.floor(iy)
    ix1, iy1 = ix0 + 1.0, iy0 + 1.0
    wx1, wy1 = ix - ix0, iy - iy0
    wx0, wy0 = 1.0 - wx1, 1.0 - wy1

    def tap(iy_, ix_):
        valid = ((ix_ >= 0) & (ix_ <= w - 1) & (iy_ >= 0) & (iy_ <= h - 1)
                 ).astype(jnp.float32)
        ixc = jnp.clip(ix_, 0, w - 1).astype(jnp.int32)
        iyc = jnp.clip(iy_, 0, h - 1).astype(jnp.int32)
        return img_hwc[iyc, ixc, :].astype(jnp.float32) * valid[..., None]

    return (tap(iy0, ix0) * (wy0 * wx0)[..., None]
            + tap(iy0, ix1) * (wy0 * wx1)[..., None]
            + tap(iy1, ix0) * (wy1 * wx0)[..., None]
            + tap(iy1, ix1) * (wy1 * wx1)[..., None])


def normalize_tri(tri):
    x1, y1 = tri[:, 0, 0], tri[:, 0, 1]
    x2, y2 = tri[:, 1, 0], tri[:, 1, 1]
    x3, y3 = tri[:, 2, 0], tri[:, 2, 1]
    areas = 0.5 * jnp.abs(x1 * (y2 - y3) + x2 * (y3 - y1) + x3 * (y1 - y2))
    scales = jnp.sqrt(1.0 / areas)[:, None, None]
    centers = jnp.mean(tri, axis=1, keepdims=True)
    return ((tri - centers) * scales).reshape(-1, 6)


def im2col_3x3(image_nchw):
    # (1,3,H,W) -> (H*W, 27) bf16, patch order (cin, kh, kw) matching conv weights.
    _, c, h, w = image_nchw.shape
    xp = jnp.pad(image_nchw, ((0, 0), (0, 0), (1, 1), (1, 1)))
    pats = []
    for dy in range(3):
        for dx in range(3):
            pats.append(xp[:, :, dy:dy + h, dx:dx + w])
    p = jnp.stack(pats, axis=2)                              # (1,C,9,H,W)
    p = jnp.transpose(p, (0, 3, 4, 1, 2)).reshape(h * w, c * 9)
    return p.astype(jnp.bfloat16)


# ----------------------------------------------------------------------------
# Parameters (deterministic trunc_normal(std=0.02) -> normal*0.02, bias 0)
# ----------------------------------------------------------------------------
def _lin(key, din, dout):
    return (jax.random.normal(key, (din, dout), jnp.float32) * 0.02,
            jnp.zeros((dout,), jnp.float32))


def _block_diag(a, b):
    d1, o1 = a.shape
    d2, o2 = b.shape
    top = jnp.concatenate([a, jnp.zeros((d1, o2), a.dtype)], axis=1)
    bot = jnp.concatenate([jnp.zeros((d2, o1), b.dtype), b], axis=1)
    return jnp.concatenate([top, bot], axis=0)


def init_params(key):
    ks = iter(jax.random.split(key, 32))
    p = {}
    # TODO(synk): ConvNeXtUnet backbone not provided; stand-in = single 3x3 conv (3->64) + ReLU.
    p["conv_w"] = (jax.random.normal(next(ks), (FEATURE_DIM, 3, 3, 3), jnp.float32) * 0.02
                   ).reshape(FEATURE_DIM, 27).T                       # (27, 64)
    p["conv_b"] = jnp.zeros((FEATURE_DIM,), jnp.float32)
    p["position_field"] = [_lin(next(ks), 64, 64), _lin(next(ks), 64, 64), _lin(next(ks), 64, 1)]
    p["feature_reduction"] = [_lin(next(ks), 256, 256), _lin(next(ks), 256, 128), _lin(next(ks), 128, 64)]
    p["fr_ln"] = (jnp.ones((64,), jnp.float32), jnp.zeros((64,), jnp.float32))
    p["bc_field"] = [_lin(next(ks), 86, 86), _lin(next(ks), 86, 86), _lin(next(ks), 86, 3)]
    p["scale_rot_field"] = [_lin(next(ks), 94, 94), _lin(next(ks), 94, 94), _lin(next(ks), 94, 3)]
    p["color_field"] = [_lin(next(ks), 94, 94), _lin(next(ks), 94, 94), _lin(next(ks), 94, 1)]
    return p


def prepare_params(p):
    """One-time preprocessing: bf16 weights, packed biases, fused/packed weight slabs."""
    bf = lambda w: w.astype(jnp.bfloat16)
    pp = {}

    # ---- pixel path ----
    pp["conv_w"] = bf(p["conv_w"])                                    # (27,64)
    (w1, b1), (w2, b2), (w3, b3) = p["position_field"]
    w3p = jnp.pad(w3, ((0, 0), (0, FEATURE_DIM - w3.shape[1])))       # (64,64), col0 real
    pp["pos_w"] = (bf(w1), bf(w2), bf(w3p))
    pix_b = jnp.zeros((1, 256), jnp.float32)
    pix_b = pix_b.at[0, 0:64].set(p["conv_b"])
    pix_b = pix_b.at[0, 64:128].set(b1)
    pix_b = pix_b.at[0, 128:192].set(b2)
    pix_b = pix_b.at[0, 192:193].set(b3)
    pp["pix_b"] = pix_b

    # ---- gaussian path: packed weight slabs ----
    (f1w, f1b), (f2w, f2b), (f3w, f3b) = p["feature_reduction"]
    g, be = p["fr_ln"]
    (c1w, c1b), (c2w, c2b), (c3w, c3b) = p["bc_field"]
    sr, cf = p["scale_rot_field"], p["color_field"]

    wfr = jnp.zeros((256, 448), jnp.float32)
    wfr = wfr.at[0:256, 0:256].set(f1w)
    wfr = wfr.at[0:256, 256:384].set(f2w)
    wfr = wfr.at[0:128, 384:448].set(f3w)
    pp["w_fr"] = bf(wfr)

    wbc = jnp.zeros((86, 384), jnp.float32)
    wbc = wbc.at[:, 0:86].set(c1w)
    wbc = wbc.at[:, 128:214].set(c2w)
    wbc = wbc.at[:, 256:259].set(c3w)
    pp["w_bc"] = bf(wbc)

    # fuse scale_rot_field || color_field (shared input) into one block-diagonal MLP
    w1f = jnp.concatenate([sr[0][0], cf[0][0]], axis=1)               # (94, 188)
    b1f = jnp.concatenate([sr[0][1], cf[0][1]], axis=0)
    w2f = _block_diag(sr[1][0], cf[1][0])                             # (188, 188)
    b2f = jnp.concatenate([sr[1][1], cf[1][1]], axis=0)
    w3f = _block_diag(sr[2][0], cf[2][0])                             # (188, 4)
    b3f = jnp.concatenate([sr[2][1], cf[2][1]], axis=0)
    wsrc = jnp.zeros((188, 640), jnp.float32)
    wsrc = wsrc.at[0:94, 0:188].set(w1f)     # rows 94:188 zero (input is zero-padded)
    wsrc = wsrc.at[:, 256:444].set(w2f)
    wsrc = wsrc.at[:, 512:516].set(w3f)
    pp["w_src"] = bf(wsrc)

    gbias = jnp.zeros((1, B_TOTAL), jnp.float32)
    for off, v in [(B_FR1, f1b), (B_FR2, f2b), (B_FR3, f3b), (B_LNG, g), (B_LNB, be),
                   (B_BC1, c1b), (B_BC2, c2b), (B_BC3, c3b),
                   (B_SR1, b1f), (B_SR2, b2f), (B_SR3, b3f)]:
        gbias = gbias.at[0, off:off + v.shape[0]].set(v)
    pp["g_bias"] = gbias
    return pp


def synth_ellipse_process(key, n):
    # TODO(synk): EllipseProcess.process (ellipse/Delaunay extraction) is external;
    # generate deterministic synthetic triangles / ellipse params / neighbors instead.
    k1, k2, k3, k4, k5 = jax.random.split(key, 5)
    centers = jax.random.uniform(k1, (n, 1, 2), minval=-0.8, maxval=0.8)
    base = jnp.array([[0.0, 0.12], [-0.10, -0.08], [0.10, -0.08]], jnp.float32)
    jitter = jax.random.uniform(k2, (n, 3, 2), minval=-0.02, maxval=0.02)
    triangles = centers + base[None] + jitter
    e_center = centers[:, 0, :]
    e_size = jax.random.uniform(k3, (n, 2), minval=0.05, maxval=0.2)
    e_angle = jax.random.uniform(k4, (n,), minval=0.1, maxval=0.9)
    neighbors = jax.random.randint(k5, (n, 3), 0, n)
    return triangles, e_center, e_size, e_angle, neighbors


# ----------------------------------------------------------------------------
# InitNet.forward (get_gaussians=True path; gsplat render is external CUDA)
# ----------------------------------------------------------------------------
def init_net_forward(pp, image, ell):
    b, _, h, w = image.shape  # NCHW, b == 1
    # pixel path: fused conv + position_field (one pallas_call, two outputs)
    patches = im2col_3x3(image)                        # (H*W, 27) bf16
    feat, pos = pixel_forward(pp, patches)             # (H*W,64) bf16, (H*W,1) f32
    fmap_hwc = feat.reshape(h, w, FEATURE_DIM)         # channel-last, no transpose
    out_position = pos.reshape(b, h, w)
    img_hwc = jnp.transpose(image[0], (1, 2, 0))       # (H,W,3)

    triangles, e_center, e_size, e_angle, neighbors = ell

    # sample_operation (bilinear gathers, channel-last, in JAX)
    tri_feature = grid_sample_hwc(fmap_hwc, triangles)                    # (N,3,64)
    tri_color = grid_sample_hwc(img_hwc, triangles)                       # (N,3,3)
    center_feature = grid_sample_hwc(fmap_hwc, e_center[:, None, :])      # (N,1,64)
    center_color = grid_sample_hwc(img_hwc, e_center[:, None, :])         # (N,1,3)
    map_feature = jnp.concatenate([tri_feature, center_feature], axis=1
                                  ).reshape(-1, 4 * FEATURE_DIM)          # (N,256)
    color_feature = jnp.concatenate([tri_color, center_color], axis=1).reshape(-1, 12)

    tri_norm = normalize_tri(triangles)                                   # (N,6)
    ell_feature = jnp.concatenate(
        [e_center, e_size[:, 0:1] / (e_size[:, 1:2] + 1e-4), e_angle[:, None]], axis=1)
    inv_e_angle = jnp.log(e_angle[:, None] / (1.0 - e_angle[:, None]))    # inv_sigmoid
    # aux pack: [ell(4)|tri_norm(6)|color(12)|e_size(2)|inv_angle(1)|tri_x(3)|tri_y(3)]
    aux = jnp.concatenate([ell_feature, tri_norm, color_feature, e_size, inv_e_angle,
                           triangles[:, :, 0], triangles[:, :, 1]], axis=1)   # (N,31)

    # fused gaussian kernel: feature_reduction + LN + bc softmax + xy + neighbors +
    # scale_rot/color heads + epilogue
    xy, scaling, rotation, csig = gaussian_forward(pp, map_feature, aux, neighbors)

    sampled_color = grid_sample_hwc(img_hwc, jax.lax.stop_gradient(xy))   # (N,3)
    color = csig * sampled_color

    # TODO(synk): project_gaussians_2d_scale_rot / rasterize_gaussians_sum (gsplat CUDA
    # rasterizer) have no Pallas equivalent; return the get_gaussians=True branch outputs.
    return out_position, xy, scaling, rotation, color, triangles


if __name__ == "__main__":
    key = jax.random.PRNGKey(0)
    k_img, k_par, k_ell = jax.random.split(key, 3)

    H = W = 16
    image = jax.random.uniform(k_img, (1, 3, H, W), jnp.float32)   # NCHW, like PyTorch
    params = prepare_params(init_params(k_par))
    ell = synth_ellipse_process(k_ell, 64)

    fwd = jax.jit(init_net_forward)
    outs = jax.block_until_ready(fwd(params, image, ell))

    out_position, xy, scaling, rotation, color, triangles = outs
    assert out_position.shape == (1, H, W)
    assert xy.shape == (64, 2) and scaling.shape == (64, 2)
    assert rotation.shape == (64, 1) and color.shape == (64, 3)
    assert all(bool(jnp.all(jnp.isfinite(o))) for o in outs)
    print("KERNEL_OK")
</pallas_src>

<mosaic_0001>
module attributes {stable_mosaic.version = 11 : i64} {
  func.func @_pixel_kernel(%arg0: i32, %arg1: memref<128x27xbf16, #tpu.memory_space<vmem>>, %arg2: memref<27x64xbf16, #tpu.memory_space<vmem>>, %arg3: memref<64x64xbf16, #tpu.memory_space<vmem>>, %arg4: memref<64x64xbf16, #tpu.memory_space<vmem>>, %arg5: memref<64x64xbf16, #tpu.memory_space<vmem>>, %arg6: memref<1x256xf32, #tpu.memory_space<vmem>>, %arg7: memref<128x64xbf16, #tpu.memory_space<vmem>>, %arg8: memref<128x1xf32, #tpu.memory_space<vmem>>) attributes {dimension_semantics = [#tpu.dimension_semantics<parallel>], iteration_bounds = array<i64: 2>, scalar_prefetch = 0 : i64, scratch_operands = 0 : i64, tpu.core_type = #tpu.core_type<tc>, window_params = [{transform_indices = @transform_0, window_bounds = array<i64: 128, 27>}, {pipeline_mode = #tpu.pipeline_mode<synchronous>, transform_indices = @transform_1, window_bounds = array<i64: 27, 64>}, {pipeline_mode = #tpu.pipeline_mode<synchronous>, transform_indices = @transform_2, window_bounds = array<i64: 64, 64>}, {pipeline_mode = #tpu.pipeline_mode<synchronous>, transform_indices = @transform_3, window_bounds = array<i64: 64, 64>}, {pipeline_mode = #tpu.pipeline_mode<synchronous>, transform_indices = @transform_4, window_bounds = array<i64: 64, 64>}, {pipeline_mode = #tpu.pipeline_mode<synchronous>, transform_indices = @transform_5, window_bounds = array<i64: 1, 256>}, {transform_indices = @transform_6, window_bounds = array<i64: 128, 64>}, {transform_indices = @transform_7, window_bounds = array<i64: 128, 1>}]} {
    %c0 = arith.constant 0 : index
    %c0_0 = arith.constant 0 : index
    %0 = vector.load %arg1[%c0, %c0_0] : memref<128x27xbf16, #tpu.memory_space<vmem>>, vector<128x27xbf16>
    %c0_1 = arith.constant 0 : index
    %c0_2 = arith.constant 0 : index
    %1 = vector.load %arg2[%c0_1, %c0_2] : memref<27x64xbf16, #tpu.memory_space<vmem>>, vector<27x64xbf16>
    %cst = arith.constant dense<0.000000e+00> : vector<128x64xf32>
    %2 = tpu.matmul %0, %1, %cst {dimension_numbers = #tpu.dot_dimension_numbers<[1], [0], [0], [1], [0, 0, 1, 1], [], []>} : vector<128x27xbf16>, vector<27x64xbf16>, vector<128x64xf32> -> vector<128x64xf32>
    %c0_3 = arith.constant 0 : index
    %c0_4 = arith.constant 0 : index
    %3 = vector.load %arg6[%c0_3, %c0_4] : memref<1x256xf32, #tpu.memory_space<vmem>>, vector<1x64xf32>
    %4 = vector.broadcast %3 : vector<1x64xf32> to vector<128x64xf32>
    %5 = arith.addf %2, %4 : vector<128x64xf32>
    %cst_5 = arith.constant 0.000000e+00 : f32
    %6 = vector.broadcast %cst_5 : f32 to vector<128x64xf32>
    %7 = arith.maximumf %5, %6 : vector<128x64xf32>
    %c0_6 = arith.constant 0 : index
    %c0_7 = arith.constant 0 : index
    %8 = vector.load %arg3[%c0_6, %c0_7] : memref<64x64xbf16, #tpu.memory_space<vmem>>, vector<64x64xbf16>
    %9 = arith.truncf %7 : vector<128x64xf32> to vector<128x64xbf16>
    %cst_8 = arith.constant dense<0.000000e+00> : vector<128x64xf32>
    %10 = tpu.matmul %9, %8, %cst_8 {dimension_numbers = #tpu.dot_dimension_numbers<[1], [0], [0], [1], [0, 0, 1, 1], [], []>} : vector<128x64xbf16>, vector<64x64xbf16>, vector<128x64xf32> -> vector<128x64xf32>
    %c0_9 = arith.constant 0 : index
    %c64 = arith.constant 64 : index
    %11 = vector.load %arg6[%c0_9, %c64] : memref<1x256xf32, #tpu.memory_space<vmem>>, vector<1x64xf32>
    %12 = vector.broadcast %11 : vector<1x64xf32> to vector<128x64xf32>
    %13 = arith.addf %10, %12 : vector<128x64xf32>
    %cst_10 = arith.constant 0.000000e+00 : f32
    %14 = vector.broadcast %cst_10 : f32 to vector<128x64xf32>
    %15 = arith.maximumf %13, %14 : vector<128x64xf32>
    %c0_11 = arith.constant 0 : index
    %c0_12 = arith.constant 0 : index
    %16 = vector.load %arg4[%c0_11, %c0_12] : memref<64x64xbf16, #tpu.memory_space<vmem>>, vector<64x64xbf16>
    %17 = arith.truncf %15 : vector<128x64xf32> to vector<128x64xbf16>
    %cst_13 = arith.constant dense<0.000000e+00> : vector<128x64xf32>
    %18 = tpu.matmul %17, %16, %cst_13 {dimension_numbers = #tpu.dot_dimension_numbers<[1], [0], [0], [1], [0, 0, 1, 1], [], []>} : vector<128x64xbf16>, vector<64x64xbf16>, vector<128x64xf32> -> vector<128x64xf32>
    %c0_14 = arith.constant 0 : index
    %c128 = arith.constant 128 : index
    %19 = vector.load %arg6[%c0_14, %c128] : memref<1x256xf32, #tpu.memory_space<vmem>>, vector<1x64xf32>
    %20 = vector.broadcast %19 : vector<1x64xf32> to vector<128x64xf32>
    %21 = arith.addf %18, %20 : vector<128x64xf32>
    %cst_15 = arith.constant 0.000000e+00 : f32
    %22 = vector.broadcast %cst_15 : f32 to vector<128x64xf32>
    %23 = arith.maximumf %21, %22 : vector<128x64xf32>
    %c0_16 = arith.constant 0 : index
    %c0_17 = arith.constant 0 : index
    %24 = vector.load %arg5[%c0_16, %c0_17] : memref<64x64xbf16, #tpu.memory_space<vmem>>, vector<64x64xbf16>
    %25 = arith.truncf %23 : vector<128x64xf32> to vector<128x64xbf16>
    %cst_18 = arith.constant dense<0.000000e+00> : vector<128x64xf32>
    %26 = tpu.matmul %25, %24, %cst_18 {dimension_numbers = #tpu.dot_dimension_numbers<[1], [0], [0], [1], [0, 0, 1, 1], [], []>} : vector<128x64xbf16>, vector<64x64xbf16>, vector<128x64xf32> -> vector<128x64xf32>
    %27 = vector.extract_strided_slice %26 {offsets = [0, 0], sizes = [128, 1], strides = [1, 1]} : vector<128x64xf32> to vector<128x1xf32>
    %c0_19 = arith.constant 0 : index
    %c192 = arith.constant 192 : index
    %28 = vector.load %arg6[%c0_19, %c192] : memref<1x256xf32, #tpu.memory_space<vmem>>, vector<1x1xf32>
    %29 = vector.broadcast %28 : vector<1x1xf32> to vector<128x1xf32>
    %30 = arith.addf %27, %29 : vector<128x1xf32>
    %31 = arith.truncf %7 : vector<128x64xf32> to vector<128x64xbf16>
    %c0_20 = arith.constant 0 : index
    %c0_21 = arith.constant 0 : index
    %32 = vector.load %arg7[%c0_20, %c0_21] : memref<128x64xbf16, #tpu.memory_space<vmem>>, vector<128x64xbf16>
    tpu.vector_store %arg7[%c0_20, %c0_21], %31 {strides = array<i32>} : memref<128x64xbf16, #tpu.memory_space<vmem>>, vector<128x64xbf16>,
    %cst_22 = arith.constant 0.000000e+00 : f32
    %33 = vector.broadcast %cst_22 : f32 to vector<128x1xf32>
    %34 = arith.subf %33, %30 : vector<128x1xf32>
    %35 = math.exp %34 : vector<128x1xf32>
    %cst_23 = arith.constant 1.000000e+00 : f32
    %36 = vector.broadcast %cst_23 : f32 to vector<128x1xf32>
    %37 = arith.addf %36, %35 : vector<128x1xf32>
    %cst_24 = arith.constant 1.000000e+00 : f32
    %38 = vector.broadcast %cst_24 : f32 to vector<128x1xf32>
    %39 = arith.divf %38, %37 : vector<128x1xf32>
    %c0_25 = arith.constant 0 : index
    %c0_26 = arith.constant 0 : index
    %40 = vector.load %arg8[%c0_25, %c0_26] : memref<128x1xf32, #tpu.memory_space<vmem>>, vector<128x1xf32>
    tpu.vector_store %arg8[%c0_25, %c0_26], %39 {strides = array<i32>} : memref<128x1xf32, #tpu.memory_space<vmem>>, vector<128x1xf32>,
    return
  }
  func.func @transform_0(%arg0: i32) -> (i32, i32) {
    %c0_i32 = arith.constant 0 : i32
    %c0_i32_0 = arith.constant 0 : i32
    return %arg0, %c0_i32 : i32, i32
  }
  func.func @transform_1(%arg0: i32) -> (i32, i32) {
    %c0_i32 = arith.constant 0 : i32
    %c0_i32_0 = arith.constant 0 : i32
    %c0_i32_1 = arith.constant 0 : i32
    return %c0_i32, %c0_i32_0 : i32, i32
  }
  func.func @transform_2(%arg0: i32) -> (i32, i32) {
    %c0_i32 = arith.constant 0 : i32
    %c0_i32_0 = arith.constant 0 : i32
    %c0_i32_1 = arith.constant 0 : i32
    return %c0_i32, %c0_i32_0 : i32, i32
  }
  func.func @transform_3(%arg0: i32) -> (i32, i32) {
    %c0_i32 = arith.constant 0 : i32
    %c0_i32_0 = arith.constant 0 : i32
    %c0_i32_1 = arith.constant 0 : i32
    return %c0_i32, %c0_i32_0 : i32, i32
  }
  func.func @transform_4(%arg0: i32) -> (i32, i32) {
    %c0_i32 = arith.constant 0 : i32
    %c0_i32_0 = arith.constant 0 : i32
    %c0_i32_1 = arith.constant 0 : i32
    return %c0_i32, %c0_i32_0 : i32, i32
  }
  func.func @transform_5(%arg0: i32) -> (i32, i32) {
    %c0_i32 = arith.constant 0 : i32
    %c0_i32_0 = arith.constant 0 : i32
    %c0_i32_1 = arith.constant 0 : i32
    return %c0_i32, %c0_i32_0 : i32, i32
  }
  func.func @transform_6(%arg0: i32) -> (i32, i32) {
    %c0_i32 = arith.constant 0 : i32
    %c0_i32_0 = arith.constant 0 : i32
    return %arg0, %c0_i32 : i32, i32
  }
  func.func @transform_7(%arg0: i32) -> (i32, i32) {
    %c0_i32 = arith.constant 0 : i32
    %c0_i32_0 = arith.constant 0 : i32
    return %arg0, %c0_i32 : i32, i32
  }
}

module attributes {stable_mosaic.version = 11 : i64} {
  func.func @_gauss_kernel(%arg0: i32, %arg1: memref<64x256xbf16, #tpu.memory_space<vmem>>, %arg2: memref<64x31xf32, #tpu.memory_space<vmem>>, %arg3: memref<64x3xi32, #tpu.memory_space<vmem>>, %arg4: memref<256x448xbf16, #tpu.memory_space<vmem>>, %arg5: memref<86x384xbf16, #tpu.memory_space<vmem>>, %arg6: memref<188x640xbf16, #tpu.memory_space<vmem>>, %arg7: memref<1x1792xf32, #tpu.memory_space<vmem>>, %arg8: memref<64x128xf32, #tpu.memory_space<vmem>>) attributes {dimension_semantics = [#tpu.dimension_semantics<arbitrary>], iteration_bounds = array<i64: 1>, scalar_prefetch = 0 : i64, scratch_operands = 0 : i64, tpu.core_type = #tpu.core_type<tc>, window_params = [{pipeline_mode = #tpu.pipeline_mode<synchronous>, transform_indices = @transform_0, window_bounds = array<i64: 64, 256>}, {pipeline_mode = #tpu.pipeline_mode<synchronous>, transform_indices = @transform_1, window_bounds = array<i64: 64, 31>}, {pipeline_mode = #tpu.pipeline_mode<synchronous>, transform_indices = @transform_2, window_bounds = array<i64: 64, 3>}, {pipeline_mode = #tpu.pipeline_mode<synchronous>, transform_indices = @transform_3, window_bounds = array<i64: 256, 448>}, {pipeline_mode = #tpu.pipeline_mode<synchronous>, transform_indices = @transform_4, window_bounds = array<i64: 86, 384>}, {pipeline_mode = #tpu.pipeline_mode<synchronous>, transform_indices = @transform_5, window_bounds = array<i64: 188, 640>}, {pipeline_mode = #tpu.pipeline_mode<synchronous>, transform_indices = @transform_6, window_bounds = array<i64: 1, 1792>}, {transform_indices = @transform_7, window_bounds = array<i64: 64, 128>}]} {
    %c0 = arith.constant 0 : index
    %c0_0 = arith.constant 0 : index
    %0 = vector.load %arg1[%c0, %c0_0] : memref<64x256xbf16, #tpu.memory_space<vmem>>, vector<64x256xbf16>
    %c0_1 = arith.constant 0 : index
    %c0_2 = arith.constant 0 : index
    %1 = vector.load %arg4[%c0_1, %c0_2] : memref<256x448xbf16, #tpu.memory_space<vmem>>, vector<256x256xbf16>
    %cst = arith.constant dense<0.000000e+00> : vector<64x256xf32>
    %2 = tpu.matmul %0, %1, %cst {dimension_numbers = #tpu.dot_dimension_numbers<[1], [0], [0], [1], [0, 0, 1, 1], [], []>} : vector<64x256xbf16>, vector<256x256xbf16>, vector<64x256xf32> -> vector<64x256xf32>
    %c0_3 = arith.constant 0 : index
    %c0_4 = arith.constant 0 : index
    %3 = vector.load %arg7[%c0_3, %c0_4] : memref<1x1792xf32, #tpu.memory_space<vmem>>, vector<1x256xf32>
    %4 = vector.broadcast %3 : vector<1x256xf32> to vector<64x256xf32>
    %5 = arith.addf %2, %4 : vector<64x256xf32>
    %cst_5 = arith.constant 0.000000e+00 : f32
    %6 = vector.broadcast %cst_5 : f32 to vector<64x256xf32>
    %7 = arith.maximumf %5, %6 : vector<64x256xf32>
    %c0_6 = arith.constant 0 : index
    %c256 = arith.constant 256 : index
    %8 = vector.load %arg4[%c0_6, %c256] : memref<256x448xbf16, #tpu.memory_space<vmem>>, vector<256x128xbf16>
    %9 = arith.truncf %7 : vector<64x256xf32> to vector<64x256xbf16>
    %cst_7 = arith.constant dense<0.000000e+00> : vector<64x128xf32>
    %10 = tpu.matmul %9, %8, %cst_7 {dimension_numbers = #tpu.dot_dimension_numbers<[1], [0], [0], [1], [0, 0, 1, 1], [], []>} : vector<64x256xbf16>, vector<256x128xbf16>, vector<64x128xf32> -> vector<64x128xf32>
    %c0_8 = arith.constant 0 : index
    %c256_9 = arith.constant 256 : index
    %11 = vector.load %arg7[%c0_8, %c256_9] : memref<1x1792xf32, #tpu.memory_space<vmem>>, vector<1x128xf32>
    %12 = vector.broadcast %11 : vector<1x128xf32> to vector<64x128xf32>
    %13 = arith.addf %10, %12 : vector<64x128xf32>
    %cst_10 = arith.constant 0.000000e+00 : f32
    %14 = vector.broadcast %cst_10 : f32 to vector<64x128xf32>
    %15 = arith.maximumf %13, %14 : vector<64x128xf32>
    %c0_11 = arith.constant 0 : index
    %c384 = arith.constant 384 : index
    %16 = vector.load %arg4[%c0_11, %c384] : memref<256x448xbf16, #tpu.memory_space<vmem>>, vector<128x64xbf16>
    %17 = arith.truncf %15 : vector<64x128xf32> to vector<64x128xbf16>
    %cst_12 = arith.constant dense<0.000000e+00> : vector<64x64xf32>
    %18 = tpu.matmul %17, %16, %cst_12 {dimension_numbers = #tpu.dot_dimension_numbers<[1], [0], [0], [1], [0, 0, 1, 1], [], []>} : vector<64x128xbf16>, vector<128x64xbf16>, vector<64x64xf32> -> vector<64x64xf32>
    %c0_13 = arith.constant 0 : index
    %c384_14 = arith.constant 384 : index
    %19 = vector.load %arg7[%c0_13, %c384_14] : memref<1x1792xf32, #tpu.memory_space<vmem>>, vector<1x64xf32>
    %20 = vector.broadcast %19 : vector<1x64xf32> to vector<64x64xf32>
    %21 = arith.addf %18, %20 : vector<64x64xf32>
    %cst_15 = arith.constant dense<0.000000e+00> : vector<64xf32>
    %22 = vector.multi_reduction <add>, %21, %cst_15 [1] : vector<64x64xf32> to vector<64xf32>
    %23 = vector.shape_cast %22 : vector<64xf32> to vector<64x1xf32>
    %cst_16 = arith.constant 6.400000e+01 : f32
    %24 = vector.broadcast %cst_16 : f32 to vector<64x1xf32>
    %25 = arith.divf %23, %24 : vector<64x1xf32>
    %26 = vector.broadcast %25 : vector<64x1xf32> to vector<64x64xf32>
    %27 = arith.subf %21, %26 : vector<64x64xf32>
    %28 = arith.mulf %27, %27 : vector<64x64xf32>
    %cst_17 = arith.constant dense<0.000000e+00> : vector<64xf32>
    %29 = vector.multi_reduction <add>, %28, %cst_17 [1] : vector<64x64xf32> to vector<64xf32>
    %30 = vector.shape_cast %29 : vector<64xf32> to vector<64x1xf32>
    %cst_18 = arith.constant 6.400000e+01 : f32
    %31 = vector.broadcast %cst_18 : f32 to vector<64x1xf32>
    %32 = arith.divf %30, %31 : vector<64x1xf32>
    %33 = vector.broadcast %25 : vector<64x1xf32> to vector<64x64xf32>
    %34 = arith.subf %21, %33 : vector<64x64xf32>
    %cst_19 = arith.constant 9.99999974E-6 : f32
    %35 = vector.broadcast %cst_19 : f32 to vector<64x1xf32>
    %36 = arith.addf %32, %35 : vector<64x1xf32>
    %37 = math.rsqrt %36 : vector<64x1xf32>
    %38 = vector.broadcast %37 : vector<64x1xf32> to vector<64x64xf32>
    %39 = arith.mulf %34, %38 : vector<64x64xf32>
    %c0_20 = arith.constant 0 : index
    %c512 = arith.constant 512 : index
    %40 = vector.load %arg7[%c0_20, %c512] : memref<1x1792xf32, #tpu.memory_space<vmem>>, vector<1x64xf32>
    %41 = vector.broadcast %40 : vector<1x64xf32> to vector<64x64xf32>
    %42 = arith.mulf %39, %41 : vector<64x64xf32>
    %c0_21 = arith.constant 0 : index
    %c640 = arith.constant 640 : index
    %43 = vector.load %arg7[%c0_21, %c640] : memref<1x1792xf32, #tpu.memory_space<vmem>>, vector<1x64xf32>
    %44 = vector.broadcast %43 : vector<1x64xf32> to vector<64x64xf32>
    %45 = arith.addf %42, %44 : vector<64x64xf32>
    %c0_22 = arith.constant 0 : index
    %c0_23 = arith.constant 0 : index
    %46 = vector.load %arg2[%c0_22, %c0_23] : memref<64x31xf32, #tpu.memory_space<vmem>>, vector<64x22xf32>
    %47 = tpu.concatenate %46, %45 in 1 : vector<64x22xf32>, vector<64x64xf32> -> vector<64x86xf32>
    %c0_24 = arith.constant 0 : index
    %c0_25 = arith.constant 0 : index
    %48 = vector.load %arg5[%c0_24, %c0_25] : memref<86x384xbf16, #tpu.memory_space<vmem>>, vector<86x86xbf16>
    %49 = arith.truncf %47 : vector<64x86xf32> to vector<64x86xbf16>
    %cst_26 = arith.constant dense<0.000000e+00> : vector<64x86xf32>
    %50 = tpu.matmul %49, %48, %cst_26 {dimension_numbers = #tpu.dot_dimension_numbers<[1], [0], [0], [1], [0, 0, 1, 1], [], []>} : vector<64x86xbf16>, vector<86x86xbf16>, vector<64x86xf32> -> vector<64x86xf32>
    %c0_27 = arith.constant 0 : index
    %c768 = arith.constant 768 : index
    %51 = vector.load %arg7[%c0_27, %c768] : memref<1x1792xf32, #tpu.memory_space<vmem>>, vector<1x86xf32>
    %52 = vector.broadcast %51 : vector<1x86xf32> to vector<64x86xf32>
    %53 = arith.addf %50, %52 : vector<64x86xf32>
    %cst_28 = arith.constant 0.000000e+00 : f32
    %54 = vector.broadcast %cst_28 : f32 to vector<64x86xf32>
    %55 = arith.maximumf %53, %54 : vector<64x86xf32>
    %c0_29 = arith.constant 0 : index
    %c128 = arith.constant 128 : index
    %56 = vector.load %arg5[%c0_29, %c128] : memref<86x384xbf16, #tpu.memory_space<vmem>>, vector<86x86xbf16>
    %57 = arith.truncf %55 : vector<64x86xf32> to vector<64x86xbf16>
    %cst_30 = arith.constant dense<0.000000e+00> : vector<64x86xf32>
    %58 = tpu.matmul %57, %56, %cst_30 {dimension_numbers = #tpu.dot_dimension_numbers<[1], [0], [0], [1], [0, 0, 1, 1], [], []>} : vector<64x86xbf16>, vector<86x86xbf16>, vector<64x86xf32> -> vector<64x86xf32>
    %c0_31 = arith.constant 0 : index
    %c896 = arith.constant 896 : index
    %59 = vector.load %arg7[%c0_31, %c896] : memref<1x1792xf32, #tpu.memory_space<vmem>>, vector<1x86xf32>
    %60 = vector.broadcast %59 : vector<1x86xf32> to vector<64x86xf32>
    %61 = arith.addf %58, %60 : vector<64x86xf32>
    %cst_32 = arith.constant 0.000000e+00 : f32
    %62 = vector.broadcast %cst_32 : f32 to vector<64x86xf32>
    %63 = arith.maximumf %61, %62 : vector<64x86xf32>
    %c0_33 = arith.constant 0 : index
    %c256_34 = arith.constant 256 : index
    %64 = vector.load %arg5[%c0_33, %c256_34] : memref<86x384xbf16, #tpu.memory_space<vmem>>, vector<86x3xbf16>
    %65 = arith.truncf %63 : vector<64x86xf32> to vector<64x86xbf16>
    %cst_35 = arith.constant dense<0.000000e+00> : vector<64x3xf32>
    %66 = tpu.matmul %65, %64, %cst_35 {dimension_numbers = #tpu.dot_dimension_numbers<[1], [0], [0], [1], [0, 0, 1, 1], [], []>} : vector<64x86xbf16>, vector<86x3xbf16>, vector<64x3xf32> -> vector<64x3xf32>
    %c0_36 = arith.constant 0 : index
    %c1024 = arith.constant 1024 : index
    %67 = vector.load %arg7[%c0_36, %c1024] : memref<1x1792xf32, #tpu.memory_space<vmem>>, vector<1x3xf32>
    %68 = vector.broadcast %67 : vector<1x3xf32> to vector<64x3xf32>
    %69 = arith.addf %66, %68 : vector<64x3xf32>
    %cst_37 = arith.constant dense<0xFF800000> : vector<64xf32>
    %70 = vector.multi_reduction <maximumf>, %69, %cst_37 [1] : vector<64x3xf32> to vector<64xf32>
    %71 = vector.shape_cast %70 : vector<64xf32> to vector<64x1xf32>
    %72 = vector.broadcast %71 : vector<64x1xf32> to vector<64x3xf32>
    %73 = arith.subf %69, %72 : vector<64x3xf32>
    %74 = math.exp %73 : vector<64x3xf32>
    %cst_38 = arith.constant dense<0.000000e+00> : vector<64xf32>
    %75 = vector.multi_reduction <add>, %74, %cst_38 [1] : vector<64x3xf32> to vector<64xf32>
    %76 = vector.shape_cast %75 : vector<64xf32> to vector<64x1xf32>
    %77 = vector.broadcast %76 : vector<64x1xf32> to vector<64x3xf32>
    %78 = arith.divf %74, %77 : vector<64x3xf32>
    %c0_39 = arith.constant 0 : index
    %c25 = arith.constant 25 : index
    %79 = vector.load %arg2[%c0_39, %c25] : memref<64x31xf32, #tpu.memory_space<vmem>>, vector<64x3xf32>
    %c0_40 = arith.constant 0 : index
    %c28 = arith.constant 28 : index
    %80 = vector.load %arg2[%c0_40, %c28] : memref<64x31xf32, #tpu.memory_space<vmem>>, vector<64x3xf32>
    %81 = arith.mulf %78, %79 : vector<64x3xf32>
    %cst_41 = arith.constant dense<0.000000e+00> : vector<64xf32>
    %82 = vector.multi_reduction <add>, %81, %cst_41 [1] : vector<64x3xf32> to vector<64xf32>
    %83 = vector.shape_cast %82 : vector<64xf32> to vector<64x1xf32>
    %84 = arith.mulf %78, %80 : vector<64x3xf32>
    %cst_42 = arith.constant dense<0.000000e+00> : vector<64xf32>
    %85 = vector.multi_reduction <add>, %84, %cst_42 [1] : vector<64x3xf32> to vector<64xf32>
    %86 = vector.shape_cast %85 : vector<64xf32> to vector<64x1xf32>
    %87 = tpu.concatenate %83, %86 in 1 : vector<64x1xf32>, vector<64x1xf32> -> vector<64x2xf32>
    %cst_43 = arith.constant -0.999998986 : f32
    %cst_44 = arith.constant 0.999998986 : f32
    %88 = vector.broadcast %cst_43 : f32 to vector<64x2xf32>
    %89 = arith.maximumf %88, %87 : vector<64x2xf32>
    %90 = vector.broadcast %cst_44 : f32 to vector<64x2xf32>
    %91 = arith.minimumf %90, %89 : vector<64x2xf32>
    %c0_45 = arith.constant 0 : index
    %c0_46 = arith.constant 0 : index
    %92 = vector.load %arg3[%c0_45, %c0_46] : memref<64x3xi32, #tpu.memory_space<vmem>>, vector<64x3xi32>
    %93 = tpu.iota {dimensions = array<i32: 1>} : vector<64x64xi32>
    %94 = arith.truncf %91 : vector<64x2xf32> to vector<64x2xbf16>
    %95 = vector.extract_strided_slice %92 {offsets = [0, 0], sizes = [64, 1], strides = [1, 1]} : vector<64x3xi32> to vector<64x1xi32>
    %96 = vector.broadcast %95 : vector<64x1xi32> to vector<64x64xi32>
    %97 = arith.cmpi eq, %93, %96 : vector<64x64xi32>
    %98 = arith.extui %97 : vector<64x64xi1> to vector<64x64xi32>
    %99 = arith.sitofp %98 : vector<64x64xi32> to vector<64x64xf32>
    %100 = arith.truncf %99 : vector<64x64xf32> to vector<64x64xbf16>
    %cst_47 = arith.constant dense<0.000000e+00> : vector<64x2xf32>
    %101 = tpu.matmul %100, %94, %cst_47 {dimension_numbers = #tpu.dot_dimension_numbers<[1], [0], [0], [1], [0, 0, 1, 1], [], []>} : vector<64x64xbf16>, vector<64x2xbf16>, vector<64x2xf32> -> vector<64x2xf32>
    %102 = vector.extract_strided_slice %92 {offsets = [0, 1], sizes = [64, 1], strides = [1, 1]} : vector<64x3xi32> to vector<64x1xi32>
    %103 = vector.broadcast %102 : vector<64x1xi32> to vector<64x64xi32>
    %104 = arith.cmpi eq, %93, %103 : vector<64x64xi32>
    %105 = arith.extui %104 : vector<64x64xi1> to vector<64x64xi32>
    %106 = arith.sitofp %105 : vector<64x64xi32> to vector<64x64xf32>
    %107 = arith.truncf %106 : vector<64x64xf32> to vector<64x64xbf16>
    %cst_48 = arith.constant dense<0.000000e+00> : vector<64x2xf32>
    %108 = tpu.matmul %107, %94, %cst_48 {dimension_numbers = #tpu.dot_dimension_numbers<[1], [0], [0], [1], [0, 0, 1, 1], [], []>} : vector<64x64xbf16>, vector<64x2xbf16>, vector<64x2xf32> -> vector<64x2xf32>
    %109 = vector.extract_strided_slice %92 {offsets = [0, 2], sizes = [64, 1], strides = [1, 1]} : vector<64x3xi32> to vector<64x1xi32>
    %110 = vector.broadcast %109 : vector<64x1xi32> to vector<64x64xi32>
    %111 = arith.cmpi eq, %93, %110 : vector<64x64xi32>
    %112 = arith.extui %111 : vector<64x64xi1> to vector<64x64xi32>
    %113 = arith.sitofp %112 : vector<64x64xi32> to vector<64x64xf32>
    %114 = arith.truncf %113 : vector<64x64xf32> to vector<64x64xbf16>
    %cst_49 = arith.constant dense<0.000000e+00> : vector<64x2xf32>
    %115 = tpu.matmul %114, %94, %cst_49 {dimension_numbers = #tpu.dot_dimension_numbers<[1], [0], [0], [1], [0, 0, 1, 1], [], []>} : vector<64x64xbf16>, vector<64x2xbf16>, vector<64x2xf32> -> vector<64x2xf32>
    %cst_50 = arith.constant 0.000000e+00 : f32
    %116 = vector.broadcast %cst_50 : f32 to vector<64x94xf32>
    %117 = tpu.concatenate %91, %101, %108, %115, %47, %116 in 1 : vector<64x2xf32>, vector<64x2xf32>, vector<64x2xf32>, vector<64x2xf32>, vector<64x86xf32>, vector<64x94xf32> -> vector<64x188xf32>
    %c0_51 = arith.constant 0 : index
    %c0_52 = arith.constant 0 : index
    %118 = vector.load %arg6[%c0_51, %c0_52] : memref<188x640xbf16, #tpu.memory_space<vmem>>, vector<188x188xbf16>
    %119 = arith.truncf %117 : vector<64x188xf32> to vector<64x188xbf16>
    %cst_53 = arith.constant dense<0.000000e+00> : vector<64x188xf32>
    %120 = tpu.matmul %119, %118, %cst_53 {dimension_numbers = #tpu.dot_dimension_numbers<[1], [0], [0], [1], [0, 0, 1, 1], [], []>} : vector<64x188xbf16>, vector<188x188xbf16>, vector<64x188xf32> -> vector<64x188xf32>
    %c0_54 = arith.constant 0 : index
    %c1152 = arith.constant 1152 : index
    %121 = vector.load %arg7[%c0_54, %c1152] : memref<1x1792xf32, #tpu.memory_space<vmem>>, vector<1x188xf32>
    %122 = vector.broadcast %121 : vector<1x188xf32> to vector<64x188xf32>
    %123 = arith.addf %120, %122 : vector<64x188xf32>
    %cst_55 = arith.constant 0.000000e+00 : f32
    %124 = vector.broadcast %cst_55 : f32 to vector<64x188xf32>
    %125 = arith.maximumf %123, %124 : vector<64x188xf32>
    %c0_56 = arith.constant 0 : index
    %c256_57 = arith.constant 256 : index
    %126 = vector.load %arg6[%c0_56, %c256_57] : memref<188x640xbf16, #tpu.memory_space<vmem>>, vector<188x188xbf16>
    %127 = arith.truncf %125 : vector<64x188xf32> to vector<64x188xbf16>
    %cst_58 = arith.constant dense<0.000000e+00> : vector<64x188xf32>
    %128 = tpu.matmul %127, %126, %cst_58 {dimension_numbers = #tpu.dot_dimension_numbers<[1], [0], [0], [1], [0, 0, 1, 1], [], []>} : vector<64x188xbf16>, vector<188x188xbf16>, vector<64x188xf32> -> vector<64x188xf32>
    %c0_59 = arith.constant 0 : index
    %c1408 = arith.constant 1408 : index
    %129 = vector.load %arg7[%c0_59, %c1408] : memref<1x1792xf32, #tpu.memory_space<vmem>>, vector<1x188xf32>
    %130 = vector.broadcast %129 : vector<1x188xf32> to vector<64x188xf32>
    %131 = arith.addf %128, %130 : vector<64x188xf32>
    %cst_60 = arith.constant 0.000000e+00 : f32
    %132 = vector.broadcast %cst_60 : f32 to vector<64x188xf32>
    %133 = arith.maximumf %131, %132 : vector<64x188xf32>
    %c0_61 = arith.constant 0 : index
    %c512_62 = arith.constant 512 : index
    %134 = vector.load %arg6[%c0_61, %c512_62] : memref<188x640xbf16, #tpu.memory_space<vmem>>, vector<188x4xbf16>
    %135 = arith.truncf %133 : vector<64x188xf32> to vector<64x188xbf16>
    %cst_63 = arith.constant dense<0.000000e+00> : vector<64x4xf32>
    %136 = tpu.matmul %135, %134, %cst_63 {dimension_numbers = #tpu.dot_dimension_numbers<[1], [0], [0], [1], [0, 0, 1, 1], [], []>} : vector<64x188xbf16>, vector<188x4xbf16>, vector<64x4xf32> -> vector<64x4xf32>
    %c0_64 = arith.constant 0 : index
    %c1664 = arith.constant 1664 : index
    %137 = vector.load %arg7[%c0_64, %c1664] : memref<1x1792xf32, #tpu.memory_space<vmem>>, vector<1x4xf32>
    %138 = vector.broadcast %137 : vector<1x4xf32> to vector<64x4xf32>
    %139 = arith.addf %136, %138 : vector<64x4xf32>
    %140 = vector.extract_strided_slice %139 {offsets = [0, 0], sizes = [64, 3], strides = [1, 1]} : vector<64x4xf32> to vector<64x3xf32>
    %141 = vector.extract_strided_slice %139 {offsets = [0, 3], sizes = [64, 1], strides = [1, 1]} : vector<64x4xf32> to vector<64x1xf32>
    %142 = vector.extract_strided_slice %140 {offsets = [0, 0], sizes = [64, 2], strides = [1, 1]} : vector<64x3xf32> to vector<64x2xf32>
    %cst_65 = arith.constant 2.000000e-02 : f32
    %143 = vector.broadcast %cst_65 : f32 to vector<64x2xf32>
    %144 = arith.mulf %143, %142 : vector<64x2xf32>
    %145 = math.tanh %144 : vector<64x2xf32>
    %cst_66 = arith.constant 5.000000e+01 : f32
    %146 = vector.broadcast %cst_66 : f32 to vector<64x2xf32>
    %147 = arith.mulf %146, %145 : vector<64x2xf32>
    %cst_67 = arith.constant 5.000000e-01 : f32
    %148 = vector.broadcast %cst_67 : f32 to vector<64x2xf32>
    %149 = arith.mulf %148, %147 : vector<64x2xf32>
    %150 = math.exp %149 : vector<64x2xf32>
    %cst_68 = arith.constant 5.000000e-01 : f32
    %151 = vector.broadcast %cst_68 : f32 to vector<64x2xf32>
    %152 = arith.mulf %151, %150 : vector<64x2xf32>
    %cst_69 = arith.constant 2.500000e-01 : f32
    %153 = vector.broadcast %cst_69 : f32 to vector<64x2xf32>
    %154 = arith.mulf %153, %147 : vector<64x2xf32>
    %cst_70 = arith.constant 2.500000e+00 : f32
    %155 = vector.broadcast %cst_70 : f32 to vector<64x2xf32>
    %156 = arith.subf %154, %155 : vector<64x2xf32>
    %cst_71 = arith.constant -2.000000e+00 : f32
    %157 = vector.broadcast %cst_71 : f32 to vector<64x2xf32>
    %158 = arith.mulf %157, %156 : vector<64x2xf32>
    %cst_72 = arith.constant 4.000000e+00 : f32
    %159 = vector.broadcast %cst_72 : f32 to vector<64x2xf32>
    %160 = arith.cmpf ogt, %158, %159 : vector<64x2xf32>
    %cst_73 = arith.constant -2.000000e+00 : f32
    %161 = vector.broadcast %cst_73 : f32 to vector<64x2xf32>
    %162 = arith.mulf %161, %156 : vector<64x2xf32>
    %cst_74 = arith.constant 3.000000e+01 : f32
    %163 = vector.broadcast %cst_74 : f32 to vector<64x2xf32>
    %164 = arith.minimumf %162, %163 : vector<64x2xf32>
    %165 = math.exp %164 : vector<64x2xf32>
    %cst_75 = arith.constant 1.000000e+00 : f32
    %166 = vector.broadcast %cst_75 : f32 to vector<64x2xf32>
    %167 = arith.addf %166, %165 : vector<64x2xf32>
    %168 = math.log %167 : vector<64x2xf32>
    %cst_76 = arith.constant -5.000000e-01 : f32
    %169 = vector.broadcast %cst_76 : f32 to vector<64x2xf32>
    %170 = arith.mulf %169, %168 : vector<64x2xf32>
    %171 = arith.select %160, %156, %170 : vector<64x2xi1>, vector<64x2xf32>
    %cst_77 = arith.constant 3.000000e+00 : f32
    %172 = vector.broadcast %cst_77 : f32 to vector<64x2xf32>
    %173 = arith.addf %171, %172 : vector<64x2xf32>
    %cst_78 = arith.constant 0.000000e+00 : f32
    %174 = vector.broadcast %cst_78 : f32 to vector<64x2xf32>
    %175 = arith.cmpf olt, %147, %174 : vector<64x2xf32>
    %176 = arith.select %175, %152, %173 : vector<64x2xi1>, vector<64x2xf32>
    %c0_79 = arith.constant 0 : index
    %c22 = arith.constant 22 : index
    %177 = vector.load %arg2[%c0_79, %c22] : memref<64x31xf32, #tpu.memory_space<vmem>>, vector<64x2xf32>
    %178 = arith.mulf %176, %177 : vector<64x2xf32>
    %179 = vector.extract_strided_slice %140 {offsets = [0, 2], sizes = [64, 1], strides = [1, 1]} : vector<64x3xf32> to vector<64x1xf32>
    %180 = math.tanh %179 : vector<64x1xf32>
    %c0_80 = arith.constant 0 : index
    %c24 = arith.constant 24 : index
    %181 = vector.load %arg2[%c0_80, %c24] : memref<64x31xf32, #tpu.memory_space<vmem>>, vector<64x1xf32>
    %182 = arith.addf %180, %181 : vector<64x1xf32>
    %cst_81 = arith.constant 0.000000e+00 : f32
    %183 = vector.broadcast %cst_81 : f32 to vector<64x1xf32>
    %184 = arith.subf %183, %182 : vector<64x1xf32>
    %185 = math.exp %184 : vector<64x1xf32>
    %cst_82 = arith.constant 1.000000e+00 : f32
    %186 = vector.broadcast %cst_82 : f32 to vector<64x1xf32>
    %187 = arith.addf %186, %185 : vector<64x1xf32>
    %cst_83 = arith.constant 1.000000e+00 : f32
    %188 = vector.broadcast %cst_83 : f32 to vector<64x1xf32>
    %189 = arith.divf %188, %187 : vector<64x1xf32>
    %cst_84 = arith.constant 0.000000e+00 : f32
    %190 = vector.broadcast %cst_84 : f32 to vector<64x1xf32>
    %191 = arith.subf %190, %141 : vector<64x1xf32>
    %192 = math.exp %191 : vector<64x1xf32>
    %cst_85 = arith.constant 1.000000e+00 : f32
    %193 = vector.broadcast %cst_85 : f32 to vector<64x1xf32>
    %194 = arith.addf %193, %192 : vector<64x1xf32>
    %cst_86 = arith.constant 1.000000e+00 : f32
    %195 = vector.broadcast %cst_86 : f32 to vector<64x1xf32>
    %196 = arith.divf %195, %194 : vector<64x1xf32>
    %cst_87 = arith.constant 0.000000e+00 : f32
    %197 = vector.broadcast %cst_87 : f32 to vector<64x122xf32>
    %198 = tpu.concatenate %91, %178, %189, %196, %197 in 1 : vector<64x2xf32>, vector<64x2xf32>, vector<64x1xf32>, vector<64x1xf32>, vector<64x122xf32> -> vector<64x128xf32>
    %c0_88 = arith.constant 0 : index
    %c0_89 = arith.constant 0 : index
    %199 = vector.load %arg8[%c0_88, %c0_89] : memref<64x128xf32, #tpu.memory_space<vmem>>, vector<64x128xf32>
    tpu.vector_store %arg8[%c0_88, %c0_89], %198 {strides = array<i32>} : memref<64x128xf32, #tpu.memory_space<vmem>>, vector<64x128xf32>,
    return
  }
  func.func @transform_0(%arg0: i32) -> (i32, i32) {
    %c0_i32 = arith.constant 0 : i32
    %c0_i32_0 = arith.constant 0 : i32
    %c0_i32_1 = arith.constant 0 : i32
    return %c0_i32, %c0_i32_0 : i32, i32
  }
  func.func @transform_1(%arg0: i32) -> (i32, i32) {
    %c0_i32 = arith.constant 0 : i32
    %c0_i32_0 = arith.constant 0 : i32
    %c0_i32_1 = arith.constant 0 : i32
    return %c0_i32, %c0_i32_0 : i32, i32
  }
  func.func @transform_2(%arg0: i32) -> (i32, i32) {
    %c0_i32 = arith.constant 0 : i32
    %c0_i32_0 = arith.constant 0 : i32
    %c0_i32_1 = arith.constant 0 : i32
    return %c0_i32, %c0_i32_0 : i32, i32
  }
  func.func @transform_3(%arg0: i32) -> (i32, i32) {
    %c0_i32 = arith.constant 0 : i32
    %c0_i32_0 = arith.constant 0 : i32
    %c0_i32_1 = arith.constant 0 : i32
    return %c0_i32, %c0_i32_0 : i32, i32
  }
  func.func @transform_4(%arg0: i32) -> (i32, i32) {
    %c0_i32 = arith.constant 0 : i32
    %c0_i32_0 = arith.constant 0 : i32
    %c0_i32_1 = arith.constant 0 : i32
    return %c0_i32, %c0_i32_0 : i32, i32
  }
  func.func @transform_5(%arg0: i32) -> (i32, i32) {
    %c0_i32 = arith.constant 0 : i32
    %c0_i32_0 = arith.constant 0 : i32
    %c0_i32_1 = arith.constant 0 : i32
    return %c0_i32, %c0_i32_0 : i32, i32
  }
  func.func @transform_6(%arg0: i32) -> (i32, i32) {
    %c0_i32 = arith.constant 0 : i32
    %c0_i32_0 = arith.constant 0 : i32
    %c0_i32_1 = arith.constant 0 : i32
    return %c0_i32, %c0_i32_0 : i32, i32
  }
  func.func @transform_7(%arg0: i32) -> (i32, i32) {
    %c0_i32 = arith.constant 0 : i32
    %c0_i32_0 = arith.constant 0 : i32
    return %arg0, %c0_i32 : i32, i32
  }
}

</mosaic_0001>

<llo_original>
// kernel: init_net_forward.2
$region0: #{init_net_forward.2}
  #allocation0 [shape = 'u32[]', space=smem, size = 0x4, offset = 0x4, fixed_abs, tag = 'smem constant byte address 0x4 - core index']
  #allocation1 [shape = 'u32[144,128]{1,0:T(1,128)}', space=vmem, size = 0x12000, scoped, tag = 'internal scratch']
  %s0 = inlined_call_operand.vmem [shape: bf16[256,27], index: 0, kind: input, shape index: {}]
  %s1 = inlined_call_operand.vmem [shape: bf16[27,64], index: 1, kind: input, shape index: {}]
  %s2 = inlined_call_operand.vmem [shape: bf16[64,64], index: 2, kind: input, shape index: {}]
  %s3 = inlined_call_operand.vmem [shape: bf16[64,64], index: 3, kind: input, shape index: {}]
  %s4 = inlined_call_operand.vmem [shape: bf16[64,64], index: 4, kind: input, shape index: {}]
  %s5 = inlined_call_operand.vmem [shape: f32[1,256], index: 5, kind: input, shape index: {}]
  %s6 = inlined_call_operand.vmem [shape: bf16[256,64], index: 6, kind: output, shape index: {0}]
  %s7 = inlined_call_operand.vmem [shape: f32[256,1], index: 7, kind: output, shape index: {1}]
  %8 = xla_tuple %s6, %s7
  %s9 = sld [smem:[#allocation0]]
  $region65: #{init_net_forward.2} parent=0
    _
  %s11 = ssub.s32 1, %s9
  %s12 = scalar_select 0, %s11, %s9
  loop: start=0, step=1, limit=4
  $region2: #{init_net_forward.2} parent=0 // loop_pre_header
    _
  $region3: #{init_net_forward.2} parent=0 // loop_header
    %s14 = sphi 0, %s18
    %p15 = scmp.ge.s32.totalorder %s14, 4
    %s24 = sphi 0, %s26
    %s27 = sphi 0, %s24
    %s28 = sphi 0, %s27
    %s44 = sphi 0, %s28
    %s48 = sphi 0, %s48
    %s50 = sphi 0, %s48
    %s51 = sphi 0, %s50
    %s65 = sphi 0, %s51
    %s69 = sphi 0, %s69
    %s71 = sphi 0, %s69
    %s72 = sphi 0, %s71
    %s86 = sphi 0, %s72
    %s90 = sphi 0, %s90
    %s92 = sphi 0, %s90
    %s93 = sphi 0, %s92
    %s107 = sphi 0, %s93
    %s111 = sphi 0, %s111
    %s113 = sphi 0, %s111
    %s114 = sphi 0, %s113
    %s128 = sphi 0, %s114
    %s132 = sphi 0, %s132
    %s134 = sphi 0, %s132
    %s135 = sphi 0, %s134
    %s149 = sphi 0, %s135
    %s155 = sphi 0, %s157
    %s158 = sphi 0, %s155
    %s159 = sphi 0, %s158
    %s175 = sphi 0, %s159
    %s181 = sphi 0, %s183
    %s184 = sphi 0, %s181
    %s185 = sphi 0, %s184
    %s201 = sphi 0, %s185
  $region4: #{init_net_forward.2} parent=0 // loop_header_branch
    %17 = sbr.rel (%p15) target = $region8
  $region5: #{init_net_forward.2} parent=0 // loop_body
    %s19 = ssub.s32 %s14, 1
    %s20 = ssub.s32 %s14, 2
    %s21 = sadd.s32 %s14, 1
    %s22 = ssub.s32 %s14, %s21
    %p23 = scmp.eq.s32.totalorder %s22, 0
    %s25 = sadd.s32 %s24, 1
    %s26 = scalar_select %p23, %s24, %s25
    %p29 = pneg %p23
    %p30 = scmp.eq.s32.totalorder %s14, 1
    %p31 = por %p29, %p30
    %p32 = scmp.ne.s32.totalorder %s24, %s27
    %p33 = scmp.eq.s32.totalorder %s14, 0
    %p34 = por %p32, %p33
    %p35 = scmp.ne.s32.totalorder %s24, %s27
    %p36 = scmp.eq.s32.totalorder %s19, 1
    %p37 = por %p35, %p36
    %p38 = scmp.ne.s32.totalorder %s27, %s28
    %p39 = scmp.eq.s32.totalorder %s19, 0
    %p40 = por %p38, %p39
    %p41 = scmp.ne.s32.totalorder %s27, %s28
    %p42 = scmp.eq.s32.totalorder %s20, 1
    %p43 = por %p41, %p42
    %p45 = scmp.ne.s32.totalorder %s28, %s44
    %p46 = scmp.eq.s32.totalorder %s20, 0
    %p47 = por %p45, %p46
    %s49 = sadd.s32 %s48, 1
    %p52 = scmp.eq.s32.totalorder %s14, 1
    %p53 = scmp.ne.s32.totalorder %s48, %s50
    %p54 = scmp.eq.s32.totalorder %s14, 0
    %p55 = por %p53, %p54
    %p56 = scmp.ne.s32.totalorder %s48, %s50
    %p57 = scmp.eq.s32.totalorder %s19, 1
    %p58 = por %p56, %p57
    %p59 = scmp.ne.s32.totalorder %s50, %s51
    %p60 = scmp.eq.s32.totalorder %s19, 0
    %p61 = por %p59, %p60
    %p62 = scmp.ne.s32.totalorder %s50, %s51
    %p63 = scmp.eq.s32.totalorder %s20, 1
    %p64 = por %p62, %p63
    %p66 = scmp.ne.s32.totalorder %s51, %s65
    %p67 = scmp.eq.s32.totalorder %s20, 0
    %p68 = por %p66, %p67
    %s70 = sadd.s32 %s69, 1
    %p73 = scmp.eq.s32.totalorder %s14, 1
    %p74 = scmp.ne.s32.totalorder %s69, %s71
    %p75 = scmp.eq.s32.totalorder %s14, 0
    %p76 = por %p74, %p75
    %p77 = scmp.ne.s32.totalorder %s69, %s71
    %p78 = scmp.eq.s32.totalorder %s19, 1
    %p79 = por %p77, %p78
    %p80 = scmp.ne.s32.totalorder %s71, %s72
    %p81 = scmp.eq.s32.totalorder %s19, 0
    %p82 = por %p80, %p81
    %p83 = scmp.ne.s32.totalorder %s71, %s72
    %p84 = scmp.eq.s32.totalorder %s20, 1
    %p85 = por %p83, %p84
    %p87 = scmp.ne.s32.totalorder %s72, %s86
    %p88 = scmp.eq.s32.totalorder %s20, 0
    %p89 = por %p87, %p88
    %s91 = sadd.s32 %s90, 1
    %p94 = scmp.eq.s32.totalorder %s14, 1
    %p95 = scmp.ne.s32.totalorder %s90, %s92
    %p96 = scmp.eq.s32.totalorder %s14, 0
    %p97 = por %p95, %p96
    %p98 = scmp.ne.s32.totalorder %s90, %s92
    %p99 = scmp.eq.s32.totalorder %s19, 1
    %p100 = por %p98, %p99
    %p101 = scmp.ne.s32.totalorder %s92, %s93
    %p102 = scmp.eq.s32.totalorder %s19, 0
    %p103 = por %p101, %p102
    %p104 = scmp.ne.s32.totalorder %s92, %s93
    %p105 = scmp.eq.s32.totalorder %s20, 1
    %p106 = por %p104, %p105
    %p108 = scmp.ne.s32.totalorder %s93, %s107
    %p109 = scmp.eq.s32.totalorder %s20, 0
    %p110 = por %p108, %p109
    %s112 = sadd.s32 %s111, 1
    %p115 = scmp.eq.s32.totalorder %s14, 1
    %p116 = scmp.ne.s32.totalorder %s111, %s113
    %p117 = scmp.eq.s32.totalorder %s14, 0
    %p118 = por %p116, %p117
    %p119 = scmp.ne.s32.totalorder %s111, %s113
    %p120 = scmp.eq.s32.totalorder %s19, 1
    %p121 = por %p119, %p120
    %p122 = scmp.ne.s32.totalorder %s113, %s114
    %p123 = scmp.eq.s32.totalorder %s19, 0
    %p124 = por %p122, %p123
    %p125 = scmp.ne.s32.totalorder %s113, %s114
    %p126 = scmp.eq.s32.totalorder %s20, 1
    %p127 = por %p125, %p126
    %p129 = scmp.ne.s32.totalorder %s114, %s128
    %p130 = scmp.eq.s32.totalorder %s20, 0
    %p131 = por %p129, %p130
    %s133 = sadd.s32 %s132, 1
    %p136 = scmp.eq.s32.totalorder %s14, 1
    %p137 = scmp.ne.s32.totalorder %s132, %s134
    %p138 = scmp.eq.s32.totalorder %s14, 0
    %p139 = por %p137, %p138
    %p140 = scmp.ne.s32.totalorder %s132, %s134
    %p141 = scmp.eq.s32.totalorder %s19, 1
    %p142 = por %p140, %p141
    %p143 = scmp.ne.s32.totalorder %s134, %s135
    %p144 = scmp.eq.s32.totalorder %s19, 0
    %p145 = por %p143, %p144
    %p146 = scmp.ne.s32.totalorder %s134, %s135
    %p147 = scmp.eq.s32.totalorder %s20, 1
    %p148 = por %p146, %p147
    %p150 = scmp.ne.s32.totalorder %s135, %s149
    %p151 = scmp.eq.s32.totalorder %s20, 0
    %p152 = por %p150, %p151
    %s153 = ssub.s32 %s14, %s21
    %p154 = scmp.eq.s32.totalorder %s153, 0
    %s156 = sadd.s32 %s155, 1
    %s157 = scalar_select %p154, %s155, %s156
    %p160 = pneg %p154
    %p161 = scmp.eq.s32.totalorder %s14, 1
    %p162 = por %p160, %p161
    %p163 = scmp.ne.s32.totalorder %s155, %s158
    %p164 = scmp.eq.s32.totalorder %s14, 0
    %p165 = por %p163, %p164
    %p166 = scmp.ne.s32.totalorder %s155, %s158
    %p167 = scmp.eq.s32.totalorder %s19, 1
    %p168 = por %p166, %p167
    %p169 = scmp.ne.s32.totalorder %s158, %s159
    %p170 = scmp.eq.s32.totalorder %s19, 0
    %p171 = por %p169, %p170
    %p172 = scmp.ne.s32.totalorder %s158, %s159
    %p173 = scmp.eq.s32.totalorder %s20, 1
    %p174 = por %p172, %p173
    %p176 = scmp.ne.s32.totalorder %s159, %s175
    %p177 = scmp.eq.s32.totalorder %s20, 0
    %p178 = por %p176, %p177
    %s179 = ssub.s32 %s14, %s21
    %p180 = scmp.eq.s32.totalorder %s179, 0
    %s182 = sadd.s32 %s181, 1
    %s183 = scalar_select %p180, %s181, %s182
    %p186 = pneg %p180
    %p187 = scmp.eq.s32.totalorder %s14, 1
    %p188 = por %p186, %p187
    %p189 = scmp.ne.s32.totalorder %s181, %s184
    %p190 = scmp.eq.s32.totalorder %s14, 0
    %p191 = por %p189, %p190
    %p192 = scmp.ne.s32.totalorder %s181, %s184
    %p193 = scmp.eq.s32.totalorder %s19, 1
    %p194 = por %p192, %p193
    %p195 = scmp.ne.s32.totalorder %s184, %s185
    %p196 = scmp.eq.s32.totalorder %s19, 0
    %p197 = por %p195, %p196
    %p198 = scmp.ne.s32.totalorder %s184, %s185
    %p199 = scmp.eq.s32.totalorder %s20, 1
    %p200 = por %p198, %p199
    %p202 = scmp.ne.s32.totalorder %s185, %s201
    %p203 = scmp.eq.s32.totalorder %s20, 0
    %p204 = por %p202, %p203
    %p205 = scmp.le.s32.totalorder 1, %s14
    %p206 = scmp.lt.s32.totalorder %s14, 3
    %p207 = pnand %p205, %p206
    %p208 = pneg %p207
    // Predicated region
    $region9: #{init_net_forward.2} parent=5 // pred_check
      _
    $region10: #{init_net_forward.2} parent=5 // pred_check_branch
      %210 = sbr.rel (%p207) target = $region12
    $region11: #{init_net_forward.2} parent=5 // pred_region
      %s211 = ssub.s32 %s14, 1
      // Predicated region
      $region13: #{init_net_forward.2} parent=11 // pred_check
        %p212 = pneg %p61
      $region14: #{init_net_forward.2} parent=11 // pred_check_branch
        %214 = sbr.rel (%p212) target = $region16
      $region15: #{init_net_forward.2} parent=11 // pred_region
        _
      $region16: #{init_net_forward.2} parent=11 // pred_fallthru
        _
      // Predicated region
      $region17: #{init_net_forward.2} parent=11 // pred_check
        %p215 = pneg %p82
      $region18: #{init_net_forward.2} parent=11 // pred_check_branch
        %217 = sbr.rel (%p215) target = $region20
      $region19: #{init_net_forward.2} parent=11 // pred_region
        _
      $region20: #{init_net_forward.2} parent=11 // pred_fallthru
        _
      // Predicated region
      $region21: #{init_net_forward.2} parent=11 // pred_check
        %p218 = pneg %p103
      $region22: #{init_net_forward.2} parent=11 // pred_check_branch
        %220 = sbr.rel (%p218) target = $region24
      $region23: #{init_net_forward.2} parent=11 // pred_region
        _
      $region24: #{init_net_forward.2} parent=11 // pred_fallthru
        _
      // Predicated region
      $region25: #{init_net_forward.2} parent=11 // pred_check
        %p221 = pneg %p124
      $region26: #{init_net_forward.2} parent=11 // pred_check_branch
        %223 = sbr.rel (%p221) target = $region28
      $region27: #{init_net_forward.2} parent=11 // pred_region
        _
      $region28: #{init_net_forward.2} parent=11 // pred_fallthru
        _
      // Predicated region
      $region29: #{init_net_forward.2} parent=11 // pred_check
        %p224 = pneg %p145
      $region30: #{init_net_forward.2} parent=11 // pred_check_branch
        %226 = sbr.rel (%p224) target = $region32
      $region31: #{init_net_forward.2} parent=11 // pred_region
        _
      $region32: #{init_net_forward.2} parent=11 // pred_fallthru
        _
    $region12: #{init_net_forward.2} parent=5 // pred_fallthru
      _
    %p227 = scmp.lt.s32.totalorder %s14, 2
    // Predicated region
    $region33: #{init_net_forward.2} parent=5 // pred_check
      %p228 = pneg %p227
    $region34: #{init_net_forward.2} parent=5 // pred_check_branch
      %230 = sbr.rel (%p228) target = $region36
    $region35: #{init_net_forward.2} parent=5 // pred_region
      // Predicated region
      $region37: #{init_net_forward.2} parent=35 // pred_check
        %p231 = pneg %p34
      $region38: #{init_net_forward.2} parent=35 // pred_check_branch
        %233 = sbr.rel (%p231) target = $region40
      $region39: #{init_net_forward.2} parent=35 // pred_region
        %s234 = smul.u32 16, %s14
        %p235 = scmp.lt.s32.totalorder %s234, 31
        %s236 = scalar_select %p235, %s234, 31
        %s237 = smul.addr %s236, 4
        %s238 = scalar_lea.vmem %s0, %s237
        %s239 = smul.u32 16, %s14
      $region40: #{init_net_forward.2} parent=35 // pred_fallthru
        _
    $region36: #{init_net_forward.2} parent=5 // pred_fallthru
      _
    %p240 = scmp.le.s32.totalorder 1, %s14
    %p241 = scmp.lt.s32.totalorder %s14, 3
    %p242 = pnand %p240, %p241
    %p243 = pneg %p242
    // Predicated region
    $region41: #{init_net_forward.2} parent=5 // pred_check
      _
    $region42: #{init_net_forward.2} parent=5 // pred_check_branch
      %245 = sbr.rel (%p242) target = $region44
    $region43: #{init_net_forward.2} parent=5 // pred_region
      %s246 = ssub.s32 %s14, 1
      %s247 = smul.u32 16, %s19
      %p248 = scmp.lt.s32.totalorder %s247, 31
      %s249 = scalar_select %p248, %s247, 31
      %s250 = smul.addr %s249, 4
      %s251 = scalar_lea.vmem %s0, %s250
      %p252 = pneg %p40
      %p253 = pneg %p37
      %p254 = pneg %p61
      %p255 = pneg %p58
      %p256 = pneg %p82
      %p257 = pneg %p79
      %p258 = pneg %p103
      %p259 = pneg %p100
      %p260 = pneg %p124
      %p261 = pneg %p121
      %p262 = pneg %p145
      %p263 = pneg %p142
      %p264 = pneg %p171
      %p265 = pneg %p168
      %s266 = smul.u32 16, %s19
      %p267 = scmp.lt.s32.totalorder %s266, 31
      %s268 = scalar_select %p267, %s266, 31
      %s269 = smul.addr %s268, 4
      %s270 = scalar_lea.vmem %s6, %s269
      %p271 = pneg %p197
      %p272 = pneg %p194
      %s273 = smul.u32 16, %s19
      %p274 = scmp.lt.s32.totalorder %s273, 31
      %s275 = scalar_select %p274, %s273, 31
      %s276 = smul.addr %s275, 8
      %s277 = scalar_lea.vmem %s7, %s276
      %s278 = smul.u32 16, %s19
      %p279 = scmp.lt.s32.totalorder %s278, 31
      %s280 = scalar_select %p279, %s278, 31
      %s281 = smul.addr %s280, 4
      %s282 = scalar_lea.vmem %s0, %s281
      %s283 = smul.u32 16, %s19
      %s284 = smul.u32 16, %s19
      %p285 = scmp.lt.s32.totalorder %s284, 31
      %s286 = scalar_select %p285, %s284, 31
      %s287 = smul.addr %s286, 4
      %s288 = scalar_lea.vmem %s6, %s287
      %s289 = smul.u32 16, %s19
      %s290 = smul.u32 16, %s19
      %p291 = scmp.lt.s32.totalorder %s290, 31
      %s292 = scalar_select %p291, %s290, 31
      %s293 = smul.addr %s292, 8
      %s294 = scalar_lea.vmem %s7, %s293
      %s295 = smul.u32 16, %s19
      %v297 = vld [vmem:[%s282] sm:$0xf]
      %v298 = vld [vmem:[%s282 + $0x4] sm:$0xf]
      %v299 = vld [vmem:[%s282 + $0x8] sm:$0xf]
      %v300 = vld [vmem:[%s282 + $0xc] sm:$0xf]
      %v301 = vld [vmem:[%s282 + $0x10] sm:$0xf]
      %v302 = vld [vmem:[%s282 + $0x14] sm:$0xf]
      %v303 = vld [vmem:[%s282 + $0x18] sm:$0xf]
      %v304 = vld [vmem:[%s282 + $0x1c] sm:$0xf]
      %v305 = vld [vmem:[%s282 + $0x20] sm:$0xf]
      %v306 = vld [vmem:[%s282 + $0x24] sm:$0xf]
      %v307 = vld [vmem:[%s282 + $0x28] sm:$0xf]
      %v308 = vld [vmem:[%s282 + $0x2c] sm:$0xf]
      %v309 = vld [vmem:[%s282 + $0x30] sm:$0xf]
      %v310 = vld [vmem:[%s282 + $0x34] sm:$0xf]
      %v311 = vld [vmem:[%s282 + $0x38] sm:$0xf]
      %v312 = vld [vmem:[%s282 + $0x3c] sm:$0xf]
      %v313 = vld [vmem:[%s1] sm:$0xf]
      %v314 = vld [vmem:[%s1 + $0x4] sm:$0xf]
      %v315 = vld [vmem:[%s1 + $0x8] sm:$0xf]
      %v316 = vld [vmem:[%s1 + $0xc] sm:$0x3]
      %v317 = vld [vmem:[%s5] sm:$0x1]
      %v319 = vlaneseq
      %v320 = vshrl.u32 %v319, 7
      %v321 = vsub.s32 0, %v320
      %v322 = vrot.slane %v317, %v321
      %v340 = vunpack.c.l.b16 %v297
      %v341 = vunpack.c.l.b16 %v298
      %v342 = vunpack.c.l.b16 %v299
      %v343 = vunpack.c.l.b16 %v300
      %v344 = vunpack.c.l.b16 %v301
      %v345 = vunpack.c.l.b16 %v302
      %v346 = vunpack.c.l.b16 %v303
      %v347 = vunpack.c.l.b16 %v304
      %v348 = vunpack.c.l.b16 %v305
      %v349 = vunpack.c.l.b16 %v306
      %v350 = vunpack.c.l.b16 %v307
      %v351 = vunpack.c.l.b16 %v308
      %v352 = vunpack.c.l.b16 %v309
      %v353 = vunpack.c.l.b16 %v310
      %v354 = vunpack.c.l.b16 %v311
      %v355 = vunpack.c.l.b16 %v312
      %v356 = vpack.c.b16 %v341, %v340
      %v357 = vpack.c.b16 %v343, %v342
      %v358 = vpack.c.b16 %v345, %v344
      %v359 = vpack.c.b16 %v347, %v346
      %v360 = vpack.c.b16 %v349, %v348
      %v361 = vpack.c.b16 %v351, %v350
      %v362 = vpack.c.b16 %v353, %v352
      %v363 = vpack.c.b16 %v355, %v354
      %v368 = vunpack.c.l.b16 %v313
      %v369 = vunpack.c.l.b16 %v314
      %v370 = vunpack.c.l.b16 %v315
      %v371 = vunpack.c.l.b16 %v316
      %v372 = vpack.c.b16 %v369, %v368
      %v373 = vpack.c.b16 %v371, %v370
      %vm375 = vcmask 220160
      %v377 = vsel %vm375, %v356, 0
      %v380 = vsel %vm375, %v357, 0
      %v383 = vsel %vm375, %v358, 0
      %v386 = vsel %vm375, %v359, 0
      %v389 = vsel %vm375, %v360, 0
      %v392 = vsel %vm375, %v361, 0
      %v395 = vsel %vm375, %v362, 0
      %v398 = vsel %vm375, %v363, 0
      %vm400 = vcmask 1044480
      %vm401 = vcmask 1045504
      %v402 = vsel %vm400, 4294967295, 65535
      %v403 = vsel %vm401, %v402, 0
      %v405 = vand.u32 %v373, %v403
      %407 = vmatprep.subr.bf16.mxu0 0
      %408 = vmatpush1.bf16.msra.mxu0 %v372
      %409 = vmatprep.subr.bf16.mxu0 0
      %410 = vmatpush1.bf16.msra.mxu0 %v405
      %411 = vmatprep.subr.bf16.mxu0 0
      %412 = vmatpush1.bf16.msra.mxu0 0
      %413 = vmatprep.subr.bf16.mxu0 0
      %414 = vmatpush1.bf16.msra.mxu0 0
      %415 = vmatprep.subr.bf16.mxu0 0
      %416 = vmatpush1.bf16.msra.mxu0 0
      %417 = vmatprep.subr.bf16.mxu0 0
      %418 = vmatpush1.bf16.msra.mxu0 0
      %419 = vmatprep.subr.bf16.mxu0 0
      %420 = vmatpush1.bf16.msra.mxu0 0
      %421 = vmatprep.subr.bf16.mxu0 0
      %422 = vmatpush1.bf16.msra.mxu0 0
      %423 = vmatprep.subr.bf16.mxu0 0
      %424 = vmatpush1.bf16.msra.mxu0 0
      %425 = vmatprep.subr.bf16.mxu0 0
      %426 = vmatpush1.bf16.msra.mxu0 0
      %427 = vmatprep.subr.bf16.mxu0 0
      %428 = vmatpush1.bf16.msra.mxu0 0
      %429 = vmatprep.subr.bf16.mxu0 0
      %430 = vmatpush1.bf16.msra.mxu0 0
      %431 = vmatprep.subr.bf16.mxu0 0
      %432 = vmatpush1.bf16.msra.mxu0 0
      %433 = vmatprep.subr.bf16.mxu0 0
      %434 = vmatpush1.bf16.msra.mxu0 0
      %435 = vmatprep.subr.bf16.mxu0 0
      %436 = vmatpush1.bf16.msra.mxu0 0
      %437 = vmatprep.subr.bf16.mxu0 0
      %438 = vmatpush1.bf16.msra.mxu0 0
      %439 = vmatprep.mubr.bf16.mxu0 0
      %440 = vmatmul.mubr.bf16.gmra.mrb[0].mxu0 %v377
      %v441 = vpop.f32.mrb[0].mxu0
      %v442 = vadd.f32 %v322, %v441
      %v443 = vpop.f32.mrb[0].mxu0
      %v444 = vpop.f32.mrb[0].mxu0
      %v445 = vadd.f32 %v322, %v444
      %v446 = vpop.f32.mrb[0].mxu0
      %447 = vmatprep.mubr.bf16.mxu0 0
      %448 = vmatmul.mubr.bf16.gmra.mrb[0].mxu0 %v380
      %v449 = vpop.f32.mrb[0].mxu0
      %v450 = vadd.f32 %v322, %v449
      %v451 = vpop.f32.mrb[0].mxu0
      %v452 = vpop.f32.mrb[0].mxu0
      %v453 = vadd.f32 %v322, %v452
      %v454 = vpop.f32.mrb[0].mxu0
      %455 = vmatprep.mubr.bf16.mxu0 0
      %456 = vmatmul.mubr.bf16.gmra.mrb[0].mxu0 %v383
      %v457 = vpop.f32.mrb[0].mxu0
      %v458 = vadd.f32 %v322, %v457
      %v459 = vpop.f32.mrb[0].mxu0
      %v460 = vpop.f32.mrb[0].mxu0
      %v461 = vadd.f32 %v322, %v460
      %v462 = vpop.f32.mrb[0].mxu0
      %463 = vmatprep.mubr.bf16.mxu0 0
      %464 = vmatmul.mubr.bf16.gmra.mrb[0].mxu0 %v386
      %v465 = vpop.f32.mrb[0].mxu0
      %v466 = vadd.f32 %v322, %v465
      %v467 = vpop.f32.mrb[0].mxu0
      %v468 = vpop.f32.mrb[0].mxu0
      %v469 = vadd.f32 %v322, %v468
      %v470 = vpop.f32.mrb[0].mxu0
      %471 = vmatprep.mubr.bf16.mxu0 0
      %472 = vmatmul.mubr.bf16.gmra.mrb[0].mxu0 %v389
      %v473 = vpop.f32.mrb[0].mxu0
      %v474 = vadd.f32 %v322, %v473
      %v475 = vpop.f32.mrb[0].mxu0
      %v476 = vpop.f32.mrb[0].mxu0
      %v477 = vadd.f32 %v322, %v476
      %v478 = vpop.f32.mrb[0].mxu0
      %479 = vmatprep.mubr.bf16.mxu0 0
      %480 = vmatmul.mubr.bf16.gmra.mrb[0].mxu0 %v392
      %v481 = vpop.f32.mrb[0].mxu0
      %v482 = vadd.f32 %v322, %v481
      %v483 = vpop.f32.mrb[0].mxu0
      %v484 = vpop.f32.mrb[0].mxu0
      %v485 = vadd.f32 %v322, %v484
      %v486 = vpop.f32.mrb[0].mxu0
      %487 = vmatprep.mubr.bf16.mxu0 0
      %488 = vmatmul.mubr.bf16.gmra.mrb[0].mxu0 %v395
      %v489 = vpop.f32.mrb[0].mxu0
      %v490 = vadd.f32 %v322, %v489
      %v491 = vpop.f32.mrb[0].mxu0
      %v492 = vpop.f32.mrb[0].mxu0
      %v493 = vadd.f32 %v322, %v492
      %v494 = vpop.f32.mrb[0].mxu0
      %495 = vmatprep.mubr.bf16.mxu0 0
      %496 = vmatmul.mubr.bf16.gmra.mrb[0].mxu0 %v398
      %v497 = vpop.f32.mrb[0].mxu0
      %v498 = vadd.f32 %v322, %v497
      %v499 = vpop.f32.mrb[0].mxu0
      %v500 = vpop.f32.mrb[0].mxu0
      %v501 = vadd.f32 %v322, %v500
      %v502 = vpop.f32.mrb[0].mxu0
      %503 = vdwg.mxu0
      %v504 = vmax.f32 %v442, 0.0
      %v505 = vmax.f32 %v445, 0.0
      %v506 = vmax.f32 %v450, 0.0
      %v507 = vmax.f32 %v453, 0.0
      %v508 = vmax.f32 %v458, 0.0
      %v509 = vmax.f32 %v461, 0.0
      %v510 = vmax.f32 %v466, 0.0
      %v511 = vmax.f32 %v469, 0.0
      %v512 = vmax.f32 %v474, 0.0
      %v513 = vmax.f32 %v477, 0.0
      %v514 = vmax.f32 %v482, 0.0
      %v515 = vmax.f32 %v485, 0.0
      %v516 = vmax.f32 %v490, 0.0
      %v517 = vmax.f32 %v493, 0.0
      %v518 = vmax.f32 %v498, 0.0
      %v519 = vmax.f32 %v501, 0.0
      %v520 = vld [vmem:[%s2] sm:$0xf]
      %v521 = vld [vmem:[%s2 + $0x4] sm:$0xf]
      %v522 = vld [vmem:[%s2 + $0x8] sm:$0xf]
      %v523 = vld [vmem:[%s2 + $0xc] sm:$0xf]
      %v524 = vld [vmem:[%s2 + $0x10] sm:$0xf]
      %v525 = vld [vmem:[%s2 + $0x14] sm:$0xf]
      %v526 = vld [vmem:[%s2 + $0x18] sm:$0xf]
      %v527 = vld [vmem:[%s2 + $0x1c] sm:$0xf]
      %v528 = vpack.c.bf16 %v505, %v504
      %v529 = vpack.c.bf16 %v507, %v506
      %v530 = vpack.c.bf16 %v509, %v508
      %v531 = vpack.c.bf16 %v511, %v510
      %v532 = vpack.c.bf16 %v513, %v512
      %v533 = vpack.c.bf16 %v515, %v514
      %v534 = vpack.c.bf16 %v517, %v516
      %v535 = vpack.c.bf16 %v519, %v518
      %v544 = vunpack.c.l.b16 %v520
      %v545 = vunpack.c.l.b16 %v521
      %v546 = vunpack.c.l.b16 %v522
      %v547 = vunpack.c.l.b16 %v523
      %v548 = vunpack.c.l.b16 %v524
      %v549 = vunpack.c.l.b16 %v525
      %v550 = vunpack.c.l.b16 %v526
      %v551 = vunpack.c.l.b16 %v527
      %v552 = vpack.c.b16 %v545, %v544
      %v553 = vpack.c.b16 %v547, %v546
      %v554 = vpack.c.b16 %v549, %v548
      %v555 = vpack.c.b16 %v551, %v550
      %560 = vrot.lane.b32.xlu0 %v322, 64
      %v561 = vpop.permute.xlu0 %560
      %vm563 = vcmask 523264
      %v565 = vsel %vm563, %v528, 0
      %v568 = vsel %vm563, %v529, 0
      %v571 = vsel %vm563, %v530, 0
      %v574 = vsel %vm563, %v531, 0
      %v577 = vsel %vm563, %v532, 0
      %v580 = vsel %vm563, %v533, 0
      %v583 = vsel %vm563, %v534, 0
      %v586 = vsel %vm563, %v535, 0
      %588 = vmatprep.subr.bf16.mxu0 0
      %589 = vmatpush1.bf16.msra.mxu0 %v552
      %590 = vmatprep.subr.bf16.mxu0 0
      %591 = vmatpush1.bf16.msra.mxu0 %v553
      %592 = vmatprep.subr.bf16.mxu0 0
      %593 = vmatpush1.bf16.msra.mxu0 %v554
      %594 = vmatprep.subr.bf16.mxu0 0
      %595 = vmatpush1.bf16.msra.mxu0 %v555
      %596 = vmatprep.subr.bf16.mxu0 0
      %597 = vmatpush1.bf16.msra.mxu0 0
      %598 = vmatprep.subr.bf16.mxu0 0
      %599 = vmatpush1.bf16.msra.mxu0 0
      %600 = vmatprep.subr.bf16.mxu0 0
      %601 = vmatpush1.bf16.msra.mxu0 0
      %602 = vmatprep.subr.bf16.mxu0 0
      %603 = vmatpush1.bf16.msra.mxu0 0
      %604 = vmatprep.subr.bf16.mxu0 0
      %605 = vmatpush1.bf16.msra.mxu0 0
      %606 = vmatprep.subr.bf16.mxu0 0
      %607 = vmatpush1.bf16.msra.mxu0 0
      %608 = vmatprep.subr.bf16.mxu0 0
      %609 = vmatpush1.bf16.msra.mxu0 0
      %610 = vmatprep.subr.bf16.mxu0 0
      %611 = vmatpush1.bf16.msra.mxu0 0
      %612 = vmatprep.subr.bf16.mxu0 0
      %613 = vmatpush1.bf16.msra.mxu0 0
      %614 = vmatprep.subr.bf16.mxu0 0
      %615 = vmatpush1.bf16.msra.mxu0 0
      %616 = vmatprep.subr.bf16.mxu0 0
      %617 = vmatpush1.bf16.msra.mxu0 0
      %618 = vmatprep.subr.bf16.mxu0 0
      %619 = vmatpush1.bf16.msra.mxu0 0
      %620 = vmatprep.mubr.bf16.mxu0 0
      %621 = vmatmul.mubr.bf16.gmra.mrb[0].mxu0 %v565
      %v622 = vpop.f32.mrb[0].mxu0
      %v623 = vadd.f32 %v561, %v622
      %v624 = vpop.f32.mrb[0].mxu0
      %v625 = vpop.f32.mrb[0].mxu0
      %v626 = vadd.f32 %v561, %v625
      %v627 = vpop.f32.mrb[0].mxu0
      %628 = vmatprep.mubr.bf16.mxu0 0
      %629 = vmatmul.mubr.bf16.gmra.mrb[0].mxu0 %v568
      %v630 = vpop.f32.mrb[0].mxu0
      %v631 = vadd.f32 %v561, %v630
      %v632 = vpop.f32.mrb[0].mxu0
      %v633 = vpop.f32.mrb[0].mxu0
      %v634 = vadd.f32 %v561, %v633
      %v635 = vpop.f32.mrb[0].mxu0
      %636 = vmatprep.mubr.bf16.mxu0 0
      %637 = vmatmul.mubr.bf16.gmra.mrb[0].mxu0 %v571
      %v638 = vpop.f32.mrb[0].mxu0
      %v639 = vadd.f32 %v561, %v638
      %v640 = vpop.f32.mrb[0].mxu0
      %v641 = vpop.f32.mrb[0].mxu0
      %v642 = vadd.f32 %v561, %v641
      %v643 = vpop.f32.mrb[0].mxu0
      %644 = vmatprep.mubr.bf16.mxu0 0
      %645 = vmatmul.mubr.bf16.gmra.mrb[0].mxu0 %v574
      %v646 = vpop.f32.mrb[0].mxu0
      %v647 = vadd.f32 %v561, %v646
      %v648 = vpop.f32.mrb[0].mxu0
      %v649 = vpop.f32.mrb[0].mxu0
      %v650 = vadd.f32 %v561, %v649
      %v651 = vpop.f32.mrb[0].mxu0
      %652 = vmatprep.mubr.bf16.mxu0 0
      %653 = vmatmul.mubr.bf16.gmra.mrb[0].mxu0 %v577
      %v654 = vpop.f32.mrb[0].mxu0
      %v655 = vadd.f32 %v561, %v654
      %v656 = vpop.f32.mrb[0].mxu0
      %v657 = vpop.f32.mrb[0].mxu0
      %v658 = vadd.f32 %v561, %v657
      %v659 = vpop.f32.mrb[0].mxu0
      %660 = vmatprep.mubr.bf16.mxu0 0
      %661 = vmatmul.mubr.bf16.gmra.mrb[0].mxu0 %v580
      %v662 = vpop.f32.mrb[0].mxu0
      %v663 = vadd.f32 %v561, %v662
      %v664 = vpop.f32.mrb[0].mxu0
      %v665 = vpop.f32.mrb[0].mxu0
      %v666 = vadd.f32 %v561, %v665
      %v667 = vpop.f32.mrb[0].mxu0
      %668 = vmatprep.mubr.bf16.mxu0 0
      %669 = vmatmul.mubr.bf16.gmra.mrb[0].mxu0 %v583
      %v670 = vpop.f32.mrb[0].mxu0
      %v671 = vadd.f32 %v561, %v670
      %v672 = vpop.f32.mrb[0].mxu0
      %v673 = vpop.f32.mrb[0].mxu0
      %v674 = vadd.f32 %v561, %v673
      %v675 = vpop.f32.mrb[0].mxu0
      %676 = vmatprep.mubr.bf16.mxu0 0
      %677 = vmatmul.mubr.bf16.gmra.mrb[0].mxu0 %v586
      %v678 = vpop.f32.mrb[0].mxu0
      %v679 = vadd.f32 %v561, %v678
      %v680 = vpop.f32.mrb[0].mxu0
      %v681 = vpop.f32.mrb[0].mxu0
      %v682 = vadd.f32 %v561, %v681
      %v683 = vpop.f32.mrb[0].mxu0
      %684 = vdwg.mxu0
      %v685 = vmax.f32 %v623, 0.0
      %v686 = vmax.f32 %v626, 0.0
      %v687 = vmax.f32 %v631, 0.0
      %v688 = vmax.f32 %v634, 0.0
      %v689 = vmax.f32 %v639, 0.0
      %v690 = vmax.f32 %v642, 0.0
      %v691 = vmax.f32 %v647, 0.0
      %v692 = vmax.f32 %v650, 0.0
      %v693 = vmax.f32 %v655, 0.0
      %v694 = vmax.f32 %v658, 0.0
      %v695 = vmax.f32 %v663, 0.0
      %v696 = vmax.f32 %v666, 0.0
      %v697 = vmax.f32 %v671, 0.0
      %v698 = vmax.f32 %v674, 0.0
      %v699 = vmax.f32 %v679, 0.0
      %v700 = vmax.f32 %v682, 0.0
      %v701 = vld [vmem:[%s3] sm:$0xf]
      %v702 = vld [vmem:[%s3 + $0x4] sm:$0xf]
      %v703 = vld [vmem:[%s3 + $0x8] sm:$0xf]
      %v704 = vld [vmem:[%s3 + $0xc] sm:$0xf]
      %v705 = vld [vmem:[%s3 + $0x10] sm:$0xf]
      %v706 = vld [vmem:[%s3 + $0x14] sm:$0xf]
      %v707 = vld [vmem:[%s3 + $0x18] sm:$0xf]
      %v708 = vld [vmem:[%s3 + $0x1c] sm:$0xf]
      %v709 = vpack.c.bf16 %v686, %v685
      %v710 = vpack.c.bf16 %v688, %v687
      %v711 = vpack.c.bf16 %v690, %v689
      %v712 = vpack.c.bf16 %v692, %v691
      %v713 = vpack.c.bf16 %v694, %v693
      %v714 = vpack.c.bf16 %v696, %v695
      %v715 = vpack.c.bf16 %v698, %v697
      %v716 = vpack.c.bf16 %v700, %v699
      %v717 = vld [vmem:[%s5 + $0x1] sm:$0x1]
      %v719 = vlaneseq
      %v720 = vshrl.u32 %v719, 7
      %v721 = vsub.s32 0, %v720
      %v722 = vrot.slane %v717, %v721
      %v732 = vunpack.c.l.b16 %v701
      %v733 = vunpack.c.l.b16 %v702
      %v734 = vunpack.c.l.b16 %v703
      %v735 = vunpack.c.l.b16 %v704
      %v736 = vunpack.c.l.b16 %v705
      %v737 = vunpack.c.l.b16 %v706
      %v738 = vunpack.c.l.b16 %v707
      %v739 = vunpack.c.l.b16 %v708
      %v740 = vpack.c.b16 %v733, %v732
      %v741 = vpack.c.b16 %v735, %v734
      %v742 = vpack.c.b16 %v737, %v736
      %v743 = vpack.c.b16 %v739, %v738
      %v749 = vsel %vm563, %v709, 0
      %v752 = vsel %vm563, %v710, 0
      %v755 = vsel %vm563, %v711, 0
      %v758 = vsel %vm563, %v712, 0
      %v761 = vsel %vm563, %v713, 0
      %v764 = vsel %vm563, %v714, 0
      %v767 = vsel %vm563, %v715, 0
      %v770 = vsel %vm563, %v716, 0
      %772 = vmatprep.subr.bf16.mxu0 0
      %773 = vmatpush1.bf16.msra.mxu0 %v740
      %774 = vmatprep.subr.bf16.mxu0 0
      %775 = vmatpush1.bf16.msra.mxu0 %v741
      %776 = vmatprep.subr.bf16.mxu0 0
      %777 = vmatpush1.bf16.msra.mxu0 %v742
      %778 = vmatprep.subr.bf16.mxu0 0
      %779 = vmatpush1.bf16.msra.mxu0 %v743
      %780 = vmatprep.subr.bf16.mxu0 0
      %781 = vmatpush1.bf16.msra.mxu0 0
      %782 = vmatprep.subr.bf16.mxu0 0
      %783 = vmatpush1.bf16.msra.mxu0 0
      %784 = vmatprep.subr.bf16.mxu0 0
      %785 = vmatpush1.bf16.msra.mxu0 0
      %786 = vmatprep.subr.bf16.mxu0 0
      %787 = vmatpush1.bf16.msra.mxu0 0
      %788 = vmatprep.subr.bf16.mxu0 0
      %789 = vmatpush1.bf16.msra.mxu0 0
      %790 = vmatprep.subr.bf16.mxu0 0
      %791 = vmatpush1.bf16.msra.mxu0 0
      %792 = vmatprep.subr.bf16.mxu0 0
      %793 = vmatpush1.bf16.msra.mxu0 0
      %794 = vmatprep.subr.bf16.mxu0 0
      %795 = vmatpush1.bf16.msra.mxu0 0
      %796 = vmatprep.subr.bf16.mxu0 0
      %797 = vmatpush1.bf16.msra.mxu0 0
      %798 = vmatprep.subr.bf16.mxu0 0
      %799 = vmatpush1.bf16.msra.mxu0 0
      %800 = vmatprep.subr.bf16.mxu0 0
      %801 = vmatpush1.bf16.msra.mxu0 0
      %802 = vmatprep.subr.bf16.mxu0 0
      %803 = vmatpush1.bf16.msra.mxu0 0
      %804 = vmatprep.mubr.bf16.mxu0 0
      %805 = vmatmul.mubr.bf16.gmra.mrb[0].mxu0 %v749
      %v806 = vpop.f32.mrb[0].mxu0
      %v807 = vadd.f32 %v722, %v806
      %v808 = vpop.f32.mrb[0].mxu0
      %v809 = vpop.f32.mrb[0].mxu0
      %v810 = vadd.f32 %v722, %v809
      %v811 = vpop.f32.mrb[0].mxu0
      %812 = vmatprep.mubr.bf16.mxu0 0
      %813 = vmatmul.mubr.bf16.gmra.mrb[0].mxu0 %v752
      %v814 = vpop.f32.mrb[0].mxu0
      %v815 = vadd.f32 %v722, %v814
      %v816 = vpop.f32.mrb[0].mxu0
      %v817 = vpop.f32.mrb[0].mxu0
      %v818 = vadd.f32 %v722, %v817
      %v819 = vpop.f32.mrb[0].mxu0
      %820 = vmatprep.mubr.bf16.mxu0 0
      %821 = vmatmul.mubr.bf16.gmra.mrb[0].mxu0 %v755
      %v822 = vpop.f32.mrb[0].mxu0
      %v823 = vadd.f32 %v722, %v822
      %v824 = vpop.f32.mrb[0].mxu0
      %v825 = vpop.f32.mrb[0].mxu0
      %v826 = vadd.f32 %v722, %v825
      %v827 = vpop.f32.mrb[0].mxu0
      %828 = vmatprep.mubr.bf16.mxu0 0
      %829 = vmatmul.mubr.bf16.gmra.mrb[0].mxu0 %v758
      %v830 = vpop.f32.mrb[0].mxu0
      %v831 = vadd.f32 %v722, %v830
      %v832 = vpop.f32.mrb[0].mxu0
      %v833 = vpop.f32.mrb[0].mxu0
      %v834 = vadd.f32 %v722, %v833
      %v835 = vpop.f32.mrb[0].mxu0
      %836 = vmatprep.mubr.bf16.mxu0 0
      %837 = vmatmul.mubr.bf16.gmra.mrb[0].mxu0 %v761
      %v838 = vpop.f32.mrb[0].mxu0
      %v839 = vadd.f32 %v722, %v838
      %v840 = vpop.f32.mrb[0].mxu0
      %v841 = vpop.f32.mrb[0].mxu0
      %v842 = vadd.f32 %v722, %v841
      %v843 = vpop.f32.mrb[0].mxu0
      %844 = vmatprep.mubr.bf16.mxu0 0
      %845 = vmatmul.mubr.bf16.gmra.mrb[0].mxu0 %v764
      %v846 = vpop.f32.mrb[0].mxu0
      %v847 = vadd.f32 %v722, %v846
      %v848 = vpop.f32.mrb[0].mxu0
      %v849 = vpop.f32.mrb[0].mxu0
      %v850 = vadd.f32 %v722, %v849
      %v851 = vpop.f32.mrb[0].mxu0
      %852 = vmatprep.mubr.bf16.mxu0 0
      %853 = vmatmul.mubr.bf16.gmra.mrb[0].mxu0 %v767
      %v854 = vpop.f32.mrb[0].mxu0
      %v855 = vadd.f32 %v722, %v854
      %v856 = vpop.f32.mrb[0].mxu0
      %v857 = vpop.f32.mrb[0].mxu0
      %v858 = vadd.f32 %v722, %v857
      %v859 = vpop.f32.mrb[0].mxu0
      %860 = vmatprep.mubr.bf16.mxu0 0
      %861 = vmatmul.mubr.bf16.gmra.mrb[0].mxu0 %v770
      %v862 = vpop.f32.mrb[0].mxu0
      %v863 = vadd.f32 %v722, %v862
      %v864 = vpop.f32.mrb[0].mxu0
      %v865 = vpop.f32.mrb[0].mxu0
      %v866 = vadd.f32 %v722, %v865
      %v867 = vpop.f32.mrb[0].mxu0
      %868 = vdwg.mxu0
      %v869 = vmax.f32 %v807, 0.0
      %v870 = vmax.f32 %v810, 0.0
      %v871 = vmax.f32 %v815, 0.0
      %v872 = vmax.f32 %v818, 0.0
      %v873 = vmax.f32 %v823, 0.0
      %v874 = vmax.f32 %v826, 0.0
      %v875 = vmax.f32 %v831, 0.0
      %v876 = vmax.f32 %v834, 0.0
      %v877 = vmax.f32 %v839, 0.0
      %v878 = vmax.f32 %v842, 0.0
      %v879 = vmax.f32 %v847, 0.0
      %v880 = vmax.f32 %v850, 0.0
      %v881 = vmax.f32 %v855, 0.0
      %v882 = vmax.f32 %v858, 0.0
      %v883 = vmax.f32 %v863, 0.0
      %v884 = vmax.f32 %v866, 0.0
      %v885 = vld [vmem:[%s4] sm:$0xf]
      %v886 = vld [vmem:[%s4 + $0x4] sm:$0xf]
      %v887 = vld [vmem:[%s4 + $0x8] sm:$0xf]
      %v888 = vld [vmem:[%s4 + $0xc] sm:$0xf]
      %v889 = vld [vmem:[%s4 + $0x10] sm:$0xf]
      %v890 = vld [vmem:[%s4 + $0x14] sm:$0xf]
      %v891 = vld [vmem:[%s4 + $0x18] sm:$0xf]
      %v892 = vld [vmem:[%s4 + $0x1c] sm:$0xf]
      %v893 = vpack.c.bf16 %v870, %v869
      %v894 = vpack.c.bf16 %v872, %v871
      %v895 = vpack.c.bf16 %v874, %v873
      %v896 = vpack.c.bf16 %v876, %v875
      %v897 = vpack.c.bf16 %v878, %v877
      %v898 = vpack.c.bf16 %v880, %v879
      %v899 = vpack.c.bf16 %v882, %v881
      %v900 = vpack.c.bf16 %v884, %v883
      %v909 = vunpack.c.l.b16 %v885
      %v910 = vunpack.c.l.b16 %v886
      %v911 = vunpack.c.l.b16 %v887
      %v912 = vunpack.c.l.b16 %v888
      %v913 = vunpack.c.l.b16 %v889
      %v914 = vunpack.c.l.b16 %v890
      %v915 = vunpack.c.l.b16 %v891
      %v916 = vunpack.c.l.b16 %v892
      %v917 = vpack.c.b16 %v910, %v909
      %v918 = vpack.c.b16 %v912, %v911
      %v919 = vpack.c.b16 %v914, %v913
      %v920 = vpack.c.b16 %v916, %v915
      %v926 = vsel %vm563, %v893, 0
      %v929 = vsel %vm563, %v894, 0
      %v932 = vsel %vm563, %v895, 0
      %v935 = vsel %vm563, %v896, 0
      %v938 = vsel %vm563, %v897, 0
      %v941 = vsel %vm563, %v898, 0
      %v944 = vsel %vm563, %v899, 0
      %v947 = vsel %vm563, %v900, 0
      %949 = vmatprep.subr.bf16.mxu0 0
      %950 = vmatpush1.bf16.msra.mxu0 %v917
      %951 = vmatprep.subr.bf16.mxu0 0
      %952 = vmatpush1.bf16.msra.mxu0 %v918
      %953 = vmatprep.subr.bf16.mxu0 0
      %954 = vmatpush1.bf16.msra.mxu0 %v919
      %955 = vmatprep.subr.bf16.mxu0 0
      %956 = vmatpush1.bf16.msra.mxu0 %v920
      %957 = vmatprep.subr.bf16.mxu0 0
      %958 = vmatpush1.bf16.msra.mxu0 0
      %959 = vmatprep.subr.bf16.mxu0 0
      %960 = vmatpush1.bf16.msra.mxu0 0
      %961 = vmatprep.subr.bf16.mxu0 0
      %962 = vmatpush1.bf16.msra.mxu0 0
      %963 = vmatprep.subr.bf16.mxu0 0
      %964 = vmatpush1.bf16.msra.mxu0 0
      %965 = vmatprep.subr.bf16.mxu0 0
      %966 = vmatpush1.bf16.msra.mxu0 0
      %967 = vmatprep.subr.bf16.mxu0 0
      %968 = vmatpush1.bf16.msra.mxu0 0
      %969 = vmatprep.subr.bf16.mxu0 0
      %970 = vmatpush1.bf16.msra.mxu0 0
      %971 = vmatprep.subr.bf16.mxu0 0
      %972 = vmatpush1.bf16.msra.mxu0 0
      %973 = vmatprep.subr.bf16.mxu0 0
      %974 = vmatpush1.bf16.msra.mxu0 0
      %975 = vmatprep.subr.bf16.mxu0 0
      %976 = vmatpush1.bf16.msra.mxu0 0
      %977 = vmatprep.subr.bf16.mxu0 0
      %978 = vmatpush1.bf16.msra.mxu0 0
      %979 = vmatprep.subr.bf16.mxu0 0
      %980 = vmatpush1.bf16.msra.mxu0 0
      %981 = vmatprep.mubr.bf16.mxu0 0
      %982 = vmatmul.mubr.bf16.gmra.mrb[0].mxu0 %v926
      %v983 = vpop.f32.mrb[0].mxu0
      %v984 = vadd.f32 0.0, %v983
      %v985 = vpop.f32.mrb[0].mxu0
      %v986 = vpop.f32.mrb[0].mxu0
      %v987 = vadd.f32 0.0, %v986
      %v988 = vpop.f32.mrb[0].mxu0
      %989 = vmatprep.mubr.bf16.mxu0 0
      %990 = vmatmul.mubr.bf16.gmra.mrb[0].mxu0 %v929
      %v991 = vpop.f32.mrb[0].mxu0
      %v992 = vadd.f32 0.0, %v991
      %v993 = vpop.f32.mrb[0].mxu0
      %v994 = vpop.f32.mrb[0].mxu0
      %v995 = vadd.f32 0.0, %v994
      %v996 = vpop.f32.mrb[0].mxu0
      %997 = vmatprep.mubr.bf16.mxu0 0
      %998 = vmatmul.mubr.bf16.gmra.mrb[0].mxu0 %v932
      %v999 = vpop.f32.mrb[0].mxu0
      %v1000 = vadd.f32 0.0, %v999
      %v1001 = vpop.f32.mrb[0].mxu0
      %v1002 = vpop.f32.mrb[0].mxu0
      %v1003 = vadd.f32 0.0, %v1002
      %v1004 = vpop.f32.mrb[0].mxu0
      %1005 = vmatprep.mubr.bf16.mxu0 0
      %1006 = vmatmul.mubr.bf16.gmra.mrb[0].mxu0 %v935
      %v1007 = vpop.f32.mrb[0].mxu0
      %v1008 = vadd.f32 0.0, %v1007
      %v1009 = vpop.f32.mrb[0].mxu0
      %v1010 = vpop.f32.mrb[0].mxu0
      %v1011 = vadd.f32 0.0, %v1010
      %v1012 = vpop.f32.mrb[0].mxu0
      %1013 = vmatprep.mubr.bf16.mxu0 0
      %1014 = vmatmul.mubr.bf16.gmra.mrb[0].mxu0 %v938
      %v1015 = vpop.f32.mrb[0].mxu0
      %v1016 = vadd.f32 0.0, %v1015
      %v1017 = vpop.f32.mrb[0].mxu0
      %v1018 = vpop.f32.mrb[0].mxu0
      %v1019 = vadd.f32 0.0, %v1018
      %v1020 = vpop.f32.mrb[0].mxu0
      %1021 = vmatprep.mubr.bf16.mxu0 0
      %1022 = vmatmul.mubr.bf16.gmra.mrb[0].mxu0 %v941
      %v1023 = vpop.f32.mrb[0].mxu0
      %v1024 = vadd.f32 0.0, %v1023
      %v1025 = vpop.f32.mrb[0].mxu0
      %v1026 = vpop.f32.mrb[0].mxu0
      %v1027 = vadd.f32 0.0, %v1026
      %v1028 = vpop.f32.mrb[0].mxu0
      %1029 = vmatprep.mubr.bf16.mxu0 0
      %1030 = vmatmul.mubr.bf16.gmra.mrb[0].mxu0 %v944
      %v1031 = vpop.f32.mrb[0].mxu0
      %v1032 = vadd.f32 0.0, %v1031
      %v1033 = vpop.f32.mrb[0].mxu0
      %v1034 = vpop.f32.mrb[0].mxu0
      %v1035 = vadd.f32 0.0, %v1034
      %v1036 = vpop.f32.mrb[0].mxu0
      %1037 = vmatprep.mubr.bf16.mxu0 0
      %1038 = vmatmul.mubr.bf16.gmra.mrb[0].mxu0 %v947
      %v1039 = vpop.f32.mrb[0].mxu0
      %v1040 = vadd.f32 0.0, %v1039
      %v1041 = vpop.f32.mrb[0].mxu0
      %v1042 = vpop.f32.mrb[0].mxu0
      %v1043 = vadd.f32 0.0, %v1042
      %v1044 = vpop.f32.mrb[0].mxu0
      %1045 = vdwg.mxu0
      %1046 = vrot.lane.b32.xlu0 %v722, 64
      %v1047 = vpop.permute.xlu0 %1046
      %v1049 = vadd.f32 %v984, %v1047
      %v1050 = vadd.f32 %v987, %v1047
      %v1051 = vadd.f32 %v992, %v1047
      %v1052 = vadd.f32 %v995, %v1047
      %v1053 = vadd.f32 %v1000, %v1047
      %v1054 = vadd.f32 %v1003, %v1047
      %v1055 = vadd.f32 %v1008, %v1047
      %v1056 = vadd.f32 %v1011, %v1047
      %v1057 = vadd.f32 %v1016, %v1047
      %v1058 = vadd.f32 %v1019, %v1047
      %v1059 = vadd.f32 %v1024, %v1047
      %v1060 = vadd.f32 %v1027, %v1047
      %v1061 = vadd.f32 %v1032, %v1047
      %v1062 = vadd.f32 %v1035, %v1047
      %v1063 = vadd.f32 %v1040, %v1047
      %v1064 = vadd.f32 %v1043, %v1047
      %v1073 = vunpack.c.l.b16 %v528
      %v1074 = vunpack.c.h.b16 %v528
      %v1075 = vunpack.c.l.b16 %v529
      %v1076 = vunpack.c.h.b16 %v529
      %v1077 = vunpack.c.l.b16 %v530
      %v1078 = vunpack.c.h.b16 %v530
      %v1079 = vunpack.c.l.b16 %v531
      %v1080 = vunpack.c.h.b16 %v531
      %v1081 = vunpack.c.l.b16 %v532
      %v1082 = vunpack.c.h.b16 %v532
      %v1083 = vunpack.c.l.b16 %v533
      %v1084 = vunpack.c.h.b16 %v533
      %v1085 = vunpack.c.l.b16 %v534
      %v1086 = vunpack.c.h.b16 %v534
      %v1087 = vunpack.c.l.b16 %v535
      %v1088 = vunpack.c.h.b16 %v535
      %v1089 = vpack.c.b16 %v1073, %v1073
      %v1090 = vpack.c.b16 %v1074, %v1074
      %v1091 = vpack.c.b16 %v1075, %v1075
      %v1092 = vpack.c.b16 %v1076, %v1076
      %v1093 = vpack.c.b16 %v1077, %v1077
      %v1094 = vpack.c.b16 %v1078, %v1078
      %v1095 = vpack.c.b16 %v1079, %v1079
      %v1096 = vpack.c.b16 %v1080, %v1080
      %v1097 = vpack.c.b16 %v1081, %v1081
      %v1098 = vpack.c.b16 %v1082, %v1082
      %v1099 = vpack.c.b16 %v1083, %v1083
      %v1100 = vpack.c.b16 %v1084, %v1084
      %v1101 = vpack.c.b16 %v1085, %v1085
      %v1102 = vpack.c.b16 %v1086, %v1086
      %v1103 = vpack.c.b16 %v1087, %v1087
      %v1104 = vpack.c.b16 %v1088, %v1088
      %vm1121 = vcmask 519168
      %1122 = vst.msk [vmem:[%s288] sm:$0xf] %vm1121, %v1089
      %1123 = vst.msk [vmem:[%s288 + $0x4] sm:$0xf] %vm1121, %v1090
      %1124 = vst.msk [vmem:[%s288 + $0x8] sm:$0xf] %vm1121, %v1091
      %1125 = vst.msk [vmem:[%s288 + $0xc] sm:$0xf] %vm1121, %v1092
      %1126 = vst.msk [vmem:[%s288 + $0x10] sm:$0xf] %vm1121, %v1093
      %1127 = vst.msk [vmem:[%s288 + $0x14] sm:$0xf] %vm1121, %v1094
      %1128 = vst.msk [vmem:[%s288 + $0x18] sm:$0xf] %vm1121, %v1095
      %1129 = vst.msk [vmem:[%s288 + $0x1c] sm:$0xf] %vm1121, %v1096
      %1130 = vst.msk [vmem:[%s288 + $0x20] sm:$0xf] %vm1121, %v1097
      %1131 = vst.msk [vmem:[%s288 + $0x24] sm:$0xf] %vm1121, %v1098
      %1132 = vst.msk [vmem:[%s288 + $0x28] sm:$0xf] %vm1121, %v1099
      %1133 = vst.msk [vmem:[%s288 + $0x2c] sm:$0xf] %vm1121, %v1100
      %1134 = vst.msk [vmem:[%s288 + $0x30] sm:$0xf] %vm1121, %v1101
      %1135 = vst.msk [vmem:[%s288 + $0x34] sm:$0xf] %vm1121, %v1102
      %1136 = vst.msk [vmem:[%s288 + $0x38] sm:$0xf] %vm1121, %v1103
      %1137 = vst.msk [vmem:[%s288 + $0x3c] sm:$0xf] %vm1121, %v1104
      %v1138 = vsub.f32 0.0, %v1049
      %v1139 = vsub.f32 0.0, %v1050
      %v1140 = vsub.f32 0.0, %v1051
      %v1141 = vsub.f32 0.0, %v1052
      %v1142 = vsub.f32 0.0, %v1053
      %v1143 = vsub.f32 0.0, %v1054
      %v1144 = vsub.f32 0.0, %v1055
      %v1145 = vsub.f32 0.0, %v1056
      %v1146 = vsub.f32 0.0, %v1057
      %v1147 = vsub.f32 0.0, %v1058
      %v1148 = vsub.f32 0.0, %v1059
      %v1149 = vsub.f32 0.0, %v1060
      %v1150 = vsub.f32 0.0, %v1061
      %v1151 = vsub.f32 0.0, %v1062
      %v1152 = vsub.f32 0.0, %v1063
      %v1153 = vsub.f32 0.0, %v1064
      %v1154 = vmul.f32 %v1138, 1.442695
      %v1155 = vpow.pop %v1154
      %v1156 = vmul.f32 %v1139, 1.442695
      %v1157 = vpow.pop %v1156
      %v1158 = vmul.f32 %v1140, 1.442695
      %v1159 = vpow.pop %v1158
      %v1160 = vmul.f32 %v1141, 1.442695
      %v1161 = vpow.pop %v1160
      %v1162 = vmul.f32 %v1142, 1.442695
      %v1163 = vpow.pop %v1162
      %v1164 = vmul.f32 %v1143, 1.442695
      %v1165 = vpow.pop %v1164
      %v1166 = vmul.f32 %v1144, 1.442695
      %v1167 = vpow.pop %v1166
      %v1168 = vmul.f32 %v1145, 1.442695
      %v1169 = vpow.pop %v1168
      %v1170 = vmul.f32 %v1146, 1.442695
      %v1171 = vpow.pop %v1170
      %v1172 = vmul.f32 %v1147, 1.442695
      %v1173 = vpow.pop %v1172
      %v1174 = vmul.f32 %v1148, 1.442695
      %v1175 = vpow.pop %v1174
      %v1176 = vmul.f32 %v1149, 1.442695
      %v1177 = vpow.pop %v1176
      %v1178 = vmul.f32 %v1150, 1.442695
      %v1179 = vpow.pop %v1178
      %v1180 = vmul.f32 %v1151, 1.442695
      %v1181 = vpow.pop %v1180
      %v1182 = vmul.f32 %v1152, 1.442695
      %v1183 = vpow.pop %v1182
      %v1184 = vmul.f32 %v1153, 1.442695
      %v1185 = vpow.pop %v1184
      %v1186 = vadd.f32 %v1155, 1.0
      %v1187 = vadd.f32 %v1157, 1.0
      %v1188 = vadd.f32 %v1159, 1.0
      %v1189 = vadd.f32 %v1161, 1.0
      %v1190 = vadd.f32 %v1163, 1.0
      %v1191 = vadd.f32 %v1165, 1.0
      %v1192 = vadd.f32 %v1167, 1.0
      %v1193 = vadd.f32 %v1169, 1.0
      %v1194 = vadd.f32 %v1171, 1.0
      %v1195 = vadd.f32 %v1173, 1.0
      %v1196 = vadd.f32 %v1175, 1.0
      %v1197 = vadd.f32 %v1177, 1.0
      %v1198 = vadd.f32 %v1179, 1.0
      %v1199 = vadd.f32 %v1181, 1.0
      %v1200 = vadd.f32 %v1183, 1.0
      %v1201 = vadd.f32 %v1185, 1.0
      %v1202 = vrcp.pop %v1186
      %v1203 = vmul.f32 1.0, %v1202
      %v1204 = vrcp.pop %v1187
      %v1205 = vmul.f32 1.0, %v1204
      %v1206 = vrcp.pop %v1188
      %v1207 = vmul.f32 1.0, %v1206
      %v1208 = vrcp.pop %v1189
      %v1209 = vmul.f32 1.0, %v1208
      %v1210 = vrcp.pop %v1190
      %v1211 = vmul.f32 1.0, %v1210
      %v1212 = vrcp.pop %v1191
      %v1213 = vmul.f32 1.0, %v1212
      %v1214 = vrcp.pop %v1192
      %v1215 = vmul.f32 1.0, %v1214
      %v1216 = vrcp.pop %v1193
      %v1217 = vmul.f32 1.0, %v1216
      %v1218 = vrcp.pop %v1194
      %v1219 = vmul.f32 1.0, %v1218
      %v1220 = vrcp.pop %v1195
      %v1221 = vmul.f32 1.0, %v1220
      %v1222 = vrcp.pop %v1196
      %v1223 = vmul.f32 1.0, %v1222
      %v1224 = vrcp.pop %v1197
      %v1225 = vmul.f32 1.0, %v1224
      %v1226 = vrcp.pop %v1198
      %v1227 = vmul.f32 1.0, %v1226
      %v1228 = vrcp.pop %v1199
      %v1229 = vmul.f32 1.0, %v1228
      %v1230 = vrcp.pop %v1200
      %v1231 = vmul.f32 1.0, %v1230
      %v1232 = vrcp.pop %v1201
      %v1233 = vmul.f32 1.0, %v1232
      %vm1234 = vcmask 7168
      %1235 = vst.msk [vmem:[%s294] sm:$0xff] %vm1234, %v1203
      %1236 = vst.msk [vmem:[%s294 + $0x8] sm:$0xff] %vm1234, %v1205
      %1237 = vst.msk [vmem:[%s294 + $0x10] sm:$0xff] %vm1234, %v1207
      %1238 = vst.msk [vmem:[%s294 + $0x18] sm:$0xff] %vm1234, %v1209
      %1239 = vst.msk [vmem:[%s294 + $0x20] sm:$0xff] %vm1234, %v1211
      %1240 = vst.msk [vmem:[%s294 + $0x28] sm:$0xff] %vm1234, %v1213
      %1241 = vst.msk [vmem:[%s294 + $0x30] sm:$0xff] %vm1234, %v1215
      %1242 = vst.msk [vmem:[%s294 + $0x38] sm:$0xff] %vm1234, %v1217
      %1243 = vst.msk [vmem:[%s294 + $0x40] sm:$0xff] %vm1234, %v1219
      %1244 = vst.msk [vmem:[%s294 + $0x48] sm:$0xff] %vm1234, %v1221
      %1245 = vst.msk [vmem:[%s294 + $0x50] sm:$0xff] %vm1234, %v1223
      %1246 = vst.msk [vmem:[%s294 + $0x58] sm:$0xff] %vm1234, %v1225
      %1247 = vst.msk [vmem:[%s294 + $0x60] sm:$0xff] %vm1234, %v1227
      %1248 = vst.msk [vmem:[%s294 + $0x68] sm:$0xff] %vm1234, %v1229
      %1249 = vst.msk [vmem:[%s294 + $0x70] sm:$0xff] %vm1234, %v1231
      %1250 = vst.msk [vmem:[%s294 + $0x78] sm:$0xff] %vm1234, %v1233
      %s1251 = smul.u32 16, %s19
      %p1252 = scmp.lt.s32.totalorder %s1251, 31
      %s1253 = scalar_select %p1252, %s1251, 31
      %s1254 = smul.addr %s1253, 4
      %s1255 = scalar_lea.vmem %s6, %s1254
      %s1256 = smul.u32 16, %s19
      %p1257 = scmp.lt.s32.totalorder %s1256, 31
      %s1258 = scalar_select %p1257, %s1256, 31
      %s1259 = smul.addr %s1258, 8
      %s1260 = scalar_lea.vmem %s7, %s1259
      // Predicated region
      $region45: #{init_net_forward.2} parent=43 // pred_check
        %p1261 = pneg %p168
      $region46: #{init_net_forward.2} parent=43 // pred_check_branch
        %1263 = sbr.rel (%p1261) target = $region48
      $region47: #{init_net_forward.2} parent=43 // pred_region
        %s1264 = smul.u32 16, %s19
      $region48: #{init_net_forward.2} parent=43 // pred_fallthru
        _
      // Predicated region
      $region49: #{init_net_forward.2} parent=43 // pred_check
        %p1265 = pneg %p194
      $region50: #{init_net_forward.2} parent=43 // pred_check_branch
        %1267 = sbr.rel (%p1265) target = $region52
      $region51: #{init_net_forward.2} parent=43 // pred_region
        %s1268 = smul.u32 16, %s19
      $region52: #{init_net_forward.2} parent=43 // pred_fallthru
        _
    $region44: #{init_net_forward.2} parent=5 // pred_fallthru
      _
    %p1269 = scmp.le.s32.totalorder 2, %s14
    // Predicated region
    $region53: #{init_net_forward.2} parent=5 // pred_check
      %p1270 = pneg %p1269
    $region54: #{init_net_forward.2} parent=5 // pred_check_branch
      %1272 = sbr.rel (%p1270) target = $region56
    $region55: #{init_net_forward.2} parent=5 // pred_region
      %s1273 = ssub.s32 %s14, 2
      // Predicated region
      $region57: #{init_net_forward.2} parent=55 // pred_check
        %p1274 = pneg %p174
      $region58: #{init_net_forward.2} parent=55 // pred_check_branch
        %1276 = sbr.rel (%p1274) target = $region60
      $region59: #{init_net_forward.2} parent=55 // pred_region
        %s1277 = smul.u32 16, %s20
        %p1278 = scmp.lt.s32.totalorder %s1277, 31
        %s1279 = scalar_select %p1278, %s1277, 31
        %s1280 = smul.addr %s1279, 4
        %s1281 = scalar_lea.vmem %s6, %s1280
      $region60: #{init_net_forward.2} parent=55 // pred_fallthru
        _
      // Predicated region
      $region61: #{init_net_forward.2} parent=55 // pred_check
        %p1282 = pneg %p200
      $region62: #{init_net_forward.2} parent=55 // pred_check_branch
        %1284 = sbr.rel (%p1282) target = $region64
      $region63: #{init_net_forward.2} parent=55 // pred_region
        %s1285 = smul.u32 16, %s20
        %p1286 = scmp.lt.s32.totalorder %s1285, 31
        %s1287 = scalar_select %p1286, %s1285, 31
        %s1288 = smul.addr %s1287, 8
        %s1289 = scalar_lea.vmem %s7, %s1288
      $region64: #{init_net_forward.2} parent=55 // pred_fallthru
        _
    $region56: #{init_net_forward.2} parent=5 // pred_fallthru
      _
  $region6: #{init_net_forward.2} parent=0 // loop_footer
    %s18 = sadd.s32 1, %s14
  $region7: #{init_net_forward.2} parent=0 // loop_footer_branch
    %13 = sbr.rel target = $region3
  $region8: #{init_net_forward.2} parent=0 // loop_exit
    _

// kernel: init_net_forward.3
$region0: #{init_net_forward.3}
  #allocation0 [shape = 'u32[]', space=smem, size = 0x4, offset = 0x4, fixed_abs, tag = 'smem constant byte address 0x4 - core index']
  #allocation1 [shape = 'u32[144,128]{1,0:T(1,128)}', space=vmem, size = 0x12000, scoped, tag = 'internal scratch']
  %s0 = inlined_call_operand.vmem [shape: bf16[64,256], index: 0, kind: input, shape index: {}]
  %s1 = inlined_call_operand.vmem [shape: f32[64,31], index: 1, kind: input, shape index: {}]
  %s2 = inlined_call_operand.vmem [shape: s32[64,3], index: 2, kind: input, shape index: {}]
  %s3 = inlined_call_operand.vmem [shape: bf16[256,448], index: 3, kind: input, shape index: {}]
  %s4 = inlined_call_operand.vmem [shape: bf16[86,384], index: 4, kind: input, shape index: {}]
  %s5 = inlined_call_operand.vmem [shape: bf16[188,640], index: 5, kind: input, shape index: {}]
  %s6 = inlined_call_operand.vmem [shape: f32[1,1792], index: 6, kind: input, shape index: {}]
  %s7 = inlined_call_operand.vmem [shape: f32[64,128], index: 7, kind: output, shape index: {}]
  %s8 = sld [smem:[#allocation0]]
  $region38: #{init_net_forward.3} parent=0
    _
  %s10 = ssub.s32 1, %s8
  %s11 = scalar_select 0, %s10, %s8
  // Predicated region
  $region2: #{init_net_forward.3} parent=0 // pred_check
    _
  $region3: #{init_net_forward.3} parent=0 // pred_check_branch
    %13 = sbr.rel (0) target = $region5
  $region4: #{init_net_forward.3} parent=0 // pred_region
    _
  $region5: #{init_net_forward.3} parent=0 // pred_fallthru
    _
  // Predicated region
  $region6: #{init_net_forward.3} parent=0 // pred_check
    _
  $region7: #{init_net_forward.3} parent=0 // pred_check_branch
    %15 = sbr.rel (0) target = $region9
  $region8: #{init_net_forward.3} parent=0 // pred_region
    _
  $region9: #{init_net_forward.3} parent=0 // pred_fallthru
    _
  // Predicated region
  $region10: #{init_net_forward.3} parent=0 // pred_check
    _
  $region11: #{init_net_forward.3} parent=0 // pred_check_branch
    %17 = sbr.rel (0) target = $region13
  $region12: #{init_net_forward.3} parent=0 // pred_region
    _
  $region13: #{init_net_forward.3} parent=0 // pred_fallthru
    _
  // Predicated region
  $region14: #{init_net_forward.3} parent=0 // pred_check
    _
  $region15: #{init_net_forward.3} parent=0 // pred_check_branch
    %19 = sbr.rel (0) target = $region17
  $region16: #{init_net_forward.3} parent=0 // pred_region
    _
  $region17: #{init_net_forward.3} parent=0 // pred_fallthru
    _
  // Predicated region
  $region18: #{init_net_forward.3} parent=0 // pred_check
    _
  $region19: #{init_net_forward.3} parent=0 // pred_check_branch
    %21 = sbr.rel (0) target = $region21
  $region20: #{init_net_forward.3} parent=0 // pred_region
    _
  $region21: #{init_net_forward.3} parent=0 // pred_fallthru
    _
  // Predicated region
  $region22: #{init_net_forward.3} parent=0 // pred_check
    _
  $region23: #{init_net_forward.3} parent=0 // pred_check_branch
    %23 = sbr.rel (0) target = $region25
  $region24: #{init_net_forward.3} parent=0 // pred_region
    _
  $region25: #{init_net_forward.3} parent=0 // pred_fallthru
    _
  // Predicated region
  $region26: #{init_net_forward.3} parent=0 // pred_check
    _
  $region27: #{init_net_forward.3} parent=0 // pred_check_branch
    %25 = sbr.rel (0) target = $region29
  $region28: #{init_net_forward.3} parent=0 // pred_region
    _
  $region29: #{init_net_forward.3} parent=0 // pred_fallthru
    _
  %v27 = vld [vmem:[%s0] sm:$0xff]
  %v28 = vld [vmem:[%s0 + $0x8] sm:$0xff]
  %v29 = vld [vmem:[%s0 + $0x10] sm:$0xff]
  %v30 = vld [vmem:[%s0 + $0x18] sm:$0xff]
  %v31 = vld [vmem:[%s0 + $0x20] sm:$0xff]
  %v32 = vld [vmem:[%s0 + $0x28] sm:$0xff]
  %v33 = vld [vmem:[%s0 + $0x30] sm:$0xff]
  %v34 = vld [vmem:[%s0 + $0x38] sm:$0xff]
  %v35 = vld [vmem:[%s3] sm:$0xff]
  %v36 = vld [vmem:[%s3 + $0x10] sm:$0xff]
  %v37 = vld [vmem:[%s3 + $0x20] sm:$0xff]
  %v38 = vld [vmem:[%s3 + $0x30] sm:$0xff]
  %v39 = vld [vmem:[%s3 + $0x40] sm:$0xff]
  %v40 = vld [vmem:[%s3 + $0x50] sm:$0xff]
  %v41 = vld [vmem:[%s3 + $0x60] sm:$0xff]
  %v42 = vld [vmem:[%s3 + $0x70] sm:$0xff]
  %v43 = vld [vmem:[%s3 + $0x80] sm:$0xff]
  %v44 = vld [vmem:[%s3 + $0x90] sm:$0xff]
  %v45 = vld [vmem:[%s3 + $0xa0] sm:$0xff]
  %v46 = vld [vmem:[%s3 + $0xb0] sm:$0xff]
  %v47 = vld [vmem:[%s3 + $0xc0] sm:$0xff]
  %v48 = vld [vmem:[%s3 + $0xd0] sm:$0xff]
  %v49 = vld [vmem:[%s3 + $0xe0] sm:$0xff]
  %v50 = vld [vmem:[%s3 + $0xf0] sm:$0xff]
  %v51 = vld [vmem:[%s3 + $0x100] sm:$0xff]
  %v52 = vld [vmem:[%s3 + $0x110] sm:$0xff]
  %v53 = vld [vmem:[%s3 + $0x120] sm:$0xff]
  %v54 = vld [vmem:[%s3 + $0x130] sm:$0xff]
  %v55 = vld [vmem:[%s3 + $0x140] sm:$0xff]
  %v56 = vld [vmem:[%s3 + $0x150] sm:$0xff]
  %v57 = vld [vmem:[%s3 + $0x160] sm:$0xff]
  %v58 = vld [vmem:[%s3 + $0x170] sm:$0xff]
  %v59 = vld [vmem:[%s3 + $0x180] sm:$0xff]
  %v60 = vld [vmem:[%s3 + $0x190] sm:$0xff]
  %v61 = vld [vmem:[%s3 + $0x1a0] sm:$0xff]
  %v62 = vld [vmem:[%s3 + $0x1b0] sm:$0xff]
  %v63 = vld [vmem:[%s3 + $0x1c0] sm:$0xff]
  %v64 = vld [vmem:[%s3 + $0x1d0] sm:$0xff]
  %v65 = vld [vmem:[%s3 + $0x1e0] sm:$0xff]
  %v66 = vld [vmem:[%s3 + $0x1f0] sm:$0xff]
  %v67 = vld [vmem:[%s6] sm:$0x3]
  %v69 = vlaneseq
  %v70 = vshrl.u32 %v69, 7
  %v71 = vsub.s32 0, %v70
  %v72 = vrot.slane %v67, %v71
  %v73 = vlaneseq
  %v74 = vshrl.u32 %v73, 7
  %v75 = vsub.s32 1, %v74
  %v76 = vrot.slane %v67, %v75
  %v87 = vunpack.c.l.b16 %v27
  %v88 = vunpack.c.h.b16 %v27
  %v89 = vunpack.c.l.b16 %v28
  %v90 = vunpack.c.h.b16 %v28
  %v91 = vunpack.c.l.b16 %v29
  %v92 = vunpack.c.h.b16 %v29
  %v93 = vunpack.c.l.b16 %v30
  %v94 = vunpack.c.h.b16 %v30
  %v95 = vunpack.c.l.b16 %v31
  %v96 = vunpack.c.h.b16 %v31
  %v97 = vunpack.c.l.b16 %v32
  %v98 = vunpack.c.h.b16 %v32
  %v99 = vunpack.c.l.b16 %v33
  %v100 = vunpack.c.h.b16 %v33
  %v101 = vunpack.c.l.b16 %v34
  %v102 = vunpack.c.h.b16 %v34
  %v103 = vpack.c.b16 %v89, %v87
  %v104 = vpack.c.b16 %v90, %v88
  %v105 = vpack.c.b16 %v93, %v91
  %v106 = vpack.c.b16 %v94, %v92
  %v107 = vpack.c.b16 %v97, %v95
  %v108 = vpack.c.b16 %v98, %v96
  %v109 = vpack.c.b16 %v101, %v99
  %v110 = vpack.c.b16 %v102, %v100
  %v151 = vunpack.c.l.b16 %v35
  %v152 = vunpack.c.h.b16 %v35
  %v153 = vunpack.c.l.b16 %v36
  %v154 = vunpack.c.h.b16 %v36
  %v155 = vunpack.c.l.b16 %v37
  %v156 = vunpack.c.h.b16 %v37
  %v157 = vunpack.c.l.b16 %v38
  %v158 = vunpack.c.h.b16 %v38
  %v159 = vunpack.c.l.b16 %v39
  %v160 = vunpack.c.h.b16 %v39
  %v161 = vunpack.c.l.b16 %v40
  %v162 = vunpack.c.h.b16 %v40
  %v163 = vunpack.c.l.b16 %v41
  %v164 = vunpack.c.h.b16 %v41
  %v165 = vunpack.c.l.b16 %v42
  %v166 = vunpack.c.h.b16 %v42
  %v167 = vunpack.c.l.b16 %v43
  %v168 = vunpack.c.h.b16 %v43
  %v169 = vunpack.c.l.b16 %v44
  %v170 = vunpack.c.h.b16 %v44
  %v171 = vunpack.c.l.b16 %v45
  %v172 = vunpack.c.h.b16 %v45
  %v173 = vunpack.c.l.b16 %v46
  %v174 = vunpack.c.h.b16 %v46
  %v175 = vunpack.c.l.b16 %v47
  %v176 = vunpack.c.h.b16 %v47
  %v177 = vunpack.c.l.b16 %v48
  %v178 = vunpack.c.h.b16 %v48
  %v179 = vunpack.c.l.b16 %v49
  %v180 = vunpack.c.h.b16 %v49
  %v181 = vunpack.c.l.b16 %v50
  %v182 = vunpack.c.h.b16 %v50
  %v183 = vunpack.c.l.b16 %v51
  %v184 = vunpack.c.h.b16 %v51
  %v185 = vunpack.c.l.b16 %v52
  %v186 = vunpack.c.h.b16 %v52
  %v187 = vunpack.c.l.b16 %v53
  %v188 = vunpack.c.h.b16 %v53
  %v189 = vunpack.c.l.b16 %v54
  %v190 = vunpack.c.h.b16 %v54
  %v191 = vunpack.c.l.b16 %v55
  %v192 = vunpack.c.h.b16 %v55
  %v193 = vunpack.c.l.b16 %v56
  %v194 = vunpack.c.h.b16 %v56
  %v195 = vunpack.c.l.b16 %v57
  %v196 = vunpack.c.h.b16 %v57
  %v197 = vunpack.c.l.b16 %v58
  %v198 = vunpack.c.h.b16 %v58
  %v199 = vunpack.c.l.b16 %v59
  %v200 = vunpack.c.h.b16 %v59
  %v201 = vunpack.c.l.b16 %v60
  %v202 = vunpack.c.h.b16 %v60
  %v203 = vunpack.c.l.b16 %v61
  %v204 = vunpack.c.h.b16 %v61
  %v205 = vunpack.c.l.b16 %v62
  %v206 = vunpack.c.h.b16 %v62
  %v207 = vunpack.c.l.b16 %v63
  %v208 = vunpack.c.h.b16 %v63
  %v209 = vunpack.c.l.b16 %v64
  %v210 = vunpack.c.h.b16 %v64
  %v211 = vunpack.c.l.b16 %v65
  %v212 = vunpack.c.h.b16 %v65
  %v213 = vunpack.c.l.b16 %v66
  %v214 = vunpack.c.h.b16 %v66
  %v215 = vpack.c.b16 %v153, %v151
  %v216 = vpack.c.b16 %v154, %v152
  %v217 = vpack.c.b16 %v157, %v155
  %v218 = vpack.c.b16 %v158, %v156
  %v219 = vpack.c.b16 %v161, %v159
  %v220 = vpack.c.b16 %v162, %v160
  %v221 = vpack.c.b16 %v165, %v163
  %v222 = vpack.c.b16 %v166, %v164
  %v223 = vpack.c.b16 %v169, %v167
  %v224 = vpack.c.b16 %v170, %v168
  %v225 = vpack.c.b16 %v173, %v171
  %v226 = vpack.c.b16 %v174, %v172
  %v227 = vpack.c.b16 %v177, %v175
  %v228 = vpack.c.b16 %v178, %v176
  %v229 = vpack.c.b16 %v181, %v179
  %v230 = vpack.c.b16 %v182, %v180
  %v231 = vpack.c.b16 %v185, %v183
  %v232 = vpack.c.b16 %v186, %v184
  %v233 = vpack.c.b16 %v189, %v187
  %v234 = vpack.c.b16 %v190, %v188
  %v235 = vpack.c.b16 %v193, %v191
  %v236 = vpack.c.b16 %v194, %v192
  %v237 = vpack.c.b16 %v197, %v195
  %v238 = vpack.c.b16 %v198, %v196
  %v239 = vpack.c.b16 %v201, %v199
  %v240 = vpack.c.b16 %v202, %v200
  %v241 = vpack.c.b16 %v205, %v203
  %v242 = vpack.c.b16 %v206, %v204
  %v243 = vpack.c.b16 %v209, %v207
  %v244 = vpack.c.b16 %v210, %v208
  %v245 = vpack.c.b16 %v213, %v211
  %v246 = vpack.c.b16 %v214, %v212
  %279 = vmatprep.subr.bf16.mxu0 %v216
  %280 = vmatpush1.bf16.msra.mxu0 %v215
  %281 = vmatprep.subr.bf16.mxu0 %v218
  %282 = vmatpush1.bf16.msra.mxu0 %v217
  %283 = vmatprep.subr.bf16.mxu0 %v220
  %284 = vmatpush1.bf16.msra.mxu0 %v219
  %285 = vmatprep.subr.bf16.mxu0 %v222
  %286 = vmatpush1.bf16.msra.mxu0 %v221
  %287 = vmatprep.subr.bf16.mxu0 %v224
  %288 = vmatpush1.bf16.msra.mxu0 %v223
  %289 = vmatprep.subr.bf16.mxu0 %v226
  %290 = vmatpush1.bf16.msra.mxu0 %v225
  %291 = vmatprep.subr.bf16.mxu0 %v228
  %292 = vmatpush1.bf16.msra.mxu0 %v227
  %293 = vmatprep.subr.bf16.mxu0 %v230
  %294 = vmatpush1.bf16.msra.mxu0 %v229
  %295 = vmatprep.subr.bf16.mxu0 %v232
  %296 = vmatpush1.bf16.msra.mxu0 %v231
  %297 = vmatprep.subr.bf16.mxu0 %v234
  %298 = vmatpush1.bf16.msra.mxu0 %v233
  %299 = vmatprep.subr.bf16.mxu0 %v236
  %300 = vmatpush1.bf16.msra.mxu0 %v235
  %301 = vmatprep.subr.bf16.mxu0 %v238
  %302 = vmatpush1.bf16.msra.mxu0 %v237
  %303 = vmatprep.subr.bf16.mxu0 %v240
  %304 = vmatpush1.bf16.msra.mxu0 %v239
  %305 = vmatprep.subr.bf16.mxu0 %v242
  %306 = vmatpush1.bf16.msra.mxu0 %v241
  %307 = vmatprep.subr.bf16.mxu0 %v244
  %308 = vmatpush1.bf16.msra.mxu0 %v243
  %309 = vmatprep.subr.bf16.mxu0 %v246
  %310 = vmatpush1.bf16.msra.mxu0 %v245
  %311 = vmatprep.mubr.bf16.mxu0 %v104
  %312 = vmatmul.mubr.bf16.gmra.mrb[0].mxu0 %v103
  %v313 = vpop.f32.mrb[0].mxu0
  %v314 = vadd.f32 %v72, %v313
  %v315 = vpop.f32.mrb[0].mxu0
  %v316 = vadd.f32 %v76, %v315
  %v317 = vpop.f32.mrb[0].mxu0
  %v318 = vadd.f32 %v72, %v317
  %v319 = vpop.f32.mrb[0].mxu0
  %v320 = vadd.f32 %v76, %v319
  %321 = vmatprep.mubr.bf16.mxu0 %v106
  %322 = vmatmul.mubr.bf16.gmra.mrb[0].mxu0 %v105
  %v323 = vpop.f32.mrb[0].mxu0
  %v324 = vadd.f32 %v72, %v323
  %v325 = vpop.f32.mrb[0].mxu0
  %v326 = vadd.f32 %v76, %v325
  %v327 = vpop.f32.mrb[0].mxu0
  %v328 = vadd.f32 %v72, %v327
  %v329 = vpop.f32.mrb[0].mxu0
  %v330 = vadd.f32 %v76, %v329
  %331 = vmatprep.mubr.bf16.mxu0 %v108
  %332 = vmatmul.mubr.bf16.gmra.mrb[0].mxu0 %v107
  %v333 = vpop.f32.mrb[0].mxu0
  %v334 = vadd.f32 %v72, %v333
  %v335 = vpop.f32.mrb[0].mxu0
  %v336 = vadd.f32 %v76, %v335
  %v337 = vpop.f32.mrb[0].mxu0
  %v338 = vadd.f32 %v72, %v337
  %v339 = vpop.f32.mrb[0].mxu0
  %v340 = vadd.f32 %v76, %v339
  %341 = vmatprep.mubr.bf16.mxu0 %v110
  %342 = vmatmul.mubr.bf16.gmra.mrb[0].mxu0 %v109
  %v343 = vpop.f32.mrb[0].mxu0
  %v344 = vadd.f32 %v72, %v343
  %v345 = vpop.f32.mrb[0].mxu0
  %v346 = vadd.f32 %v76, %v345
  %v347 = vpop.f32.mrb[0].mxu0
  %v348 = vadd.f32 %v72, %v347
  %v349 = vpop.f32.mrb[0].mxu0
  %v350 = vadd.f32 %v76, %v349
  %351 = vdwg.mxu0
  %v352 = vmax.f32 %v314, 0.0
  %v353 = vmax.f32 %v316, 0.0
  %v354 = vmax.f32 %v318, 0.0
  %v355 = vmax.f32 %v320, 0.0
  %v356 = vmax.f32 %v324, 0.0
  %v357 = vmax.f32 %v326, 0.0
  %v358 = vmax.f32 %v328, 0.0
  %v359 = vmax.f32 %v330, 0.0
  %v360 = vmax.f32 %v334, 0.0
  %v361 = vmax.f32 %v336, 0.0
  %v362 = vmax.f32 %v338, 0.0
  %v363 = vmax.f32 %v340, 0.0
  %v364 = vmax.f32 %v344, 0.0
  %v365 = vmax.f32 %v346, 0.0
  %v366 = vmax.f32 %v348, 0.0
  %v367 = vmax.f32 %v350, 0.0
  %v368 = vld [vmem:[%s3 + $0x8] sm:$0xf]
  %v369 = vld [vmem:[%s3 + $0x18] sm:$0xf]
  %v370 = vld [vmem:[%s3 + $0x28] sm:$0xf]
  %v371 = vld [vmem:[%s3 + $0x38] sm:$0xf]
  %v372 = vld [vmem:[%s3 + $0x48] sm:$0xf]
  %v373 = vld [vmem:[%s3 + $0x58] sm:$0xf]
  %v374 = vld [vmem:[%s3 + $0x68] sm:$0xf]
  %v375 = vld [vmem:[%s3 + $0x78] sm:$0xf]
  %v376 = vld [vmem:[%s3 + $0x88] sm:$0xf]
  %v377 = vld [vmem:[%s3 + $0x98] sm:$0xf]
  %v378 = vld [vmem:[%s3 + $0xa8] sm:$0xf]
  %v379 = vld [vmem:[%s3 + $0xb8] sm:$0xf]
  %v380 = vld [vmem:[%s3 + $0xc8] sm:$0xf]
  %v381 = vld [vmem:[%s3 + $0xd8] sm:$0xf]
  %v382 = vld [vmem:[%s3 + $0xe8] sm:$0xf]
  %v383 = vld [vmem:[%s3 + $0xf8] sm:$0xf]
  %v384 = vld [vmem:[%s3 + $0x108] sm:$0xf]
  %v385 = vld [vmem:[%s3 + $0x118] sm:$0xf]
  %v386 = vld [vmem:[%s3 + $0x128] sm:$0xf]
  %v387 = vld [vmem:[%s3 + $0x138] sm:$0xf]
  %v388 = vld [vmem:[%s3 + $0x148] sm:$0xf]
  %v389 = vld [vmem:[%s3 + $0x158] sm:$0xf]
  %v390 = vld [vmem:[%s3 + $0x168] sm:$0xf]
  %v391 = vld [vmem:[%s3 + $0x178] sm:$0xf]
  %v392 = vld [vmem:[%s3 + $0x188] sm:$0xf]
  %v393 = vld [vmem:[%s3 + $0x198] sm:$0xf]
  %v394 = vld [vmem:[%s3 + $0x1a8] sm:$0xf]
  %v395 = vld [vmem:[%s3 + $0x1b8] sm:$0xf]
  %v396 = vld [vmem:[%s3 + $0x1c8] sm:$0xf]
  %v397 = vld [vmem:[%s3 + $0x1d8] sm:$0xf]
  %v398 = vld [vmem:[%s3 + $0x1e8] sm:$0xf]
  %v399 = vld [vmem:[%s3 + $0x1f8] sm:$0xf]
  %v400 = vpack.c.bf16 %v354, %v352
  %v401 = vpack.c.bf16 %v355, %v353
  %v402 = vpack.c.bf16 %v358, %v356
  %v403 = vpack.c.bf16 %v359, %v357
  %v404 = vpack.c.bf16 %v362, %v360
  %v405 = vpack.c.bf16 %v363, %v361
  %v406 = vpack.c.bf16 %v366, %v364
  %v407 = vpack.c.bf16 %v367, %v365
  %v408 = vld [vmem:[%s6 + $0x2] sm:$0x1]
  %v410 = vlaneseq
  %v411 = vshrl.u32 %v410, 7
  %v412 = vsub.s32 0, %v411
  %v413 = vrot.slane %v408, %v412
  %v447 = vunpack.c.l.b16 %v368
  %v448 = vunpack.c.l.b16 %v369
  %v449 = vunpack.c.l.b16 %v370
  %v450 = vunpack.c.l.b16 %v371
  %v451 = vunpack.c.l.b16 %v372
  %v452 = vunpack.c.l.b16 %v373
  %v453 = vunpack.c.l.b16 %v374
  %v454 = vunpack.c.l.b16 %v375
  %v455 = vunpack.c.l.b16 %v376
  %v456 = vunpack.c.l.b16 %v377
  %v457 = vunpack.c.l.b16 %v378
  %v458 = vunpack.c.l.b16 %v379
  %v459 = vunpack.c.l.b16 %v380
  %v460 = vunpack.c.l.b16 %v381
  %v461 = vunpack.c.l.b16 %v382
  %v462 = vunpack.c.l.b16 %v383
  %v463 = vunpack.c.l.b16 %v384
  %v464 = vunpack.c.l.b16 %v385
  %v465 = vunpack.c.l.b16 %v386
  %v466 = vunpack.c.l.b16 %v387
  %v467 = vunpack.c.l.b16 %v388
  %v468 = vunpack.c.l.b16 %v389
  %v469 = vunpack.c.l.b16 %v390
  %v470 = vunpack.c.l.b16 %v391
  %v471 = vunpack.c.l.b16 %v392
  %v472 = vunpack.c.l.b16 %v393
  %v473 = vunpack.c.l.b16 %v394
  %v474 = vunpack.c.l.b16 %v395
  %v475 = vunpack.c.l.b16 %v396
  %v476 = vunpack.c.l.b16 %v397
  %v477 = vunpack.c.l.b16 %v398
  %v478 = vunpack.c.l.b16 %v399
  %v479 = vpack.c.b16 %v448, %v447
  %v480 = vpack.c.b16 %v450, %v449
  %v481 = vpack.c.b16 %v452, %v451
  %v482 = vpack.c.b16 %v454, %v453
  %v483 = vpack.c.b16 %v456, %v455
  %v484 = vpack.c.b16 %v458, %v457
  %v485 = vpack.c.b16 %v460, %v459
  %v486 = vpack.c.b16 %v462, %v461
  %v487 = vpack.c.b16 %v464, %v463
  %v488 = vpack.c.b16 %v466, %v465
  %v489 = vpack.c.b16 %v468, %v467
  %v490 = vpack.c.b16 %v470, %v469
  %v491 = vpack.c.b16 %v472, %v471
  %v492 = vpack.c.b16 %v474, %v473
  %v493 = vpack.c.b16 %v476, %v475
  %v494 = vpack.c.b16 %v478, %v477
  %511 = vmatprep.subr.bf16.mxu0 0
  %512 = vmatpush1.bf16.msra.mxu0 %v479
  %513 = vmatprep.subr.bf16.mxu0 0
  %514 = vmatpush1.bf16.msra.mxu0 %v480
  %515 = vmatprep.subr.bf16.mxu0 0
  %516 = vmatpush1.bf16.msra.mxu0 %v481
  %517 = vmatprep.subr.bf16.mxu0 0
  %518 = vmatpush1.bf16.msra.mxu0 %v482
  %519 = vmatprep.subr.bf16.mxu0 0
  %520 = vmatpush1.bf16.msra.mxu0 %v483
  %521 = vmatprep.subr.bf16.mxu0 0
  %522 = vmatpush1.bf16.msra.mxu0 %v484
  %523 = vmatprep.subr.bf16.mxu0 0
  %524 = vmatpush1.bf16.msra.mxu0 %v485
  %525 = vmatprep.subr.bf16.mxu0 0
  %526 = vmatpush1.bf16.msra.mxu0 %v486
  %527 = vmatprep.subr.bf16.mxu0 0
  %528 = vmatpush1.bf16.msra.mxu0 %v487
  %529 = vmatprep.subr.bf16.mxu0 0
  %530 = vmatpush1.bf16.msra.mxu0 %v488
  %531 = vmatprep.subr.bf16.mxu0 0
  %532 = vmatpush1.bf16.msra.mxu0 %v489
  %533 = vmatprep.subr.bf16.mxu0 0
  %534 = vmatpush1.bf16.msra.mxu0 %v490
  %535 = vmatprep.subr.bf16.mxu0 0
  %536 = vmatpush1.bf16.msra.mxu0 %v491
  %537 = vmatprep.subr.bf16.mxu0 0
  %538 = vmatpush1.bf16.msra.mxu0 %v492
  %539 = vmatprep.subr.bf16.mxu0 0
  %540 = vmatpush1.bf16.msra.mxu0 %v493
  %541 = vmatprep.subr.bf16.mxu0 0
  %542 = vmatpush1.bf16.msra.mxu0 %v494
  %543 = vmatprep.mubr.bf16.mxu0 %v401
  %544 = vmatmul.mubr.bf16.gmra.mrb[0].mxu0 %v400
  %v545 = vpop.f32.mrb[0].mxu0
  %v546 = vadd.f32 %v413, %v545
  %v547 = vpop.f32.mrb[0].mxu0
  %v548 = vpop.f32.mrb[0].mxu0
  %v549 = vadd.f32 %v413, %v548
  %v550 = vpop.f32.mrb[0].mxu0
  %551 = vmatprep.mubr.bf16.mxu0 %v403
  %552 = vmatmul.mubr.bf16.gmra.mrb[0].mxu0 %v402
  %v553 = vpop.f32.mrb[0].mxu0
  %v554 = vadd.f32 %v413, %v553
  %v555 = vpop.f32.mrb[0].mxu0
  %v556 = vpop.f32.mrb[0].mxu0
  %v557 = vadd.f32 %v413, %v556
  %v558 = vpop.f32.mrb[0].mxu0
  %559 = vmatprep.mubr.bf16.mxu0 %v405
  %560 = vmatmul.mubr.bf16.gmra.mrb[0].mxu0 %v404
  %v561 = vpop.f32.mrb[0].mxu0
  %v562 = vadd.f32 %v413, %v561
  %v563 = vpop.f32.mrb[0].mxu0
  %v564 = vpop.f32.mrb[0].mxu0
  %v565 = vadd.f32 %v413, %v564
  %v566 = vpop.f32.mrb[0].mxu0
  %567 = vmatprep.mubr.bf16.mxu0 %v407
  %568 = vmatmul.mubr.bf16.gmra.mrb[0].mxu0 %v406
  %v569 = vpop.f32.mrb[0].mxu0
  %v570 = vadd.f32 %v413, %v569
  %v571 = vpop.f32.mrb[0].mxu0
  %v572 = vpop.f32.mrb[0].mxu0
  %v573 = vadd.f32 %v413, %v572
  %v574 = vpop.f32.mrb[0].mxu0
  %575 = vdwg.mxu0
  %v576 = vmax.f32 %v546, 0.0
  %v577 = vmax.f32 %v549, 0.0
  %v578 = vmax.f32 %v554, 0.0
  %v579 = vmax.f32 %v557, 0.0
  %v580 = vmax.f32 %v562, 0.0
  %v581 = vmax.f32 %v565, 0.0
  %v582 = vmax.f32 %v570, 0.0
  %v583 = vmax.f32 %v573, 0.0
  %v584 = vld [vmem:[%s3 + $0xc] sm:$0xf]
  %v585 = vld [vmem:[%s3 + $0x1c] sm:$0xf]
  %v586 = vld [vmem:[%s3 + $0x2c] sm:$0xf]
  %v587 = vld [vmem:[%s3 + $0x3c] sm:$0xf]
  %v588 = vld [vmem:[%s3 + $0x4c] sm:$0xf]
  %v589 = vld [vmem:[%s3 + $0x5c] sm:$0xf]
  %v590 = vld [vmem:[%s3 + $0x6c] sm:$0xf]
  %v591 = vld [vmem:[%s3 + $0x7c] sm:$0xf]
  %v592 = vld [vmem:[%s3 + $0x8c] sm:$0xf]
  %v593 = vld [vmem:[%s3 + $0x9c] sm:$0xf]
  %v594 = vld [vmem:[%s3 + $0xac] sm:$0xf]
  %v595 = vld [vmem:[%s3 + $0xbc] sm:$0xf]
  %v596 = vld [vmem:[%s3 + $0xcc] sm:$0xf]
  %v597 = vld [vmem:[%s3 + $0xdc] sm:$0xf]
  %v598 = vld [vmem:[%s3 + $0xec] sm:$0xf]
  %v599 = vld [vmem:[%s3 + $0xfc] sm:$0xf]
  %v600 = vpack.c.bf16 %v577, %v576
  %v601 = vpack.c.bf16 %v579, %v578
  %v602 = vpack.c.bf16 %v581, %v580
  %v603 = vpack.c.bf16 %v583, %v582
  %v604 = vld [vmem:[%s6 + $0x3] sm:$0x1]
  %v606 = vlaneseq
  %v607 = vshrl.u32 %v606, 7
  %v608 = vsub.s32 0, %v607
  %v609 = vrot.slane %v604, %v608
  %v627 = vunpack.c.l.b16 %v584
  %v628 = vunpack.c.l.b16 %v585
  %v629 = vunpack.c.l.b16 %v586
  %v630 = vunpack.c.l.b16 %v587
  %v631 = vunpack.c.l.b16 %v588
  %v632 = vunpack.c.l.b16 %v589
  %v633 = vunpack.c.l.b16 %v590
  %v634 = vunpack.c.l.b16 %v591
  %v635 = vunpack.c.l.b16 %v592
  %v636 = vunpack.c.l.b16 %v593
  %v637 = vunpack.c.l.b16 %v594
  %v638 = vunpack.c.l.b16 %v595
  %v639 = vunpack.c.l.b16 %v596
  %v640 = vunpack.c.l.b16 %v597
  %v641 = vunpack.c.l.b16 %v598
  %v642 = vunpack.c.l.b16 %v599
  %v643 = vpack.c.b16 %v628, %v627
  %v644 = vpack.c.b16 %v630, %v629
  %v645 = vpack.c.b16 %v632, %v631
  %v646 = vpack.c.b16 %v634, %v633
  %v647 = vpack.c.b16 %v636, %v635
  %v648 = vpack.c.b16 %v638, %v637
  %v649 = vpack.c.b16 %v640, %v639
  %v650 = vpack.c.b16 %v642, %v641
  %659 = vmatprep.subr.bf16.mxu0 0
  %660 = vmatpush1.bf16.msra.mxu0 %v643
  %661 = vmatprep.subr.bf16.mxu0 0
  %662 = vmatpush1.bf16.msra.mxu0 %v644
  %663 = vmatprep.subr.bf16.mxu0 0
  %664 = vmatpush1.bf16.msra.mxu0 %v645
  %665 = vmatprep.subr.bf16.mxu0 0
  %666 = vmatpush1.bf16.msra.mxu0 %v646
  %667 = vmatprep.subr.bf16.mxu0 0
  %668 = vmatpush1.bf16.msra.mxu0 %v647
  %669 = vmatprep.subr.bf16.mxu0 0
  %670 = vmatpush1.bf16.msra.mxu0 %v648
  %671 = vmatprep.subr.bf16.mxu0 0
  %672 = vmatpush1.bf16.msra.mxu0 %v649
  %673 = vmatprep.subr.bf16.mxu0 0
  %674 = vmatpush1.bf16.msra.mxu0 %v650
  %675 = vmatprep.subr.bf16.mxu0 0
  %676 = vmatpush1.bf16.msra.mxu0 0
  %677 = vmatprep.subr.bf16.mxu0 0
  %678 = vmatpush1.bf16.msra.mxu0 0
  %679 = vmatprep.subr.bf16.mxu0 0
  %680 = vmatpush1.bf16.msra.mxu0 0
  %681 = vmatprep.subr.bf16.mxu0 0
  %682 = vmatpush1.bf16.msra.mxu0 0
  %683 = vmatprep.subr.bf16.mxu0 0
  %684 = vmatpush1.bf16.msra.mxu0 0
  %685 = vmatprep.subr.bf16.mxu0 0
  %686 = vmatpush1.bf16.msra.mxu0 0
  %687 = vmatprep.subr.bf16.mxu0 0
  %688 = vmatpush1.bf16.msra.mxu0 0
  %689 = vmatprep.subr.bf16.mxu0 0
  %690 = vmatpush1.bf16.msra.mxu0 0
  %691 = vmatprep.mubr.bf16.mxu0 0
  %692 = vmatmul.mubr.bf16.gmra.mrb[0].mxu0 %v600
  %v693 = vpop.f32.mrb[0].mxu0
  %v694 = vadd.f32 %v609, %v693
  %v695 = vpop.f32.mrb[0].mxu0
  %v696 = vpop.f32.mrb[0].mxu0
  %v697 = vadd.f32 %v609, %v696
  %v698 = vpop.f32.mrb[0].mxu0
  %699 = vmatprep.mubr.bf16.mxu0 0
  %700 = vmatmul.mubr.bf16.gmra.mrb[0].mxu0 %v601
  %v701 = vpop.f32.mrb[0].mxu0
  %v702 = vadd.f32 %v609, %v701
  %v703 = vpop.f32.mrb[0].mxu0
  %v704 = vpop.f32.mrb[0].mxu0
  %v705 = vadd.f32 %v609, %v704
  %v706 = vpop.f32.mrb[0].mxu0
  %707 = vmatprep.mubr.bf16.mxu0 0
  %708 = vmatmul.mubr.bf16.gmra.mrb[0].mxu0 %v602
  %v709 = vpop.f32.mrb[0].mxu0
  %v710 = vadd.f32 %v609, %v709
  %v711 = vpop.f32.mrb[0].mxu0
  %v712 = vpop.f32.mrb[0].mxu0
  %v713 = vadd.f32 %v609, %v712
  %v714 = vpop.f32.mrb[0].mxu0
  %715 = vmatprep.mubr.bf16.mxu0 0
  %716 = vmatmul.mubr.bf16.gmra.mrb[0].mxu0 %v603
  %v717 = vpop.f32.mrb[0].mxu0
  %v718 = vadd.f32 %v609, %v717
  %v719 = vpop.f32.mrb[0].mxu0
  %v720 = vpop.f32.mrb[0].mxu0
  %v721 = vadd.f32 %v609, %v720
  %v722 = vpop.f32.mrb[0].mxu0
  %723 = vdwg.mxu0
  %vm724 = vcmask 523264
  %v725 = vsel %vm724, %v694, 0.0
  %726 = vadd.xlane.f32.xlu0 %v725
  %v727 = vpop.xlane.xlu0 %726
  %v728 = vsel %vm724, %v697, 0.0
  %729 = vadd.xlane.f32.xlu0 %v728
  %v730 = vpop.xlane.xlu0 %729
  %v731 = vsel %vm724, %v702, 0.0
  %732 = vadd.xlane.f32.xlu0 %v731
  %v733 = vpop.xlane.xlu0 %732
  %v734 = vsel %vm724, %v705, 0.0
  %735 = vadd.xlane.f32.xlu0 %v734
  %v736 = vpop.xlane.xlu0 %735
  %v737 = vsel %vm724, %v710, 0.0
  %738 = vadd.xlane.f32.xlu0 %v737
  %v739 = vpop.xlane.xlu0 %738
  %v740 = vsel %vm724, %v713, 0.0
  %741 = vadd.xlane.f32.xlu0 %v740
  %v742 = vpop.xlane.xlu0 %741
  %v743 = vsel %vm724, %v718, 0.0
  %744 = vadd.xlane.f32.xlu0 %v743
  %v745 = vpop.xlane.xlu0 %744
  %v746 = vsel %vm724, %v721, 0.0
  %747 = vadd.xlane.f32.xlu0 %v746
  %v748 = vpop.xlane.xlu0 %747
  %v749 = vrcp.pop 64.0
  %v750 = vmul.f32 %v727, %v749
  %v751 = vmul.f32 %v730, %v749
  %v752 = vmul.f32 %v733, %v749
  %v753 = vmul.f32 %v736, %v749
  %v754 = vmul.f32 %v739, %v749
  %v755 = vmul.f32 %v742, %v749
  %v756 = vmul.f32 %v745, %v749
  %v757 = vmul.f32 %v748, %v749
  %v758 = vsub.f32 %v694, %v750
  %v759 = vsub.f32 %v697, %v751
  %v760 = vsub.f32 %v702, %v752
  %v761 = vsub.f32 %v705, %v753
  %v762 = vsub.f32 %v710, %v754
  %v763 = vsub.f32 %v713, %v755
  %v764 = vsub.f32 %v718, %v756
  %v765 = vsub.f32 %v721, %v757
  %v766 = vmul.f32 %v758, %v758
  %v767 = vmul.f32 %v759, %v759
  %v768 = vmul.f32 %v760, %v760
  %v769 = vmul.f32 %v761, %v761
  %v770 = vmul.f32 %v762, %v762
  %v771 = vmul.f32 %v763, %v763
  %v772 = vmul.f32 %v764, %v764
  %v773 = vmul.f32 %v765, %v765
  %v774 = vsel %vm724, %v766, 0.0
  %775 = vadd.xlane.f32.xlu0 %v774
  %v776 = vpop.xlane.xlu0 %775
  %v777 = vsel %vm724, %v767, 0.0
  %778 = vadd.xlane.f32.xlu0 %v777
  %v779 = vpop.xlane.xlu0 %778
  %v780 = vsel %vm724, %v768, 0.0
  %781 = vadd.xlane.f32.xlu0 %v780
  %v782 = vpop.xlane.xlu0 %781
  %v783 = vsel %vm724, %v769, 0.0
  %784 = vadd.xlane.f32.xlu0 %v783
  %v785 = vpop.xlane.xlu0 %784
  %v786 = vsel %vm724, %v770, 0.0
  %787 = vadd.xlane.f32.xlu0 %v786
  %v788 = vpop.xlane.xlu0 %787
  %v789 = vsel %vm724, %v771, 0.0
  %790 = vadd.xlane.f32.xlu0 %v789
  %v791 = vpop.xlane.xlu0 %790
  %v792 = vsel %vm724, %v772, 0.0
  %793 = vadd.xlane.f32.xlu0 %v792
  %v794 = vpop.xlane.xlu0 %793
  %v795 = vsel %vm724, %v773, 0.0
  %796 = vadd.xlane.f32.xlu0 %v795
  %v797 = vpop.xlane.xlu0 %796
  %v798 = vmul.f32 %v776, %v749
  %v799 = vmul.f32 %v779, %v749
  %v800 = vmul.f32 %v782, %v749
  %v801 = vmul.f32 %v785, %v749
  %v802 = vmul.f32 %v788, %v749
  %v803 = vmul.f32 %v791, %v749
  %v804 = vmul.f32 %v794, %v749
  %v805 = vmul.f32 %v797, %v749
  %v806 = vadd.f32 %v798, 1e-05
  %v807 = vadd.f32 %v799, 1e-05
  %v808 = vadd.f32 %v800, 1e-05
  %v809 = vadd.f32 %v801, 1e-05
  %v810 = vadd.f32 %v802, 1e-05
  %v811 = vadd.f32 %v803, 1e-05
  %v812 = vadd.f32 %v804, 1e-05
  %v813 = vadd.f32 %v805, 1e-05
  %v814 = vrsqrt.pop %v806
  %v815 = vrsqrt.pop %v807
  %v816 = vrsqrt.pop %v808
  %v817 = vrsqrt.pop %v809
  %v818 = vrsqrt.pop %v810
  %v819 = vrsqrt.pop %v811
  %v820 = vrsqrt.pop %v812
  %v821 = vrsqrt.pop %v813
  %v822 = vmul.f32 %v758, %v814
  %v823 = vmul.f32 %v759, %v815
  %v824 = vmul.f32 %v760, %v816
  %v825 = vmul.f32 %v761, %v817
  %v826 = vmul.f32 %v762, %v818
  %v827 = vmul.f32 %v763, %v819
  %v828 = vmul.f32 %v764, %v820
  %v829 = vmul.f32 %v765, %v821
  %v830 = vld [vmem:[%s6 + $0x4] sm:$0x1]
  %v832 = vlaneseq
  %v833 = vshrl.u32 %v832, 7
  %v834 = vsub.s32 0, %v833
  %v835 = vrot.slane %v830, %v834
  %v837 = vmul.f32 %v822, %v835
  %v838 = vmul.f32 %v823, %v835
  %v839 = vmul.f32 %v824, %v835
  %v840 = vmul.f32 %v825, %v835
  %v841 = vmul.f32 %v826, %v835
  %v842 = vmul.f32 %v827, %v835
  %v843 = vmul.f32 %v828, %v835
  %v844 = vmul.f32 %v829, %v835
  %v845 = vld [vmem:[%s6 + $0x5] sm:$0x1]
  %v847 = vlaneseq
  %v848 = vshrl.u32 %v847, 7
  %v849 = vsub.s32 0, %v848
  %v850 = vrot.slane %v845, %v849
  %v852 = vadd.f32 %v837, %v850
  %v853 = vadd.f32 %v838, %v850
  %v854 = vadd.f32 %v839, %v850
  %v855 = vadd.f32 %v840, %v850
  %v856 = vadd.f32 %v841, %v850
  %v857 = vadd.f32 %v842, %v850
  %v858 = vadd.f32 %v843, %v850
  %v859 = vadd.f32 %v844, %v850
  %v860 = vld [vmem:[%s1] sm:$0xff]
  %v861 = vld [vmem:[%s1 + $0x8] sm:$0xff]
  %v862 = vld [vmem:[%s1 + $0x10] sm:$0xff]
  %v863 = vld [vmem:[%s1 + $0x18] sm:$0xff]
  %v864 = vld [vmem:[%s1 + $0x20] sm:$0xff]
  %v865 = vld [vmem:[%s1 + $0x28] sm:$0xff]
  %v866 = vld [vmem:[%s1 + $0x30] sm:$0xff]
  %v867 = vld [vmem:[%s1 + $0x38] sm:$0xff]
  %876 = vrot.lane.b32.xlu0 %v852, 22
  %v877 = vpop.permute.xlu0 %876
  %878 = vrot.lane.b32.xlu0 %v853, 22
  %v879 = vpop.permute.xlu0 %878
  %880 = vrot.lane.b32.xlu0 %v854, 22
  %v881 = vpop.permute.xlu0 %880
  %882 = vrot.lane.b32.xlu0 %v855, 22
  %v883 = vpop.permute.xlu0 %882
  %884 = vrot.lane.b32.xlu0 %v856, 22
  %v885 = vpop.permute.xlu0 %884
  %886 = vrot.lane.b32.xlu0 %v857, 22
  %v887 = vpop.permute.xlu0 %886
  %888 = vrot.lane.b32.xlu0 %v858, 22
  %v889 = vpop.permute.xlu0 %888
  %890 = vrot.lane.b32.xlu0 %v859, 22
  %v891 = vpop.permute.xlu0 %890
  %vm900 = vcmask 179200
  %v901 = vsel %vm900, %v860, %v877
  %v902 = vsel %vm900, %v861, %v879
  %v903 = vsel %vm900, %v862, %v881
  %v904 = vsel %vm900, %v863, %v883
  %v905 = vsel %vm900, %v864, %v885
  %v906 = vsel %vm900, %v865, %v887
  %v907 = vsel %vm900, %v866, %v889
  %v908 = vsel %vm900, %v867, %v891
  %v909 = vld [vmem:[%s4] sm:$0xf]
  %v910 = vld [vmem:[%s4 + $0xc] sm:$0xf]
  %v911 = vld [vmem:[%s4 + $0x18] sm:$0xf]
  %v912 = vld [vmem:[%s4 + $0x24] sm:$0xf]
  %v913 = vld [vmem:[%s4 + $0x30] sm:$0xf]
  %v914 = vld [vmem:[%s4 + $0x3c] sm:$0xf]
  %v915 = vld [vmem:[%s4 + $0x48] sm:$0xf]
  %v916 = vld [vmem:[%s4 + $0x54] sm:$0xf]
  %v917 = vld [vmem:[%s4 + $0x60] sm:$0xf]
  %v918 = vld [vmem:[%s4 + $0x6c] sm:$0xf]
  %v919 = vld [vmem:[%s4 + $0x78] sm:$0x7]
  %v920 = vpack.c.bf16 %v902, %v901
  %v921 = vpack.c.bf16 %v904, %v903
  %v922 = vpack.c.bf16 %v906, %v905
  %v923 = vpack.c.bf16 %v908, %v907
  %v924 = vld [vmem:[%s6 + $0x6] sm:$0x1]
  %v926 = vlaneseq
  %v927 = vshrl.u32 %v926, 7
  %v928 = vsub.s32 0, %v927
  %v929 = vrot.slane %v924, %v928
  %v942 = vunpack.c.l.b16 %v909
  %v943 = vunpack.c.l.b16 %v910
  %v944 = vunpack.c.l.b16 %v911
  %v945 = vunpack.c.l.b16 %v912
  %v946 = vunpack.c.l.b16 %v913
  %v947 = vunpack.c.l.b16 %v914
  %v948 = vunpack.c.l.b16 %v915
  %v949 = vunpack.c.l.b16 %v916
  %v950 = vunpack.c.l.b16 %v917
  %v951 = vunpack.c.l.b16 %v918
  %v952 = vunpack.c.l.b16 %v919
  %v953 = vpack.c.b16 %v943, %v942
  %v954 = vpack.c.b16 %v945, %v944
  %v955 = vpack.c.b16 %v947, %v946
  %v956 = vpack.c.b16 %v949, %v948
  %v957 = vpack.c.b16 %v951, %v950
  %v958 = vpack.c.b16 %v952, %v952
  %vm964 = vcmask 703488
  %v966 = vsel %vm964, %v920, 0
  %v969 = vsel %vm964, %v921, 0
  %v972 = vsel %vm964, %v922, 0
  %v975 = vsel %vm964, %v923, 0
  %vm977 = vcmask 1042432
  %v979 = vsel %vm977, %v958, 0
  %981 = vmatprep.subr.bf16.mxu0 0
  %982 = vmatpush1.bf16.msra.mxu0 %v953
  %983 = vmatprep.subr.bf16.mxu0 0
  %984 = vmatpush1.bf16.msra.mxu0 %v954
  %985 = vmatprep.subr.bf16.mxu0 0
  %986 = vmatpush1.bf16.msra.mxu0 %v955
  %987 = vmatprep.subr.bf16.mxu0 0
  %988 = vmatpush1.bf16.msra.mxu0 %v956
  %989 = vmatprep.subr.bf16.mxu0 0
  %990 = vmatpush1.bf16.msra.mxu0 %v957
  %991 = vmatprep.subr.bf16.mxu0 0
  %992 = vmatpush1.bf16.msra.mxu0 %v979
  %993 = vmatprep.subr.bf16.mxu0 0
  %994 = vmatpush1.bf16.msra.mxu0 0
  %995 = vmatprep.subr.bf16.mxu0 0
  %996 = vmatpush1.bf16.msra.mxu0 0
  %997 = vmatprep.subr.bf16.mxu0 0
  %998 = vmatpush1.bf16.msra.mxu0 0
  %999 = vmatprep.subr.bf16.mxu0 0
  %1000 = vmatpush1.bf16.msra.mxu0 0
  %1001 = vmatprep.subr.bf16.mxu0 0
  %1002 = vmatpush1.bf16.msra.mxu0 0
  %1003 = vmatprep.subr.bf16.mxu0 0
  %1004 = vmatpush1.bf16.msra.mxu0 0
  %1005 = vmatprep.subr.bf16.mxu0 0
  %1006 = vmatpush1.bf16.msra.mxu0 0
  %1007 = vmatprep.subr.bf16.mxu0 0
  %1008 = vmatpush1.bf16.msra.mxu0 0
  %1009 = vmatprep.subr.bf16.mxu0 0
  %1010 = vmatpush1.bf16.msra.mxu0 0
  %1011 = vmatprep.subr.bf16.mxu0 0
  %1012 = vmatpush1.bf16.msra.mxu0 0
  %1013 = vmatprep.mubr.bf16.mxu0 0
  %1014 = vmatmul.mubr.bf16.gmra.mrb[0].mxu0 %v966
  %v1015 = vpop.f32.mrb[0].mxu0
  %v1016 = vadd.f32 %v929, %v1015
  %v1017 = vpop.f32.mrb[0].mxu0
  %v1018 = vpop.f32.mrb[0].mxu0
  %v1019 = vadd.f32 %v929, %v1018
  %v1020 = vpop.f32.mrb[0].mxu0
  %1021 = vmatprep.mubr.bf16.mxu0 0
  %1022 = vmatmul.mubr.bf16.gmra.mrb[0].mxu0 %v969
  %v1023 = vpop.f32.mrb[0].mxu0
  %v1024 = vadd.f32 %v929, %v1023
  %v1025 = vpop.f32.mrb[0].mxu0
  %v1026 = vpop.f32.mrb[0].mxu0
  %v1027 = vadd.f32 %v929, %v1026
  %v1028 = vpop.f32.mrb[0].mxu0
  %1029 = vmatprep.mubr.bf16.mxu0 0
  %1030 = vmatmul.mubr.bf16.gmra.mrb[0].mxu0 %v972
  %v1031 = vpop.f32.mrb[0].mxu0
  %v1032 = vadd.f32 %v929, %v1031
  %v1033 = vpop.f32.mrb[0].mxu0
  %v1034 = vpop.f32.mrb[0].mxu0
  %v1035 = vadd.f32 %v929, %v1034
  %v1036 = vpop.f32.mrb[0].mxu0
  %1037 = vmatprep.mubr.bf16.mxu0 0
  %1038 = vmatmul.mubr.bf16.gmra.mrb[0].mxu0 %v975
  %v1039 = vpop.f32.mrb[0].mxu0
  %v1040 = vadd.f32 %v929, %v1039
  %v1041 = vpop.f32.mrb[0].mxu0
  %v1042 = vpop.f32.mrb[0].mxu0
  %v1043 = vadd.f32 %v929, %v1042
  %v1044 = vpop.f32.mrb[0].mxu0
  %1045 = vdwg.mxu0
  %v1046 = vmax.f32 %v1016, 0.0
  %v1047 = vmax.f32 %v1019, 0.0
  %v1048 = vmax.f32 %v1024, 0.0
  %v1049 = vmax.f32 %v1027, 0.0
  %v1050 = vmax.f32 %v1032, 0.0
  %v1051 = vmax.f32 %v1035, 0.0
  %v1052 = vmax.f32 %v1040, 0.0
  %v1053 = vmax.f32 %v1043, 0.0
  %v1054 = vld [vmem:[%s4 + $0x4] sm:$0xf]
  %v1055 = vld [vmem:[%s4 + $0x10] sm:$0xf]
  %v1056 = vld [vmem:[%s4 + $0x1c] sm:$0xf]
  %v1057 = vld [vmem:[%s4 + $0x28] sm:$0xf]
  %v1058 = vld [vmem:[%s4 + $0x34] sm:$0xf]
  %v1059 = vld [vmem:[%s4 + $0x40] sm:$0xf]
  %v1060 = vld [vmem:[%s4 + $0x4c] sm:$0xf]
  %v1061 = vld [vmem:[%s4 + $0x58] sm:$0xf]
  %v1062 = vld [vmem:[%s4 + $0x64] sm:$0xf]
  %v1063 = vld [vmem:[%s4 + $0x70] sm:$0xf]
  %v1064 = vld [vmem:[%s4 + $0x7c] sm:$0x7]
  %v1065 = vpack.c.bf16 %v1047, %v1046
  %v1066 = vpack.c.bf16 %v1049, %v1048
  %v1067 = vpack.c.bf16 %v1051, %v1050
  %v1068 = vpack.c.bf16 %v1053, %v1052
  %v1069 = vld [vmem:[%s6 + $0x7] sm:$0x1]
  %v1071 = vlaneseq
  %v1072 = vshrl.u32 %v1071, 7
  %v1073 = vsub.s32 0, %v1072
  %v1074 = vrot.slane %v1069, %v1073
  %v1087 = vunpack.c.l.b16 %v1054
  %v1088 = vunpack.c.l.b16 %v1055
  %v1089 = vunpack.c.l.b16 %v1056
  %v1090 = vunpack.c.l.b16 %v1057
  %v1091 = vunpack.c.l.b16 %v1058
  %v1092 = vunpack.c.l.b16 %v1059
  %v1093 = vunpack.c.l.b16 %v1060
  %v1094 = vunpack.c.l.b16 %v1061
  %v1095 = vunpack.c.l.b16 %v1062
  %v1096 = vunpack.c.l.b16 %v1063
  %v1097 = vunpack.c.l.b16 %v1064
  %v1098 = vpack.c.b16 %v1088, %v1087
  %v1099 = vpack.c.b16 %v1090, %v1089
  %v1100 = vpack.c.b16 %v1092, %v1091
  %v1101 = vpack.c.b16 %v1094, %v1093
  %v1102 = vpack.c.b16 %v1096, %v1095
  %v1103 = vpack.c.b16 %v1097, %v1097
  %v1110 = vsel %vm964, %v1065, 0
  %v1113 = vsel %vm964, %v1066, 0
  %v1116 = vsel %vm964, %v1067, 0
  %v1119 = vsel %vm964, %v1068, 0
  %v1122 = vsel %vm977, %v1103, 0
  %1124 = vmatprep.subr.bf16.mxu0 0
  %1125 = vmatpush1.bf16.msra.mxu0 %v1098
  %1126 = vmatprep.subr.bf16.mxu0 0
  %1127 = vmatpush1.bf16.msra.mxu0 %v1099
  %1128 = vmatprep.subr.bf16.mxu0 0
  %1129 = vmatpush1.bf16.msra.mxu0 %v1100
  %1130 = vmatprep.subr.bf16.mxu0 0
  %1131 = vmatpush1.bf16.msra.mxu0 %v1101
  %1132 = vmatprep.subr.bf16.mxu0 0
  %1133 = vmatpush1.bf16.msra.mxu0 %v1102
  %1134 = vmatprep.subr.bf16.mxu0 0
  %1135 = vmatpush1.bf16.msra.mxu0 %v1122
  %1136 = vmatprep.subr.bf16.mxu0 0
  %1137 = vmatpush1.bf16.msra.mxu0 0
  %1138 = vmatprep.subr.bf16.mxu0 0
  %1139 = vmatpush1.bf16.msra.mxu0 0
  %1140 = vmatprep.subr.bf16.mxu0 0
  %1141 = vmatpush1.bf16.msra.mxu0 0
  %1142 = vmatprep.subr.bf16.mxu0 0
  %1143 = vmatpush1.bf16.msra.mxu0 0
  %1144 = vmatprep.subr.bf16.mxu0 0
  %1145 = vmatpush1.bf16.msra.mxu0 0
  %1146 = vmatprep.subr.bf16.mxu0 0
  %1147 = vmatpush1.bf16.msra.mxu0 0
  %1148 = vmatprep.subr.bf16.mxu0 0
  %1149 = vmatpush1.bf16.msra.mxu0 0
  %1150 = vmatprep.subr.bf16.mxu0 0
  %1151 = vmatpush1.bf16.msra.mxu0 0
  %1152 = vmatprep.subr.bf16.mxu0 0
  %1153 = vmatpush1.bf16.msra.mxu0 0
  %1154 = vmatprep.subr.bf16.mxu0 0
  %1155 = vmatpush1.bf16.msra.mxu0 0
  %1156 = vmatprep.mubr.bf16.mxu0 0
  %1157 = vmatmul.mubr.bf16.gmra.mrb[0].mxu0 %v1110
  %v1158 = vpop.f32.mrb[0].mxu0
  %v1159 = vadd.f32 %v1074, %v1158
  %v1160 = vpop.f32.mrb[0].mxu0
  %v1161 = vpop.f32.mrb[0].mxu0
  %v1162 = vadd.f32 %v1074, %v1161
  %v1163 = vpop.f32.mrb[0].mxu0
  %1164 = vmatprep.mubr.bf16.mxu0 0
  %1165 = vmatmul.mubr.bf16.gmra.mrb[0].mxu0 %v1113
  %v1166 = vpop.f32.mrb[0].mxu0
  %v1167 = vadd.f32 %v1074, %v1166
  %v1168 = vpop.f32.mrb[0].mxu0
  %v1169 = vpop.f32.mrb[0].mxu0
  %v1170 = vadd.f32 %v1074, %v1169
  %v1171 = vpop.f32.mrb[0].mxu0
  %1172 = vmatprep.mubr.bf16.mxu0 0
  %1173 = vmatmul.mubr.bf16.gmra.mrb[0].mxu0 %v1116
  %v1174 = vpop.f32.mrb[0].mxu0
  %v1175 = vadd.f32 %v1074, %v1174
  %v1176 = vpop.f32.mrb[0].mxu0
  %v1177 = vpop.f32.mrb[0].mxu0
  %v1178 = vadd.f32 %v1074, %v1177
  %v1179 = vpop.f32.mrb[0].mxu0
  %1180 = vmatprep.mubr.bf16.mxu0 0
  %1181 = vmatmul.mubr.bf16.gmra.mrb[0].mxu0 %v1119
  %v1182 = vpop.f32.mrb[0].mxu0
  %v1183 = vadd.f32 %v1074, %v1182
  %v1184 = vpop.f32.mrb[0].mxu0
  %v1185 = vpop.f32.mrb[0].mxu0
  %v1186 = vadd.f32 %v1074, %v1185
  %v1187 = vpop.f32.mrb[0].mxu0
  %1188 = vdwg.mxu0
  %v1189 = vmax.f32 %v1159, 0.0
  %v1190 = vmax.f32 %v1162, 0.0
  %v1191 = vmax.f32 %v1167, 0.0
  %v1192 = vmax.f32 %v1170, 0.0
  %v1193 = vmax.f32 %v1175, 0.0
  %v1194 = vmax.f32 %v1178, 0.0
  %v1195 = vmax.f32 %v1183, 0.0
  %v1196 = vmax.f32 %v1186, 0.0
  %v1197 = vld [vmem:[%s4 + $0x8] sm:$0xf]
  %v1198 = vld [vmem:[%s4 + $0x14] sm:$0xf]
  %v1199 = vld [vmem:[%s4 + $0x20] sm:$0xf]
  %v1200 = vld [vmem:[%s4 + $0x2c] sm:$0xf]
  %v1201 = vld [vmem:[%s4 + $0x38] sm:$0xf]
  %v1202 = vld [vmem:[%s4 + $0x44] sm:$0xf]
  %v1203 = vld [vmem:[%s4 + $0x50] sm:$0xf]
  %v1204 = vld [vmem:[%s4 + $0x5c] sm:$0xf]
  %v1205 = vld [vmem:[%s4 + $0x68] sm:$0xf]
  %v1206 = vld [vmem:[%s4 + $0x74] sm:$0xf]
  %v1207 = vld [vmem:[%s4 + $0x80] sm:$0x7]
  %v1208 = vpack.c.bf16 %v1190, %v1189
  %v1209 = vpack.c.bf16 %v1192, %v1191
  %v1210 = vpack.c.bf16 %v1194, %v1193
  %v1211 = vpack.c.bf16 %v1196, %v1195
  %v1212 = vld [vmem:[%s6 + $0x8] sm:$0x1]
  %v1214 = vlaneseq
  %v1215 = vshrl.u32 %v1214, 7
  %v1216 = vsub.s32 0, %v1215
  %v1217 = vrot.slane %v1212, %v1216
  %v1230 = vunpack.c.l.b16 %v1197
  %v1231 = vunpack.c.l.b16 %v1198
  %v1232 = vunpack.c.l.b16 %v1199
  %v1233 = vunpack.c.l.b16 %v1200
  %v1234 = vunpack.c.l.b16 %v1201
  %v1235 = vunpack.c.l.b16 %v1202
  %v1236 = vunpack.c.l.b16 %v1203
  %v1237 = vunpack.c.l.b16 %v1204
  %v1238 = vunpack.c.l.b16 %v1205
  %v1239 = vunpack.c.l.b16 %v1206
  %v1240 = vunpack.c.l.b16 %v1207
  %v1241 = vpack.c.b16 %v1231, %v1230
  %v1242 = vpack.c.b16 %v1233, %v1232
  %v1243 = vpack.c.b16 %v1235, %v1234
  %v1244 = vpack.c.b16 %v1237, %v1236
  %v1245 = vpack.c.b16 %v1239, %v1238
  %v1246 = vpack.c.b16 %v1240, %v1240
  %v1253 = vsel %vm964, %v1208, 0
  %v1256 = vsel %vm964, %v1209, 0
  %v1259 = vsel %vm964, %v1210, 0
  %v1262 = vsel %vm964, %v1211, 0
  %v1265 = vsel %vm977, %v1246, 0
  %1267 = vmatprep.subr.bf16.mxu0 0
  %1268 = vmatpush1.bf16.msra.mxu0 %v1241
  %1269 = vmatprep.subr.bf16.mxu0 0
  %1270 = vmatpush1.bf16.msra.mxu0 %v1242
  %1271 = vmatprep.subr.bf16.mxu0 0
  %1272 = vmatpush1.bf16.msra.mxu0 %v1243
  %1273 = vmatprep.subr.bf16.mxu0 0
  %1274 = vmatpush1.bf16.msra.mxu0 %v1244
  %1275 = vmatprep.subr.bf16.mxu0 0
  %1276 = vmatpush1.bf16.msra.mxu0 %v1245
  %1277 = vmatprep.subr.bf16.mxu0 0
  %1278 = vmatpush1.bf16.msra.mxu0 %v1265
  %1279 = vmatprep.subr.bf16.mxu0 0
  %1280 = vmatpush1.bf16.msra.mxu0 0
  %1281 = vmatprep.subr.bf16.mxu0 0
  %1282 = vmatpush1.bf16.msra.mxu0 0
  %1283 = vmatprep.subr.bf16.mxu0 0
  %1284 = vmatpush1.bf16.msra.mxu0 0
  %1285 = vmatprep.subr.bf16.mxu0 0
  %1286 = vmatpush1.bf16.msra.mxu0 0
  %1287 = vmatprep.subr.bf16.mxu0 0
  %1288 = vmatpush1.bf16.msra.mxu0 0
  %1289 = vmatprep.subr.bf16.mxu0 0
  %1290 = vmatpush1.bf16.msra.mxu0 0
  %1291 = vmatprep.subr.bf16.mxu0 0
  %1292 = vmatpush1.bf16.msra.mxu0 0
  %1293 = vmatprep.subr.bf16.mxu0 0
  %1294 = vmatpush1.bf16.msra.mxu0 0
  %1295 = vmatprep.subr.bf16.mxu0 0
  %1296 = vmatpush1.bf16.msra.mxu0 0
  %1297 = vmatprep.subr.bf16.mxu0 0
  %1298 = vmatpush1.bf16.msra.mxu0 0
  %1299 = vmatprep.mubr.bf16.mxu0 0
  %1300 = vmatmul.mubr.bf16.gmra.mrb[0].mxu0 %v1253
  %v1301 = vpop.f32.mrb[0].mxu0
  %v1302 = vadd.f32 %v1217, %v1301
  %v1303 = vpop.f32.mrb[0].mxu0
  %v1304 = vpop.f32.mrb[0].mxu0
  %v1305 = vadd.f32 %v1217, %v1304
  %v1306 = vpop.f32.mrb[0].mxu0
  %1307 = vmatprep.mubr.bf16.mxu0 0
  %1308 = vmatmul.mubr.bf16.gmra.mrb[0].mxu0 %v1256
  %v1309 = vpop.f32.mrb[0].mxu0
  %v1310 = vadd.f32 %v1217, %v1309
  %v1311 = vpop.f32.mrb[0].mxu0
  %v1312 = vpop.f32.mrb[0].mxu0
  %v1313 = vadd.f32 %v1217, %v1312
  %v1314 = vpop.f32.mrb[0].mxu0
  %1315 = vmatprep.mubr.bf16.mxu0 0
  %1316 = vmatmul.mubr.bf16.gmra.mrb[0].mxu0 %v1259
  %v1317 = vpop.f32.mrb[0].mxu0
  %v1318 = vadd.f32 %v1217, %v1317
  %v1319 = vpop.f32.mrb[0].mxu0
  %v1320 = vpop.f32.mrb[0].mxu0
  %v1321 = vadd.f32 %v1217, %v1320
  %v1322 = vpop.f32.mrb[0].mxu0
  %1323 = vmatprep.mubr.bf16.mxu0 0
  %1324 = vmatmul.mubr.bf16.gmra.mrb[0].mxu0 %v1262
  %v1325 = vpop.f32.mrb[0].mxu0
  %v1326 = vadd.f32 %v1217, %v1325
  %v1327 = vpop.f32.mrb[0].mxu0
  %v1328 = vpop.f32.mrb[0].mxu0
  %v1329 = vadd.f32 %v1217, %v1328
  %v1330 = vpop.f32.mrb[0].mxu0
  %1331 = vdwg.mxu0
  %vm1332 = vcmask 23552
  %v1333 = vsel %vm1332, %v1302, -inf
  %1334 = vmax.xlane.f32.xlu0 %v1333
  %v1335 = vpop.xlane.xlu0 %1334
  %v1336 = vsel %vm1332, %v1305, -inf
  %1337 = vmax.xlane.f32.xlu0 %v1336
  %v1338 = vpop.xlane.xlu0 %1337
  %v1339 = vsel %vm1332, %v1310, -inf
  %1340 = vmax.xlane.f32.xlu0 %v1339
  %v1341 = vpop.xlane.xlu0 %1340
  %v1342 = vsel %vm1332, %v1313, -inf
  %1343 = vmax.xlane.f32.xlu0 %v1342
  %v1344 = vpop.xlane.xlu0 %1343
  %v1345 = vsel %vm1332, %v1318, -inf
  %1346 = vmax.xlane.f32.xlu0 %v1345
  %v1347 = vpop.xlane.xlu0 %1346
  %v1348 = vsel %vm1332, %v1321, -inf
  %1349 = vmax.xlane.f32.xlu0 %v1348
  %v1350 = vpop.xlane.xlu0 %1349
  %v1351 = vsel %vm1332, %v1326, -inf
  %1352 = vmax.xlane.f32.xlu0 %v1351
  %v1353 = vpop.xlane.xlu0 %1352
  %v1354 = vsel %vm1332, %v1329, -inf
  %1355 = vmax.xlane.f32.xlu0 %v1354
  %v1356 = vpop.xlane.xlu0 %1355
  %v1357 = vsub.f32 %v1302, %v1335
  %v1358 = vsub.f32 %v1305, %v1338
  %v1359 = vsub.f32 %v1310, %v1341
  %v1360 = vsub.f32 %v1313, %v1344
  %v1361 = vsub.f32 %v1318, %v1347
  %v1362 = vsub.f32 %v1321, %v1350
  %v1363 = vsub.f32 %v1326, %v1353
  %v1364 = vsub.f32 %v1329, %v1356
  %v1365 = vmul.f32 %v1357, 1.442695
  %v1366 = vpow.pop %v1365
  %v1367 = vmul.f32 %v1358, 1.442695
  %v1368 = vpow.pop %v1367
  %v1369 = vmul.f32 %v1359, 1.442695
  %v1370 = vpow.pop %v1369
  %v1371 = vmul.f32 %v1360, 1.442695
  %v1372 = vpow.pop %v1371
  %v1373 = vmul.f32 %v1361, 1.442695
  %v1374 = vpow.pop %v1373
  %v1375 = vmul.f32 %v1362, 1.442695
  %v1376 = vpow.pop %v1375
  %v1377 = vmul.f32 %v1363, 1.442695
  %v1378 = vpow.pop %v1377
  %v1379 = vmul.f32 %v1364, 1.442695
  %v1380 = vpow.pop %v1379
  %v1381 = vsel %vm1332, %v1366, 0.0
  %1382 = vadd.xlane.f32.xlu0 %v1381
  %v1383 = vpop.xlane.xlu0 %1382
  %v1384 = vsel %vm1332, %v1368, 0.0
  %1385 = vadd.xlane.f32.xlu0 %v1384
  %v1386 = vpop.xlane.xlu0 %1385
  %v1387 = vsel %vm1332, %v1370, 0.0
  %1388 = vadd.xlane.f32.xlu0 %v1387
  %v1389 = vpop.xlane.xlu0 %1388
  %v1390 = vsel %vm1332, %v1372, 0.0
  %1391 = vadd.xlane.f32.xlu0 %v1390
  %v1392 = vpop.xlane.xlu0 %1391
  %v1393 = vsel %vm1332, %v1374, 0.0
  %1394 = vadd.xlane.f32.xlu0 %v1393
  %v1395 = vpop.xlane.xlu0 %1394
  %v1396 = vsel %vm1332, %v1376, 0.0
  %1397 = vadd.xlane.f32.xlu0 %v1396
  %v1398 = vpop.xlane.xlu0 %1397
  %v1399 = vsel %vm1332, %v1378, 0.0
  %1400 = vadd.xlane.f32.xlu0 %v1399
  %v1401 = vpop.xlane.xlu0 %1400
  %v1402 = vsel %vm1332, %v1380, 0.0
  %1403 = vadd.xlane.f32.xlu0 %v1402
  %v1404 = vpop.xlane.xlu0 %1403
  %v1405 = vrcp.pop %v1383
  %v1406 = vmul.f32 %v1366, %v1405
  %v1407 = vrcp.pop %v1386
  %v1408 = vmul.f32 %v1368, %v1407
  %v1409 = vrcp.pop %v1389
  %v1410 = vmul.f32 %v1370, %v1409
  %v1411 = vrcp.pop %v1392
  %v1412 = vmul.f32 %v1372, %v1411
  %v1413 = vrcp.pop %v1395
  %v1414 = vmul.f32 %v1374, %v1413
  %v1415 = vrcp.pop %v1398
  %v1416 = vmul.f32 %v1376, %v1415
  %v1417 = vrcp.pop %v1401
  %v1418 = vmul.f32 %v1378, %v1417
  %v1419 = vrcp.pop %v1404
  %v1420 = vmul.f32 %v1380, %v1419
  %1429 = vrot.lane.b32.xlu0 %v860, 103
  %v1430 = vpop.permute.xlu0 %1429
  %1431 = vrot.lane.b32.xlu0 %v861, 103
  %v1432 = vpop.permute.xlu0 %1431
  %1433 = vrot.lane.b32.xlu0 %v862, 103
  %v1434 = vpop.permute.xlu0 %1433
  %1435 = vrot.lane.b32.xlu0 %v863, 103
  %v1436 = vpop.permute.xlu0 %1435
  %1437 = vrot.lane.b32.xlu0 %v864, 103
  %v1438 = vpop.permute.xlu0 %1437
  %1439 = vrot.lane.b32.xlu0 %v865, 103
  %v1440 = vpop.permute.xlu0 %1439
  %1441 = vrot.lane.b32.xlu0 %v866, 103
  %v1442 = vpop.permute.xlu0 %1441
  %1443 = vrot.lane.b32.xlu0 %v867, 103
  %v1444 = vpop.permute.xlu0 %1443
  %v1453 = vmul.f32 %v1406, %v1430
  %v1454 = vmul.f32 %v1408, %v1432
  %v1455 = vmul.f32 %v1410, %v1434
  %v1456 = vmul.f32 %v1412, %v1436
  %v1457 = vmul.f32 %v1414, %v1438
  %v1458 = vmul.f32 %v1416, %v1440
  %v1459 = vmul.f32 %v1418, %v1442
  %v1460 = vmul.f32 %v1420, %v1444
  %v1461 = vsel %vm1332, %v1453, 0.0
  %1462 = vadd.xlane.f32.xlu0 %v1461
  %v1463 = vpop.xlane.xlu0 %1462
  %v1464 = vsel %vm1332, %v1454, 0.0
  %1465 = vadd.xlane.f32.xlu0 %v1464
  %v1466 = vpop.xlane.xlu0 %1465
  %v1467 = vsel %vm1332, %v1455, 0.0
  %1468 = vadd.xlane.f32.xlu0 %v1467
  %v1469 = vpop.xlane.xlu0 %1468
  %v1470 = vsel %vm1332, %v1456, 0.0
  %1471 = vadd.xlane.f32.xlu0 %v1470
  %v1472 = vpop.xlane.xlu0 %1471
  %v1473 = vsel %vm1332, %v1457, 0.0
  %1474 = vadd.xlane.f32.xlu0 %v1473
  %v1475 = vpop.xlane.xlu0 %1474
  %v1476 = vsel %vm1332, %v1458, 0.0
  %1477 = vadd.xlane.f32.xlu0 %v1476
  %v1478 = vpop.xlane.xlu0 %1477
  %v1479 = vsel %vm1332, %v1459, 0.0
  %1480 = vadd.xlane.f32.xlu0 %v1479
  %v1481 = vpop.xlane.xlu0 %1480
  %v1482 = vsel %vm1332, %v1460, 0.0
  %1483 = vadd.xlane.f32.xlu0 %v1482
  %v1484 = vpop.xlane.xlu0 %1483
  %1485 = vrot.lane.b32.xlu0 %v860, 100
  %v1486 = vpop.permute.xlu0 %1485
  %1487 = vrot.lane.b32.xlu0 %v861, 100
  %v1488 = vpop.permute.xlu0 %1487
  %1489 = vrot.lane.b32.xlu0 %v862, 100
  %v1490 = vpop.permute.xlu0 %1489
  %1491 = vrot.lane.b32.xlu0 %v863, 100
  %v1492 = vpop.permute.xlu0 %1491
  %1493 = vrot.lane.b32.xlu0 %v864, 100
  %v1494 = vpop.permute.xlu0 %1493
  %1495 = vrot.lane.b32.xlu0 %v865, 100
  %v1496 = vpop.permute.xlu0 %1495
  %1497 = vrot.lane.b32.xlu0 %v866, 100
  %v1498 = vpop.permute.xlu0 %1497
  %1499 = vrot.lane.b32.xlu0 %v867, 100
  %v1500 = vpop.permute.xlu0 %1499
  %v1509 = vmul.f32 %v1406, %v1486
  %v1510 = vmul.f32 %v1408, %v1488
  %v1511 = vmul.f32 %v1410, %v1490
  %v1512 = vmul.f32 %v1412, %v1492
  %v1513 = vmul.f32 %v1414, %v1494
  %v1514 = vmul.f32 %v1416, %v1496
  %v1515 = vmul.f32 %v1418, %v1498
  %v1516 = vmul.f32 %v1420, %v1500
  %v1517 = vsel %vm1332, %v1509, 0.0
  %1518 = vadd.xlane.f32.xlu0 %v1517
  %v1519 = vpop.xlane.xlu0 %1518
  %v1520 = vsel %vm1332, %v1510, 0.0
  %1521 = vadd.xlane.f32.xlu0 %v1520
  %v1522 = vpop.xlane.xlu0 %1521
  %v1523 = vsel %vm1332, %v1511, 0.0
  %1524 = vadd.xlane.f32.xlu0 %v1523
  %v1525 = vpop.xlane.xlu0 %1524
  %v1526 = vsel %vm1332, %v1512, 0.0
  %1527 = vadd.xlane.f32.xlu0 %v1526
  %v1528 = vpop.xlane.xlu0 %1527
  %v1529 = vsel %vm1332, %v1513, 0.0
  %1530 = vadd.xlane.f32.xlu0 %v1529
  %v1531 = vpop.xlane.xlu0 %1530
  %v1532 = vsel %vm1332, %v1514, 0.0
  %1533 = vadd.xlane.f32.xlu0 %v1532
  %v1534 = vpop.xlane.xlu0 %1533
  %v1535 = vsel %vm1332, %v1515, 0.0
  %1536 = vadd.xlane.f32.xlu0 %v1535
  %v1537 = vpop.xlane.xlu0 %1536
  %v1538 = vsel %vm1332, %v1516, 0.0
  %1539 = vadd.xlane.f32.xlu0 %v1538
  %v1540 = vpop.xlane.xlu0 %1539
  %vm1541 = vcmask 7168
  %v1542 = vsel %vm1541, %v1463, %v1519
  %v1543 = vsel %vm1541, %v1466, %v1522
  %v1544 = vsel %vm1541, %v1469, %v1525
  %v1545 = vsel %vm1541, %v1472, %v1528
  %v1546 = vsel %vm1541, %v1475, %v1531
  %v1547 = vsel %vm1541, %v1478, %v1534
  %v1548 = vsel %vm1541, %v1481, %v1537
  %v1549 = vsel %vm1541, %v1484, %v1540
  %v1550 = vmax.f32 %v1542, -0.999999
  %v1551 = vmax.f32 %v1543, -0.999999
  %v1552 = vmax.f32 %v1544, -0.999999
  %v1553 = vmax.f32 %v1545, -0.999999
  %v1554 = vmax.f32 %v1546, -0.999999
  %v1555 = vmax.f32 %v1547, -0.999999
  %v1556 = vmax.f32 %v1548, -0.999999
  %v1557 = vmax.f32 %v1549, -0.999999
  %v1558 = vmin.f32 %v1550, 0.999999
  %v1559 = vmin.f32 %v1551, 0.999999
  %v1560 = vmin.f32 %v1552, 0.999999
  %v1561 = vmin.f32 %v1553, 0.999999
  %v1562 = vmin.f32 %v1554, 0.999999
  %v1563 = vmin.f32 %v1555, 0.999999
  %v1564 = vmin.f32 %v1556, 0.999999
  %v1565 = vmin.f32 %v1557, 0.999999
  %v1566 = vld [vmem:[%s2] sm:$0xff]
  %v1567 = vld [vmem:[%s2 + $0x8] sm:$0xff]
  %v1568 = vld [vmem:[%s2 + $0x10] sm:$0xff]
  %v1569 = vld [vmem:[%s2 + $0x18] sm:$0xff]
  %v1570 = vld [vmem:[%s2 + $0x20] sm:$0xff]
  %v1571 = vld [vmem:[%s2 + $0x28] sm:$0xff]
  %v1572 = vld [vmem:[%s2 + $0x30] sm:$0xff]
  %v1573 = vld [vmem:[%s2 + $0x38] sm:$0xff]
  %v1574 = vlaneseq
  %v1575 = vand.u32 %v1574, 127
  %v1576 = vpack.c.bf16 %v1559, %v1558
  %v1577 = vpack.c.bf16 %v1561, %v1560
  %v1578 = vpack.c.bf16 %v1563, %v1562
  %v1579 = vpack.c.bf16 %v1565, %v1564
  %1580 = vset.pattern.permute.xlu0 0
  %1581 = vperm.xlu0 %1580, %v1566
  %v1582 = vpop.permute.xlu0 %1581
  %1583 = vset.pattern.permute.xlu0 0
  %1584 = vperm.xlu0 %1583, %v1567
  %v1585 = vpop.permute.xlu0 %1584
  %1586 = vset.pattern.permute.xlu0 0
  %1587 = vperm.xlu0 %1586, %v1568
  %v1588 = vpop.permute.xlu0 %1587
  %1589 = vset.pattern.permute.xlu0 0
  %1590 = vperm.xlu0 %1589, %v1569
  %v1591 = vpop.permute.xlu0 %1590
  %1592 = vset.pattern.permute.xlu0 0
  %1593 = vperm.xlu0 %1592, %v1570
  %v1594 = vpop.permute.xlu0 %1593
  %1595 = vset.pattern.permute.xlu0 0
  %1596 = vperm.xlu0 %1595, %v1571
  %v1597 = vpop.permute.xlu0 %1596
  %1598 = vset.pattern.permute.xlu0 0
  %1599 = vperm.xlu0 %1598, %v1572
  %v1600 = vpop.permute.xlu0 %1599
  %1601 = vset.pattern.permute.xlu0 0
  %1602 = vperm.xlu0 %1601, %v1573
  %v1603 = vpop.permute.xlu0 %1602
  %vm1604 = vcmp.eq.s32.totalorder %v1575, %v1582
  %vm1605 = vcmp.eq.s32.totalorder %v1575, %v1585
  %vm1606 = vcmp.eq.s32.totalorder %v1575, %v1588
  %vm1607 = vcmp.eq.s32.totalorder %v1575, %v1591
  %vm1608 = vcmp.eq.s32.totalorder %v1575, %v1594
  %vm1609 = vcmp.eq.s32.totalorder %v1575, %v1597
  %vm1610 = vcmp.eq.s32.totalorder %v1575, %v1600
  %vm1611 = vcmp.eq.s32.totalorder %v1575, %v1603
  %v1612 = vsel %vm1604, 1, 0
  %v1613 = vsel %vm1605, 1, 0
  %v1614 = vsel %vm1606, 1, 0
  %v1615 = vsel %vm1607, 1, 0
  %v1616 = vsel %vm1608, 1, 0
  %v1617 = vsel %vm1609, 1, 0
  %v1618 = vsel %vm1610, 1, 0
  %v1619 = vsel %vm1611, 1, 0
  %v1620 = vcvt.s32.f32 %v1612
  %v1621 = vcvt.s32.f32 %v1613
  %v1622 = vcvt.s32.f32 %v1614
  %v1623 = vcvt.s32.f32 %v1615
  %v1624 = vcvt.s32.f32 %v1616
  %v1625 = vcvt.s32.f32 %v1617
  %v1626 = vcvt.s32.f32 %v1618
  %v1627 = vcvt.s32.f32 %v1619
  %v1628 = vpack.c.bf16 %v1621, %v1620
  %v1629 = vpack.c.bf16 %v1623, %v1622
  %v1630 = vpack.c.bf16 %v1625, %v1624
  %v1631 = vpack.c.bf16 %v1627, %v1626
  %v1633 = vsel %vm724, %v1628, 0
  %v1636 = vsel %vm724, %v1629, 0
  %v1639 = vsel %vm724, %v1630, 0
  %v1642 = vsel %vm724, %v1631, 0
  %1644 = vmatprep.subr.bf16.mxu0 0
  %1645 = vmatpush1.bf16.msra.mxu0 %v1576
  %1646 = vmatprep.subr.bf16.mxu0 0
  %1647 = vmatpush1.bf16.msra.mxu0 %v1577
  %1648 = vmatprep.subr.bf16.mxu0 0
  %1649 = vmatpush1.bf16.msra.mxu0 %v1578
  %1650 = vmatprep.subr.bf16.mxu0 0
  %1651 = vmatpush1.bf16.msra.mxu0 %v1579
  %1652 = vmatprep.subr.bf16.mxu0 0
  %1653 = vmatpush1.bf16.msra.mxu0 0
  %1654 = vmatprep.subr.bf16.mxu0 0
  %1655 = vmatpush1.bf16.msra.mxu0 0
  %1656 = vmatprep.subr.bf16.mxu0 0
  %1657 = vmatpush1.bf16.msra.mxu0 0
  %1658 = vmatprep.subr.bf16.mxu0 0
  %1659 = vmatpush1.bf16.msra.mxu0 0
  %1660 = vmatprep.subr.bf16.mxu0 0
  %1661 = vmatpush1.bf16.msra.mxu0 0
  %1662 = vmatprep.subr.bf16.mxu0 0
  %1663 = vmatpush1.bf16.msra.mxu0 0
  %1664 = vmatprep.subr.bf16.mxu0 0
  %1665 = vmatpush1.bf16.msra.mxu0 0
  %1666 = vmatprep.subr.bf16.mxu0 0
  %1667 = vmatpush1.bf16.msra.mxu0 0
  %1668 = vmatprep.subr.bf16.mxu0 0
  %1669 = vmatpush1.bf16.msra.mxu0 0
  %1670 = vmatprep.subr.bf16.mxu0 0
  %1671 = vmatpush1.bf16.msra.mxu0 0
  %1672 = vmatprep.subr.bf16.mxu0 0
  %1673 = vmatpush1.bf16.msra.mxu0 0
  %1674 = vmatprep.subr.bf16.mxu0 0
  %1675 = vmatpush1.bf16.msra.mxu0 0
  %1676 = vmatprep.mubr.bf16.mxu0 0
  %1677 = vmatmul.mubr.bf16.gmra.mrb[0].mxu0 %v1633
  %v1678 = vpop.f32.mrb[0].mxu0
  %v1679 = vadd.f32 0.0, %v1678
  %v1680 = vpop.f32.mrb[0].mxu0
  %v1681 = vpop.f32.mrb[0].mxu0
  %v1682 = vadd.f32 0.0, %v1681
  %v1683 = vpop.f32.mrb[0].mxu0
  %1684 = vmatprep.mubr.bf16.mxu0 0
  %1685 = vmatmul.mubr.bf16.gmra.mrb[0].mxu0 %v1636
  %v1686 = vpop.f32.mrb[0].mxu0
  %v1687 = vadd.f32 0.0, %v1686
  %v1688 = vpop.f32.mrb[0].mxu0
  %v1689 = vpop.f32.mrb[0].mxu0
  %v1690 = vadd.f32 0.0, %v1689
  %v1691 = vpop.f32.mrb[0].mxu0
  %1692 = vmatprep.mubr.bf16.mxu0 0
  %1693 = vmatmul.mubr.bf16.gmra.mrb[0].mxu0 %v1639
  %v1694 = vpop.f32.mrb[0].mxu0
  %v1695 = vadd.f32 0.0, %v1694
  %v1696 = vpop.f32.mrb[0].mxu0
  %v1697 = vpop.f32.mrb[0].mxu0
  %v1698 = vadd.f32 0.0, %v1697
  %v1699 = vpop.f32.mrb[0].mxu0
  %1700 = vmatprep.mubr.bf16.mxu0 0
  %1701 = vmatmul.mubr.bf16.gmra.mrb[0].mxu0 %v1642
  %v1702 = vpop.f32.mrb[0].mxu0
  %v1703 = vadd.f32 0.0, %v1702
  %v1704 = vpop.f32.mrb[0].mxu0
  %v1705 = vpop.f32.mrb[0].mxu0
  %v1706 = vadd.f32 0.0, %v1705
  %v1707 = vpop.f32.mrb[0].mxu0
  %1708 = vdwg.mxu0
  %1709 = vset.pattern.permute.xlu0 1
  %1710 = vperm.xlu0 %1709, %v1566
  %v1711 = vpop.permute.xlu0 %1710
  %1712 = vset.pattern.permute.xlu0 1
  %1713 = vperm.xlu0 %1712, %v1567
  %v1714 = vpop.permute.xlu0 %1713
  %1715 = vset.pattern.permute.xlu0 1
  %1716 = vperm.xlu0 %1715, %v1568
  %v1717 = vpop.permute.xlu0 %1716
  %1718 = vset.pattern.permute.xlu0 1
  %1719 = vperm.xlu0 %1718, %v1569
  %v1720 = vpop.permute.xlu0 %1719
  %1721 = vset.pattern.permute.xlu0 1
  %1722 = vperm.xlu0 %1721, %v1570
  %v1723 = vpop.permute.xlu0 %1722
  %1724 = vset.pattern.permute.xlu0 1
  %1725 = vperm.xlu0 %1724, %v1571
  %v1726 = vpop.permute.xlu0 %1725
  %1727 = vset.pattern.permute.xlu0 1
  %1728 = vperm.xlu0 %1727, %v1572
  %v1729 = vpop.permute.xlu0 %1728
  %1730 = vset.pattern.permute.xlu0 1
  %1731 = vperm.xlu0 %1730, %v1573
  %v1732 = vpop.permute.xlu0 %1731
  %vm1733 = vcmp.eq.s32.totalorder %v1575, %v1711
  %vm1734 = vcmp.eq.s32.totalorder %v1575, %v1714
  %vm1735 = vcmp.eq.s32.totalorder %v1575, %v1717
  %vm1736 = vcmp.eq.s32.totalorder %v1575, %v1720
  %vm1737 = vcmp.eq.s32.totalorder %v1575, %v1723
  %vm1738 = vcmp.eq.s32.totalorder %v1575, %v1726
  %vm1739 = vcmp.eq.s32.totalorder %v1575, %v1729
  %vm1740 = vcmp.eq.s32.totalorder %v1575, %v1732
  %v1741 = vsel %vm1733, 1, 0
  %v1742 = vsel %vm1734, 1, 0
  %v1743 = vsel %vm1735, 1, 0
  %v1744 = vsel %vm1736, 1, 0
  %v1745 = vsel %vm1737, 1, 0
  %v1746 = vsel %vm1738, 1, 0
  %v1747 = vsel %vm1739, 1, 0
  %v1748 = vsel %vm1740, 1, 0
  %v1749 = vcvt.s32.f32 %v1741
  %v1750 = vcvt.s32.f32 %v1742
  %v1751 = vcvt.s32.f32 %v1743
  %v1752 = vcvt.s32.f32 %v1744
  %v1753 = vcvt.s32.f32 %v1745
  %v1754 = vcvt.s32.f32 %v1746
  %v1755 = vcvt.s32.f32 %v1747
  %v1756 = vcvt.s32.f32 %v1748
  %v1757 = vpack.c.bf16 %v1750, %v1749
  %v1758 = vpack.c.bf16 %v1752, %v1751
  %v1759 = vpack.c.bf16 %v1754, %v1753
  %v1760 = vpack.c.bf16 %v1756, %v1755
  %v1762 = vsel %vm724, %v1757, 0
  %v1765 = vsel %vm724, %v1758, 0
  %v1768 = vsel %vm724, %v1759, 0
  %v1771 = vsel %vm724, %v1760, 0
  %1773 = vmatprep.subr.bf16.mxu0 0
  %1774 = vmatpush1.bf16.msra.mxu0 %v1576
  %1775 = vmatprep.subr.bf16.mxu0 0
  %1776 = vmatpush1.bf16.msra.mxu0 %v1577
  %1777 = vmatprep.subr.bf16.mxu0 0
  %1778 = vmatpush1.bf16.msra.mxu0 %v1578
  %1779 = vmatprep.subr.bf16.mxu0 0
  %1780 = vmatpush1.bf16.msra.mxu0 %v1579
  %1781 = vmatprep.subr.bf16.mxu0 0
  %1782 = vmatpush1.bf16.msra.mxu0 0
  %1783 = vmatprep.subr.bf16.mxu0 0
  %1784 = vmatpush1.bf16.msra.mxu0 0
  %1785 = vmatprep.subr.bf16.mxu0 0
  %1786 = vmatpush1.bf16.msra.mxu0 0
  %1787 = vmatprep.subr.bf16.mxu0 0
  %1788 = vmatpush1.bf16.msra.mxu0 0
  %1789 = vmatprep.subr.bf16.mxu0 0
  %1790 = vmatpush1.bf16.msra.mxu0 0
  %1791 = vmatprep.subr.bf16.mxu0 0
  %1792 = vmatpush1.bf16.msra.mxu0 0
  %1793 = vmatprep.subr.bf16.mxu0 0
  %1794 = vmatpush1.bf16.msra.mxu0 0
  %1795 = vmatprep.subr.bf16.mxu0 0
  %1796 = vmatpush1.bf16.msra.mxu0 0
  %1797 = vmatprep.subr.bf16.mxu0 0
  %1798 = vmatpush1.bf16.msra.mxu0 0
  %1799 = vmatprep.subr.bf16.mxu0 0
  %1800 = vmatpush1.bf16.msra.mxu0 0
  %1801 = vmatprep.subr.bf16.mxu0 0
  %1802 = vmatpush1.bf16.msra.mxu0 0
  %1803 = vmatprep.subr.bf16.mxu0 0
  %1804 = vmatpush1.bf16.msra.mxu0 0
  %1805 = vmatprep.mubr.bf16.mxu0 0
  %1806 = vmatmul.mubr.bf16.gmra.mrb[0].mxu0 %v1762
  %v1807 = vpop.f32.mrb[0].mxu0
  %v1808 = vadd.f32 0.0, %v1807
  %v1809 = vpop.f32.mrb[0].mxu0
  %v1810 = vpop.f32.mrb[0].mxu0
  %v1811 = vadd.f32 0.0, %v1810
  %v1812 = vpop.f32.mrb[0].mxu0
  %1813 = vmatprep.mubr.bf16.mxu0 0
  %1814 = vmatmul.mubr.bf16.gmra.mrb[0].mxu0 %v1765
  %v1815 = vpop.f32.mrb[0].mxu0
  %v1816 = vadd.f32 0.0, %v1815
  %v1817 = vpop.f32.mrb[0].mxu0
  %v1818 = vpop.f32.mrb[0].mxu0
  %v1819 = vadd.f32 0.0, %v1818
  %v1820 = vpop.f32.mrb[0].mxu0
  %1821 = vmatprep.mubr.bf16.mxu0 0
  %1822 = vmatmul.mubr.bf16.gmra.mrb[0].mxu0 %v1768
  %v1823 = vpop.f32.mrb[0].mxu0
  %v1824 = vadd.f32 0.0, %v1823
  %v1825 = vpop.f32.mrb[0].mxu0
  %v1826 = vpop.f32.mrb[0].mxu0
  %v1827 = vadd.f32 0.0, %v1826
  %v1828 = vpop.f32.mrb[0].mxu0
  %1829 = vmatprep.mubr.bf16.mxu0 0
  %1830 = vmatmul.mubr.bf16.gmra.mrb[0].mxu0 %v1771
  %v1831 = vpop.f32.mrb[0].mxu0
  %v1832 = vadd.f32 0.0, %v1831
  %v1833 = vpop.f32.mrb[0].mxu0
  %v1834 = vpop.f32.mrb[0].mxu0
  %v1835 = vadd.f32 0.0, %v1834
  %v1836 = vpop.f32.mrb[0].mxu0
  %1837 = vdwg.mxu0
  %1838 = vset.pattern.permute.xlu0 2
  %1839 = vperm.xlu0 %1838, %v1566
  %v1840 = vpop.permute.xlu0 %1839
  %1841 = vset.pattern.permute.xlu0 2
  %1842 = vperm.xlu0 %1841, %v1567
  %v1843 = vpop.permute.xlu0 %1842
  %1844 = vset.pattern.permute.xlu0 2
  %1845 = vperm.xlu0 %1844, %v1568
  %v1846 = vpop.permute.xlu0 %1845
  %1847 = vset.pattern.permute.xlu0 2
  %1848 = vperm.xlu0 %1847, %v1569
  %v1849 = vpop.permute.xlu0 %1848
  %1850 = vset.pattern.permute.xlu0 2
  %1851 = vperm.xlu0 %1850, %v1570
  %v1852 = vpop.permute.xlu0 %1851
  %1853 = vset.pattern.permute.xlu0 2
  %1854 = vperm.xlu0 %1853, %v1571
  %v1855 = vpop.permute.xlu0 %1854
  %1856 = vset.pattern.permute.xlu0 2
  %1857 = vperm.xlu0 %1856, %v1572
  %v1858 = vpop.permute.xlu0 %1857
  %1859 = vset.pattern.permute.xlu0 2
  %1860 = vperm.xlu0 %1859, %v1573
  %v1861 = vpop.permute.xlu0 %1860
  %vm1862 = vcmp.eq.s32.totalorder %v1575, %v1840
  %vm1863 = vcmp.eq.s32.totalorder %v1575, %v1843
  %vm1864 = vcmp.eq.s32.totalorder %v1575, %v1846
  %vm1865 = vcmp.eq.s32.totalorder %v1575, %v1849
  %vm1866 = vcmp.eq.s32.totalorder %v1575, %v1852
  %vm1867 = vcmp.eq.s32.totalorder %v1575, %v1855
  %vm1868 = vcmp.eq.s32.totalorder %v1575, %v1858
  %vm1869 = vcmp.eq.s32.totalorder %v1575, %v1861
  %v1870 = vsel %vm1862, 1, 0
  %v1871 = vsel %vm1863, 1, 0
  %v1872 = vsel %vm1864, 1, 0
  %v1873 = vsel %vm1865, 1, 0
  %v1874 = vsel %vm1866, 1, 0
  %v1875 = vsel %vm1867, 1, 0
  %v1876 = vsel %vm1868, 1, 0
  %v1877 = vsel %vm1869, 1, 0
  %v1878 = vcvt.s32.f32 %v1870
  %v1879 = vcvt.s32.f32 %v1871
  %v1880 = vcvt.s32.f32 %v1872
  %v1881 = vcvt.s32.f32 %v1873
  %v1882 = vcvt.s32.f32 %v1874
  %v1883 = vcvt.s32.f32 %v1875
  %v1884 = vcvt.s32.f32 %v1876
  %v1885 = vcvt.s32.f32 %v1877
  %v1886 = vpack.c.bf16 %v1879, %v1878
  %v1887 = vpack.c.bf16 %v1881, %v1880
  %v1888 = vpack.c.bf16 %v1883, %v1882
  %v1889 = vpack.c.bf16 %v1885, %v1884
  %v1891 = vsel %vm724, %v1886, 0
  %v1894 = vsel %vm724, %v1887, 0
  %v1897 = vsel %vm724, %v1888, 0
  %v1900 = vsel %vm724, %v1889, 0
  %1902 = vmatprep.subr.bf16.mxu0 0
  %1903 = vmatpush1.bf16.msra.mxu0 %v1576
  %1904 = vmatprep.subr.bf16.mxu0 0
  %1905 = vmatpush1.bf16.msra.mxu0 %v1577
  %1906 = vmatprep.subr.bf16.mxu0 0
  %1907 = vmatpush1.bf16.msra.mxu0 %v1578
  %1908 = vmatprep.subr.bf16.mxu0 0
  %1909 = vmatpush1.bf16.msra.mxu0 %v1579
  %1910 = vmatprep.subr.bf16.mxu0 0
  %1911 = vmatpush1.bf16.msra.mxu0 0
  %1912 = vmatprep.subr.bf16.mxu0 0
  %1913 = vmatpush1.bf16.msra.mxu0 0
  %1914 = vmatprep.subr.bf16.mxu0 0
  %1915 = vmatpush1.bf16.msra.mxu0 0
  %1916 = vmatprep.subr.bf16.mxu0 0
  %1917 = vmatpush1.bf16.msra.mxu0 0
  %1918 = vmatprep.subr.bf16.mxu0 0
  %1919 = vmatpush1.bf16.msra.mxu0 0
  %1920 = vmatprep.subr.bf16.mxu0 0
  %1921 = vmatpush1.bf16.msra.mxu0 0
  %1922 = vmatprep.subr.bf16.mxu0 0
  %1923 = vmatpush1.bf16.msra.mxu0 0
  %1924 = vmatprep.subr.bf16.mxu0 0
  %1925 = vmatpush1.bf16.msra.mxu0 0
  %1926 = vmatprep.subr.bf16.mxu0 0
  %1927 = vmatpush1.bf16.msra.mxu0 0
  %1928 = vmatprep.subr.bf16.mxu0 0
  %1929 = vmatpush1.bf16.msra.mxu0 0
  %1930 = vmatprep.subr.bf16.mxu0 0
  %1931 = vmatpush1.bf16.msra.mxu0 0
  %1932 = vmatprep.subr.bf16.mxu0 0
  %1933 = vmatpush1.bf16.msra.mxu0 0
  %1934 = vmatprep.mubr.bf16.mxu0 0
  %1935 = vmatmul.mubr.bf16.gmra.mrb[0].mxu0 %v1891
  %v1936 = vpop.f32.mrb[0].mxu0
  %v1937 = vadd.f32 0.0, %v1936
  %v1938 = vpop.f32.mrb[0].mxu0
  %v1939 = vpop.f32.mrb[0].mxu0
  %v1940 = vadd.f32 0.0, %v1939
  %v1941 = vpop.f32.mrb[0].mxu0
  %1942 = vmatprep.mubr.bf16.mxu0 0
  %1943 = vmatmul.mubr.bf16.gmra.mrb[0].mxu0 %v1894
  %v1944 = vpop.f32.mrb[0].mxu0
  %v1945 = vadd.f32 0.0, %v1944
  %v1946 = vpop.f32.mrb[0].mxu0
  %v1947 = vpop.f32.mrb[0].mxu0
  %v1948 = vadd.f32 0.0, %v1947
  %v1949 = vpop.f32.mrb[0].mxu0
  %1950 = vmatprep.mubr.bf16.mxu0 0
  %1951 = vmatmul.mubr.bf16.gmra.mrb[0].mxu0 %v1897
  %v1952 = vpop.f32.mrb[0].mxu0
  %v1953 = vadd.f32 0.0, %v1952
  %v1954 = vpop.f32.mrb[0].mxu0
  %v1955 = vpop.f32.mrb[0].mxu0
  %v1956 = vadd.f32 0.0, %v1955
  %v1957 = vpop.f32.mrb[0].mxu0
  %1958 = vmatprep.mubr.bf16.mxu0 0
  %1959 = vmatmul.mubr.bf16.gmra.mrb[0].mxu0 %v1900
  %v1960 = vpop.f32.mrb[0].mxu0
  %v1961 = vadd.f32 0.0, %v1960
  %v1962 = vpop.f32.mrb[0].mxu0
  %v1963 = vpop.f32.mrb[0].mxu0
  %v1964 = vadd.f32 0.0, %v1963
  %v1965 = vpop.f32.mrb[0].mxu0
  %1966 = vdwg.mxu0
  %1975 = vrot.lane.b32.xlu0 %v1679, 2
  %v1976 = vpop.permute.xlu0 %1975
  %1977 = vrot.lane.b32.xlu0 %v1682, 2
  %v1978 = vpop.permute.xlu0 %1977
  %1979 = vrot.lane.b32.xlu0 %v1687, 2
  %v1980 = vpop.permute.xlu0 %1979
  %1981 = vrot.lane.b32.xlu0 %v1690, 2
  %v1982 = vpop.permute.xlu0 %1981
  %1983 = vrot.lane.b32.xlu0 %v1695, 2
  %v1984 = vpop.permute.xlu0 %1983
  %1985 = vrot.lane.b32.xlu0 %v1698, 2
  %v1986 = vpop.permute.xlu0 %1985
  %1987 = vrot.lane.b32.xlu0 %v1703, 2
  %v1988 = vpop.permute.xlu0 %1987
  %1989 = vrot.lane.b32.xlu0 %v1706, 2
  %v1990 = vpop.permute.xlu0 %1989
  %2007 = vrot.lane.b32.xlu0 %v1808, 4
  %v2008 = vpop.permute.xlu0 %2007
  %2009 = vrot.lane.b32.xlu0 %v1811, 4
  %v2010 = vpop.permute.xlu0 %2009
  %2011 = vrot.lane.b32.xlu0 %v1816, 4
  %v2012 = vpop.permute.xlu0 %2011
  %2013 = vrot.lane.b32.xlu0 %v1819, 4
  %v2014 = vpop.permute.xlu0 %2013
  %2015 = vrot.lane.b32.xlu0 %v1824, 4
  %v2016 = vpop.permute.xlu0 %2015
  %2017 = vrot.lane.b32.xlu0 %v1827, 4
  %v2018 = vpop.permute.xlu0 %2017
  %2019 = vrot.lane.b32.xlu0 %v1832, 4
  %v2020 = vpop.permute.xlu0 %2019
  %2021 = vrot.lane.b32.xlu0 %v1835, 4
  %v2022 = vpop.permute.xlu0 %2021
  %2039 = vrot.lane.b32.xlu0 %v1937, 6
  %v2040 = vpop.permute.xlu0 %2039
  %2041 = vrot.lane.b32.xlu0 %v1940, 6
  %v2042 = vpop.permute.xlu0 %2041
  %2043 = vrot.lane.b32.xlu0 %v1945, 6
  %v2044 = vpop.permute.xlu0 %2043
  %2045 = vrot.lane.b32.xlu0 %v1948, 6
  %v2046 = vpop.permute.xlu0 %2045
  %2047 = vrot.lane.b32.xlu0 %v1953, 6
  %v2048 = vpop.permute.xlu0 %2047
  %2049 = vrot.lane.b32.xlu0 %v1956, 6
  %v2050 = vpop.permute.xlu0 %2049
  %2051 = vrot.lane.b32.xlu0 %v1961, 6
  %v2052 = vpop.permute.xlu0 %2051
  %2053 = vrot.lane.b32.xlu0 %v1964, 6
  %v2054 = vpop.permute.xlu0 %2053
  %2071 = vrot.lane.b32.xlu0 %v901, 8
  %v2072 = vpop.permute.xlu0 %2071
  %2073 = vrot.lane.b32.xlu0 %v902, 8
  %v2074 = vpop.permute.xlu0 %2073
  %2075 = vrot.lane.b32.xlu0 %v903, 8
  %v2076 = vpop.permute.xlu0 %2075
  %2077 = vrot.lane.b32.xlu0 %v904, 8
  %v2078 = vpop.permute.xlu0 %2077
  %2079 = vrot.lane.b32.xlu0 %v905, 8
  %v2080 = vpop.permute.xlu0 %2079
  %2081 = vrot.lane.b32.xlu0 %v906, 8
  %v2082 = vpop.permute.xlu0 %2081
  %2083 = vrot.lane.b32.xlu0 %v907, 8
  %v2084 = vpop.permute.xlu0 %2083
  %2085 = vrot.lane.b32.xlu0 %v908, 8
  %v2086 = vpop.permute.xlu0 %2085
  %vm2095 = vcmask 15360
  %v2096 = vsel %vm2095, %v1558, %v1976
  %v2097 = vsel %vm2095, %v1559, %v1978
  %v2098 = vsel %vm2095, %v1560, %v1980
  %v2099 = vsel %vm2095, %v1561, %v1982
  %v2100 = vsel %vm2095, %v1562, %v1984
  %v2101 = vsel %vm2095, %v1563, %v1986
  %v2102 = vsel %vm2095, %v1564, %v1988
  %v2103 = vsel %vm2095, %v1565, %v1990
  %vm2104 = vcmask 31744
  %v2105 = vsel %vm2104, %v2096, %v2008
  %v2106 = vsel %vm2104, %v2097, %v2010
  %v2107 = vsel %vm2104, %v2098, %v2012
  %v2108 = vsel %vm2104, %v2099, %v2014
  %v2109 = vsel %vm2104, %v2100, %v2016
  %v2110 = vsel %vm2104, %v2101, %v2018
  %v2111 = vsel %vm2104, %v2102, %v2020
  %v2112 = vsel %vm2104, %v2103, %v2022
  %vm2113 = vcmask 48128
  %v2114 = vsel %vm2113, %v2105, %v2040
  %v2115 = vsel %vm2113, %v2106, %v2042
  %v2116 = vsel %vm2113, %v2107, %v2044
  %v2117 = vsel %vm2113, %v2108, %v2046
  %v2118 = vsel %vm2113, %v2109, %v2048
  %v2119 = vsel %vm2113, %v2110, %v2050
  %v2120 = vsel %vm2113, %v2111, %v2052
  %v2121 = vsel %vm2113, %v2112, %v2054
  %vm2122 = vcmask 64512
  %v2123 = vsel %vm2122, %v2114, %v2072
  %v2124 = vsel %vm2122, %v2115, %v2074
  %v2125 = vsel %vm2122, %v2116, %v2076
  %v2126 = vsel %vm2122, %v2117, %v2078
  %v2127 = vsel %vm2122, %v2118, %v2080
  %v2128 = vsel %vm2122, %v2119, %v2082
  %v2129 = vsel %vm2122, %v2120, %v2084
  %v2130 = vsel %vm2122, %v2121, %v2086
  %vm2131 = vcmask 769024
  %v2132 = vsel %vm2131, %v2123, 0.0
  %v2133 = vsel %vm2131, %v2124, 0.0
  %v2134 = vsel %vm2131, %v2125, 0.0
  %v2135 = vsel %vm2131, %v2126, 0.0
  %v2136 = vsel %vm2131, %v2127, 0.0
  %v2137 = vsel %vm2131, %v2128, 0.0
  %v2138 = vsel %vm2131, %v2129, 0.0
  %v2139 = vsel %vm2131, %v2130, 0.0
  %v2140 = vld [vmem:[%s5] sm:$0xff]
  %v2141 = vld [vmem:[%s5 + $0x14] sm:$0xff]
  %v2142 = vld [vmem:[%s5 + $0x28] sm:$0xff]
  %v2143 = vld [vmem:[%s5 + $0x3c] sm:$0xff]
  %v2144 = vld [vmem:[%s5 + $0x50] sm:$0xff]
  %v2145 = vld [vmem:[%s5 + $0x64] sm:$0xff]
  %v2146 = vld [vmem:[%s5 + $0x78] sm:$0xff]
  %v2147 = vld [vmem:[%s5 + $0x8c] sm:$0xff]
  %v2148 = vld [vmem:[%s5 + $0xa0] sm:$0xff]
  %v2149 = vld [vmem:[%s5 + $0xb4] sm:$0xff]
  %v2150 = vld [vmem:[%s5 + $0xc8] sm:$0xff]
  %v2151 = vld [vmem:[%s5 + $0xdc] sm:$0xff]
  %v2152 = vld [vmem:[%s5 + $0xf0] sm:$0xff]
  %v2153 = vld [vmem:[%s5 + $0x104] sm:$0xff]
  %v2154 = vld [vmem:[%s5 + $0x118] sm:$0xff]
  %v2155 = vld [vmem:[%s5 + $0x12c] sm:$0xff]
  %v2156 = vld [vmem:[%s5 + $0x140] sm:$0xff]
  %v2157 = vld [vmem:[%s5 + $0x154] sm:$0xff]
  %v2158 = vld [vmem:[%s5 + $0x168] sm:$0xff]
  %v2159 = vld [vmem:[%s5 + $0x17c] sm:$0xff]
  %v2160 = vld [vmem:[%s5 + $0x190] sm:$0xff]
  %v2161 = vld [vmem:[%s5 + $0x1a4] sm:$0xff]
  %v2162 = vld [vmem:[%s5 + $0x1b8] sm:$0xff]
  %v2163 = vld [vmem:[%s5 + $0x1cc] sm:$0x33]
  %v2164 = vpack.c.bf16 %v2133, %v2132
  %v2165 = vpack.c.bf16 0.0, 0.0
  %v2166 = vpack.c.bf16 %v2135, %v2134
  %v2167 = vpack.c.bf16 %v2137, %v2136
  %v2168 = vpack.c.bf16 %v2139, %v2138
  %v2169 = vld [vmem:[%s6 + $0x9] sm:$0x3]
  %v2171 = vlaneseq
  %v2172 = vshrl.u32 %v2171, 7
  %v2173 = vsub.s32 0, %v2172
  %v2174 = vrot.slane %v2169, %v2173
  %v2175 = vlaneseq
  %v2176 = vshrl.u32 %v2175, 7
  %v2177 = vsub.s32 1, %v2176
  %v2178 = vrot.slane %v2169, %v2177
  %v2205 = vunpack.c.l.b16 %v2140
  %v2206 = vunpack.c.h.b16 %v2140
  %v2207 = vunpack.c.l.b16 %v2141
  %v2208 = vunpack.c.h.b16 %v2141
  %v2209 = vunpack.c.l.b16 %v2142
  %v2210 = vunpack.c.h.b16 %v2142
  %v2211 = vunpack.c.l.b16 %v2143
  %v2212 = vunpack.c.h.b16 %v2143
  %v2213 = vunpack.c.l.b16 %v2144
  %v2214 = vunpack.c.h.b16 %v2144
  %v2215 = vunpack.c.l.b16 %v2145
  %v2216 = vunpack.c.h.b16 %v2145
  %v2217 = vunpack.c.l.b16 %v2146
  %v2218 = vunpack.c.h.b16 %v2146
  %v2219 = vunpack.c.l.b16 %v2147
  %v2220 = vunpack.c.h.b16 %v2147
  %v2221 = vunpack.c.l.b16 %v2148
  %v2222 = vunpack.c.h.b16 %v2148
  %v2223 = vunpack.c.l.b16 %v2149
  %v2224 = vunpack.c.h.b16 %v2149
  %v2225 = vunpack.c.l.b16 %v2150
  %v2226 = vunpack.c.h.b16 %v2150
  %v2227 = vunpack.c.l.b16 %v2151
  %v2228 = vunpack.c.h.b16 %v2151
  %v2229 = vunpack.c.l.b16 %v2152
  %v2230 = vunpack.c.h.b16 %v2152
  %v2231 = vunpack.c.l.b16 %v2153
  %v2232 = vunpack.c.h.b16 %v2153
  %v2233 = vunpack.c.l.b16 %v2154
  %v2234 = vunpack.c.h.b16 %v2154
  %v2235 = vunpack.c.l.b16 %v2155
  %v2236 = vunpack.c.h.b16 %v2155
  %v2237 = vunpack.c.l.b16 %v2156
  %v2238 = vunpack.c.h.b16 %v2156
  %v2239 = vunpack.c.l.b16 %v2157
  %v2240 = vunpack.c.h.b16 %v2157
  %v2241 = vunpack.c.l.b16 %v2158
  %v2242 = vunpack.c.h.b16 %v2158
  %v2243 = vunpack.c.l.b16 %v2159
  %v2244 = vunpack.c.h.b16 %v2159
  %v2245 = vunpack.c.l.b16 %v2160
  %v2246 = vunpack.c.h.b16 %v2160
  %v2247 = vunpack.c.l.b16 %v2161
  %v2248 = vunpack.c.h.b16 %v2161
  %v2249 = vunpack.c.l.b16 %v2162
  %v2250 = vunpack.c.h.b16 %v2162
  %v2251 = vunpack.c.l.b16 %v2163
  %v2252 = vunpack.c.h.b16 %v2163
  %v2253 = vpack.c.b16 %v2207, %v2205
  %v2254 = vpack.c.b16 %v2208, %v2206
  %v2255 = vpack.c.b16 %v2211, %v2209
  %v2256 = vpack.c.b16 %v2212, %v2210
  %v2257 = vpack.c.b16 %v2215, %v2213
  %v2258 = vpack.c.b16 %v2216, %v2214
  %v2259 = vpack.c.b16 %v2219, %v2217
  %v2260 = vpack.c.b16 %v2220, %v2218
  %v2261 = vpack.c.b16 %v2223, %v2221
  %v2262 = vpack.c.b16 %v2224, %v2222
  %v2263 = vpack.c.b16 %v2227, %v2225
  %v2264 = vpack.c.b16 %v2228, %v2226
  %v2265 = vpack.c.b16 %v2231, %v2229
  %v2266 = vpack.c.b16 %v2232, %v2230
  %v2267 = vpack.c.b16 %v2235, %v2233
  %v2268 = vpack.c.b16 %v2236, %v2234
  %v2269 = vpack.c.b16 %v2239, %v2237
  %v2270 = vpack.c.b16 %v2240, %v2238
  %v2271 = vpack.c.b16 %v2243, %v2241
  %v2272 = vpack.c.b16 %v2244, %v2242
  %v2273 = vpack.c.b16 %v2247, %v2245
  %v2274 = vpack.c.b16 %v2248, %v2246
  %v2275 = vpack.c.b16 %v2251, %v2249
  %v2276 = vpack.c.b16 %v2252, %v2250
  %vm2299 = vcmask 490496
  %v2301 = vsel %vm2299, %v2165, 0
  %vm2303 = vcmask 1045504
  %v2305 = vsel %vm2303, %v2275, 0
  %v2308 = vsel %vm2303, %v2276, 0
  %2310 = vmatprep.subr.bf16.mxu0 %v2254
  %2311 = vmatpush1.bf16.msra.mxu0 %v2253
  %2312 = vmatprep.subr.bf16.mxu0 %v2256
  %2313 = vmatpush1.bf16.msra.mxu0 %v2255
  %2314 = vmatprep.subr.bf16.mxu0 %v2258
  %2315 = vmatpush1.bf16.msra.mxu0 %v2257
  %2316 = vmatprep.subr.bf16.mxu0 %v2260
  %2317 = vmatpush1.bf16.msra.mxu0 %v2259
  %2318 = vmatprep.subr.bf16.mxu0 %v2262
  %2319 = vmatpush1.bf16.msra.mxu0 %v2261
  %2320 = vmatprep.subr.bf16.mxu0 %v2264
  %2321 = vmatpush1.bf16.msra.mxu0 %v2263
  %2322 = vmatprep.subr.bf16.mxu0 %v2266
  %2323 = vmatpush1.bf16.msra.mxu0 %v2265
  %2324 = vmatprep.subr.bf16.mxu0 %v2268
  %2325 = vmatpush1.bf16.msra.mxu0 %v2267
  %2326 = vmatprep.subr.bf16.mxu0 %v2270
  %2327 = vmatpush1.bf16.msra.mxu0 %v2269
  %2328 = vmatprep.subr.bf16.mxu0 %v2272
  %2329 = vmatpush1.bf16.msra.mxu0 %v2271
  %2330 = vmatprep.subr.bf16.mxu0 %v2274
  %2331 = vmatpush1.bf16.msra.mxu0 %v2273
  %2332 = vmatprep.subr.bf16.mxu0 %v2308
  %2333 = vmatpush1.bf16.msra.mxu0 %v2305
  %2334 = vmatprep.subr.bf16.mxu0 0
  %2335 = vmatpush1.bf16.msra.mxu0 0
  %2336 = vmatprep.subr.bf16.mxu0 0
  %2337 = vmatpush1.bf16.msra.mxu0 0
  %2338 = vmatprep.subr.bf16.mxu0 0
  %2339 = vmatpush1.bf16.msra.mxu0 0
  %2340 = vmatprep.subr.bf16.mxu0 0
  %2341 = vmatpush1.bf16.msra.mxu0 0
  %2342 = vmatprep.mubr.bf16.mxu0 %v2301
  %2343 = vmatmul.mubr.bf16.gmra.mrb[0].mxu0 %v2164
  %v2344 = vpop.f32.mrb[0].mxu0
  %v2345 = vadd.f32 %v2174, %v2344
  %v2346 = vpop.f32.mrb[0].mxu0
  %v2347 = vadd.f32 %v2178, %v2346
  %v2348 = vpop.f32.mrb[0].mxu0
  %v2349 = vadd.f32 %v2174, %v2348
  %v2350 = vpop.f32.mrb[0].mxu0
  %v2351 = vadd.f32 %v2178, %v2350
  %2352 = vmatprep.mubr.bf16.mxu0 %v2301
  %2353 = vmatmul.mubr.bf16.gmra.mrb[0].mxu0 %v2166
  %v2354 = vpop.f32.mrb[0].mxu0
  %v2355 = vadd.f32 %v2174, %v2354
  %v2356 = vpop.f32.mrb[0].mxu0
  %v2357 = vadd.f32 %v2178, %v2356
  %v2358 = vpop.f32.mrb[0].mxu0
  %v2359 = vadd.f32 %v2174, %v2358
  %v2360 = vpop.f32.mrb[0].mxu0
  %v2361 = vadd.f32 %v2178, %v2360
  %2362 = vmatprep.mubr.bf16.mxu0 %v2301
  %2363 = vmatmul.mubr.bf16.gmra.mrb[0].mxu0 %v2167
  %v2364 = vpop.f32.mrb[0].mxu0
  %v2365 = vadd.f32 %v2174, %v2364
  %v2366 = vpop.f32.mrb[0].mxu0
  %v2367 = vadd.f32 %v2178, %v2366
  %v2368 = vpop.f32.mrb[0].mxu0
  %v2369 = vadd.f32 %v2174, %v2368
  %v2370 = vpop.f32.mrb[0].mxu0
  %v2371 = vadd.f32 %v2178, %v2370
  %2372 = vmatprep.mubr.bf16.mxu0 %v2301
  %2373 = vmatmul.mubr.bf16.gmra.mrb[0].mxu0 %v2168
  %v2374 = vpop.f32.mrb[0].mxu0
  %v2375 = vadd.f32 %v2174, %v2374
  %v2376 = vpop.f32.mrb[0].mxu0
  %v2377 = vadd.f32 %v2178, %v2376
  %v2378 = vpop.f32.mrb[0].mxu0
  %v2379 = vadd.f32 %v2174, %v2378
  %v2380 = vpop.f32.mrb[0].mxu0
  %v2381 = vadd.f32 %v2178, %v2380
  %2382 = vdwg.mxu0
  %v2383 = vmax.f32 %v2345, 0.0
  %v2384 = vmax.f32 %v2347, 0.0
  %v2385 = vmax.f32 %v2349, 0.0
  %v2386 = vmax.f32 %v2351, 0.0
  %v2387 = vmax.f32 %v2355, 0.0
  %v2388 = vmax.f32 %v2357, 0.0
  %v2389 = vmax.f32 %v2359, 0.0
  %v2390 = vmax.f32 %v2361, 0.0
  %v2391 = vmax.f32 %v2365, 0.0
  %v2392 = vmax.f32 %v2367, 0.0
  %v2393 = vmax.f32 %v2369, 0.0
  %v2394 = vmax.f32 %v2371, 0.0
  %v2395 = vmax.f32 %v2375, 0.0
  %v2396 = vmax.f32 %v2377, 0.0
  %v2397 = vmax.f32 %v2379, 0.0
  %v2398 = vmax.f32 %v2381, 0.0
  %v2399 = vld [vmem:[%s5 + $0x8] sm:$0xff]
  %v2400 = vld [vmem:[%s5 + $0x1c] sm:$0xff]
  %v2401 = vld [vmem:[%s5 + $0x30] sm:$0xff]
  %v2402 = vld [vmem:[%s5 + $0x44] sm:$0xff]
  %v2403 = vld [vmem:[%s5 + $0x58] sm:$0xff]
  %v2404 = vld [vmem:[%s5 + $0x6c] sm:$0xff]
  %v2405 = vld [vmem:[%s5 + $0x80] sm:$0xff]
  %v2406 = vld [vmem:[%s5 + $0x94] sm:$0xff]
  %v2407 = vld [vmem:[%s5 + $0xa8] sm:$0xff]
  %v2408 = vld [vmem:[%s5 + $0xbc] sm:$0xff]
  %v2409 = vld [vmem:[%s5 + $0xd0] sm:$0xff]
  %v2410 = vld [vmem:[%s5 + $0xe4] sm:$0xff]
  %v2411 = vld [vmem:[%s5 + $0xf8] sm:$0xff]
  %v2412 = vld [vmem:[%s5 + $0x10c] sm:$0xff]
  %v2413 = vld [vmem:[%s5 + $0x120] sm:$0xff]
  %v2414 = vld [vmem:[%s5 + $0x134] sm:$0xff]
  %v2415 = vld [vmem:[%s5 + $0x148] sm:$0xff]
  %v2416 = vld [vmem:[%s5 + $0x15c] sm:$0xff]
  %v2417 = vld [vmem:[%s5 + $0x170] sm:$0xff]
  %v2418 = vld [vmem:[%s5 + $0x184] sm:$0xff]
  %v2419 = vld [vmem:[%s5 + $0x198] sm:$0xff]
  %v2420 = vld [vmem:[%s5 + $0x1ac] sm:$0xff]
  %v2421 = vld [vmem:[%s5 + $0x1c0] sm:$0xff]
  %v2422 = vld [vmem:[%s5 + $0x1d4] sm:$0x33]
  %v2423 = vpack.c.bf16 %v2385, %v2383
  %v2424 = vpack.c.bf16 %v2386, %v2384
  %v2425 = vpack.c.bf16 %v2389, %v2387
  %v2426 = vpack.c.bf16 %v2390, %v2388
  %v2427 = vpack.c.bf16 %v2393, %v2391
  %v2428 = vpack.c.bf16 %v2394, %v2392
  %v2429 = vpack.c.bf16 %v2397, %v2395
  %v2430 = vpack.c.bf16 %v2398, %v2396
  %v2431 = vld [vmem:[%s6 + $0xb] sm:$0x3]
  %v2433 = vlaneseq
  %v2434 = vshrl.u32 %v2433, 7
  %v2435 = vsub.s32 0, %v2434
  %v2436 = vrot.slane %v2431, %v2435
  %v2437 = vlaneseq
  %v2438 = vshrl.u32 %v2437, 7
  %v2439 = vsub.s32 1, %v2438
  %v2440 = vrot.slane %v2431, %v2439
  %v2467 = vunpack.c.l.b16 %v2399
  %v2468 = vunpack.c.h.b16 %v2399
  %v2469 = vunpack.c.l.b16 %v2400
  %v2470 = vunpack.c.h.b16 %v2400
  %v2471 = vunpack.c.l.b16 %v2401
  %v2472 = vunpack.c.h.b16 %v2401
  %v2473 = vunpack.c.l.b16 %v2402
  %v2474 = vunpack.c.h.b16 %v2402
  %v2475 = vunpack.c.l.b16 %v2403
  %v2476 = vunpack.c.h.b16 %v2403
  %v2477 = vunpack.c.l.b16 %v2404
  %v2478 = vunpack.c.h.b16 %v2404
  %v2479 = vunpack.c.l.b16 %v2405
  %v2480 = vunpack.c.h.b16 %v2405
  %v2481 = vunpack.c.l.b16 %v2406
  %v2482 = vunpack.c.h.b16 %v2406
  %v2483 = vunpack.c.l.b16 %v2407
  %v2484 = vunpack.c.h.b16 %v2407
  %v2485 = vunpack.c.l.b16 %v2408
  %v2486 = vunpack.c.h.b16 %v2408
  %v2487 = vunpack.c.l.b16 %v2409
  %v2488 = vunpack.c.h.b16 %v2409
  %v2489 = vunpack.c.l.b16 %v2410
  %v2490 = vunpack.c.h.b16 %v2410
  %v2491 = vunpack.c.l.b16 %v2411
  %v2492 = vunpack.c.h.b16 %v2411
  %v2493 = vunpack.c.l.b16 %v2412
  %v2494 = vunpack.c.h.b16 %v2412
  %v2495 = vunpack.c.l.b16 %v2413
  %v2496 = vunpack.c.h.b16 %v2413
  %v2497 = vunpack.c.l.b16 %v2414
  %v2498 = vunpack.c.h.b16 %v2414
  %v2499 = vunpack.c.l.b16 %v2415
  %v2500 = vunpack.c.h.b16 %v2415
  %v2501 = vunpack.c.l.b16 %v2416
  %v2502 = vunpack.c.h.b16 %v2416
  %v2503 = vunpack.c.l.b16 %v2417
  %v2504 = vunpack.c.h.b16 %v2417
  %v2505 = vunpack.c.l.b16 %v2418
  %v2506 = vunpack.c.h.b16 %v2418
  %v2507 = vunpack.c.l.b16 %v2419
  %v2508 = vunpack.c.h.b16 %v2419
  %v2509 = vunpack.c.l.b16 %v2420
  %v2510 = vunpack.c.h.b16 %v2420
  %v2511 = vunpack.c.l.b16 %v2421
  %v2512 = vunpack.c.h.b16 %v2421
  %v2513 = vunpack.c.l.b16 %v2422
  %v2514 = vunpack.c.h.b16 %v2422
  %v2515 = vpack.c.b16 %v2469, %v2467
  %v2516 = vpack.c.b16 %v2470, %v2468
  %v2517 = vpack.c.b16 %v2473, %v2471
  %v2518 = vpack.c.b16 %v2474, %v2472
  %v2519 = vpack.c.b16 %v2477, %v2475
  %v2520 = vpack.c.b16 %v2478, %v2476
  %v2521 = vpack.c.b16 %v2481, %v2479
  %v2522 = vpack.c.b16 %v2482, %v2480
  %v2523 = vpack.c.b16 %v2485, %v2483
  %v2524 = vpack.c.b16 %v2486, %v2484
  %v2525 = vpack.c.b16 %v2489, %v2487
  %v2526 = vpack.c.b16 %v2490, %v2488
  %v2527 = vpack.c.b16 %v2493, %v2491
  %v2528 = vpack.c.b16 %v2494, %v2492
  %v2529 = vpack.c.b16 %v2497, %v2495
  %v2530 = vpack.c.b16 %v2498, %v2496
  %v2531 = vpack.c.b16 %v2501, %v2499
  %v2532 = vpack.c.b16 %v2502, %v2500
  %v2533 = vpack.c.b16 %v2505, %v2503
  %v2534 = vpack.c.b16 %v2506, %v2504
  %v2535 = vpack.c.b16 %v2509, %v2507
  %v2536 = vpack.c.b16 %v2510, %v2508
  %v2537 = vpack.c.b16 %v2513, %v2511
  %v2538 = vpack.c.b16 %v2514, %v2512
  %v2562 = vsel %vm2299, %v2424, 0
  %v2565 = vsel %vm2299, %v2426, 0
  %v2568 = vsel %vm2299, %v2428, 0
  %v2571 = vsel %vm2299, %v2430, 0
  %v2574 = vsel %vm2303, %v2537, 0
  %v2577 = vsel %vm2303, %v2538, 0
  %2579 = vmatprep.subr.bf16.mxu0 %v2516
  %2580 = vmatpush1.bf16.msra.mxu0 %v2515
  %2581 = vmatprep.subr.bf16.mxu0 %v2518
  %2582 = vmatpush1.bf16.msra.mxu0 %v2517
  %2583 = vmatprep.subr.bf16.mxu0 %v2520
  %2584 = vmatpush1.bf16.msra.mxu0 %v2519
  %2585 = vmatprep.subr.bf16.mxu0 %v2522
  %2586 = vmatpush1.bf16.msra.mxu0 %v2521
  %2587 = vmatprep.subr.bf16.mxu0 %v2524
  %2588 = vmatpush1.bf16.msra.mxu0 %v2523
  %2589 = vmatprep.subr.bf16.mxu0 %v2526
  %2590 = vmatpush1.bf16.msra.mxu0 %v2525
  %2591 = vmatprep.subr.bf16.mxu0 %v2528
  %2592 = vmatpush1.bf16.msra.mxu0 %v2527
  %2593 = vmatprep.subr.bf16.mxu0 %v2530
  %2594 = vmatpush1.bf16.msra.mxu0 %v2529
  %2595 = vmatprep.subr.bf16.mxu0 %v2532
  %2596 = vmatpush1.bf16.msra.mxu0 %v2531
  %2597 = vmatprep.subr.bf16.mxu0 %v2534
  %2598 = vmatpush1.bf16.msra.mxu0 %v2533
  %2599 = vmatprep.subr.bf16.mxu0 %v2536
  %2600 = vmatpush1.bf16.msra.mxu0 %v2535
  %2601 = vmatprep.subr.bf16.mxu0 %v2577
  %2602 = vmatpush1.bf16.msra.mxu0 %v2574
  %2603 = vmatprep.subr.bf16.mxu0 0
  %2604 = vmatpush1.bf16.msra.mxu0 0
  %2605 = vmatprep.subr.bf16.mxu0 0
  %2606 = vmatpush1.bf16.msra.mxu0 0
  %2607 = vmatprep.subr.bf16.mxu0 0
  %2608 = vmatpush1.bf16.msra.mxu0 0
  %2609 = vmatprep.subr.bf16.mxu0 0
  %2610 = vmatpush1.bf16.msra.mxu0 0
  %2611 = vmatprep.mubr.bf16.mxu0 %v2562
  %2612 = vmatmul.mubr.bf16.gmra.mrb[0].mxu0 %v2423
  %v2613 = vpop.f32.mrb[0].mxu0
  %v2614 = vadd.f32 %v2436, %v2613
  %v2615 = vpop.f32.mrb[0].mxu0
  %v2616 = vadd.f32 %v2440, %v2615
  %v2617 = vpop.f32.mrb[0].mxu0
  %v2618 = vadd.f32 %v2436, %v2617
  %v2619 = vpop.f32.mrb[0].mxu0
  %v2620 = vadd.f32 %v2440, %v2619
  %2621 = vmatprep.mubr.bf16.mxu0 %v2565
  %2622 = vmatmul.mubr.bf16.gmra.mrb[0].mxu0 %v2425
  %v2623 = vpop.f32.mrb[0].mxu0
  %v2624 = vadd.f32 %v2436, %v2623
  %v2625 = vpop.f32.mrb[0].mxu0
  %v2626 = vadd.f32 %v2440, %v2625
  %v2627 = vpop.f32.mrb[0].mxu0
  %v2628 = vadd.f32 %v2436, %v2627
  %v2629 = vpop.f32.mrb[0].mxu0
  %v2630 = vadd.f32 %v2440, %v2629
  %2631 = vmatprep.mubr.bf16.mxu0 %v2568
  %2632 = vmatmul.mubr.bf16.gmra.mrb[0].mxu0 %v2427
  %v2633 = vpop.f32.mrb[0].mxu0
  %v2634 = vadd.f32 %v2436, %v2633
  %v2635 = vpop.f32.mrb[0].mxu0
  %v2636 = vadd.f32 %v2440, %v2635
  %v2637 = vpop.f32.mrb[0].mxu0
  %v2638 = vadd.f32 %v2436, %v2637
  %v2639 = vpop.f32.mrb[0].mxu0
  %v2640 = vadd.f32 %v2440, %v2639
  %2641 = vmatprep.mubr.bf16.mxu0 %v2571
  %2642 = vmatmul.mubr.bf16.gmra.mrb[0].mxu0 %v2429
  %v2643 = vpop.f32.mrb[0].mxu0
  %v2644 = vadd.f32 %v2436, %v2643
  %v2645 = vpop.f32.mrb[0].mxu0
  %v2646 = vadd.f32 %v2440, %v2645
  %v2647 = vpop.f32.mrb[0].mxu0
  %v2648 = vadd.f32 %v2436, %v2647
  %v2649 = vpop.f32.mrb[0].mxu0
  %v2650 = vadd.f32 %v2440, %v2649
  %2651 = vdwg.mxu0
  %v2652 = vmax.f32 %v2614, 0.0
  %v2653 = vmax.f32 %v2616, 0.0
  %v2654 = vmax.f32 %v2618, 0.0
  %v2655 = vmax.f32 %v2620, 0.0
  %v2656 = vmax.f32 %v2624, 0.0
  %v2657 = vmax.f32 %v2626, 0.0
  %v2658 = vmax.f32 %v2628, 0.0
  %v2659 = vmax.f32 %v2630, 0.0
  %v2660 = vmax.f32 %v2634, 0.0
  %v2661 = vmax.f32 %v2636, 0.0
  %v2662 = vmax.f32 %v2638, 0.0
  %v2663 = vmax.f32 %v2640, 0.0
  %v2664 = vmax.f32 %v2644, 0.0
  %v2665 = vmax.f32 %v2646, 0.0
  %v2666 = vmax.f32 %v2648, 0.0
  %v2667 = vmax.f32 %v2650, 0.0
  %v2668 = vld [vmem:[%s5 + $0x10] sm:$0xf]
  %v2669 = vld [vmem:[%s5 + $0x24] sm:$0xf]
  %v2670 = vld [vmem:[%s5 + $0x38] sm:$0xf]
  %v2671 = vld [vmem:[%s5 + $0x4c] sm:$0xf]
  %v2672 = vld [vmem:[%s5 + $0x60] sm:$0xf]
  %v2673 = vld [vmem:[%s5 + $0x74] sm:$0xf]
  %v2674 = vld [vmem:[%s5 + $0x88] sm:$0xf]
  %v2675 = vld [vmem:[%s5 + $0x9c] sm:$0xf]
  %v2676 = vld [vmem:[%s5 + $0xb0] sm:$0xf]
  %v2677 = vld [vmem:[%s5 + $0xc4] sm:$0xf]
  %v2678 = vld [vmem:[%s5 + $0xd8] sm:$0xf]
  %v2679 = vld [vmem:[%s5 + $0xec] sm:$0xf]
  %v2680 = vld [vmem:[%s5 + $0x100] sm:$0xf]
  %v2681 = vld [vmem:[%s5 + $0x114] sm:$0xf]
  %v2682 = vld [vmem:[%s5 + $0x128] sm:$0xf]
  %v2683 = vld [vmem:[%s5 + $0x13c] sm:$0xf]
  %v2684 = vld [vmem:[%s5 + $0x150] sm:$0xf]
  %v2685 = vld [vmem:[%s5 + $0x164] sm:$0xf]
  %v2686 = vld [vmem:[%s5 + $0x178] sm:$0xf]
  %v2687 = vld [vmem:[%s5 + $0x18c] sm:$0xf]
  %v2688 = vld [vmem:[%s5 + $0x1a0] sm:$0xf]
  %v2689 = vld [vmem:[%s5 + $0x1b4] sm:$0xf]
  %v2690 = vld [vmem:[%s5 + $0x1c8] sm:$0xf]
  %v2691 = vld [vmem:[%s5 + $0x1dc] sm:$0x3]
  %v2692 = vpack.c.bf16 %v2654, %v2652
  %v2693 = vpack.c.bf16 %v2655, %v2653
  %v2694 = vpack.c.bf16 %v2658, %v2656
  %v2695 = vpack.c.bf16 %v2659, %v2657
  %v2696 = vpack.c.bf16 %v2662, %v2660
  %v2697 = vpack.c.bf16 %v2663, %v2661
  %v2698 = vpack.c.bf16 %v2666, %v2664
  %v2699 = vpack.c.bf16 %v2667, %v2665
  %v2700 = vld [vmem:[%s6 + $0xd] sm:$0x1]
  %v2702 = vlaneseq
  %v2703 = vshrl.u32 %v2702, 7
  %v2704 = vsub.s32 0, %v2703
  %v2705 = vrot.slane %v2700, %v2704
  %v2731 = vunpack.c.l.b16 %v2668
  %v2732 = vunpack.c.l.b16 %v2669
  %v2733 = vunpack.c.l.b16 %v2670
  %v2734 = vunpack.c.l.b16 %v2671
  %v2735 = vunpack.c.l.b16 %v2672
  %v2736 = vunpack.c.l.b16 %v2673
  %v2737 = vunpack.c.l.b16 %v2674
  %v2738 = vunpack.c.l.b16 %v2675
  %v2739 = vunpack.c.l.b16 %v2676
  %v2740 = vunpack.c.l.b16 %v2677
  %v2741 = vunpack.c.l.b16 %v2678
  %v2742 = vunpack.c.l.b16 %v2679
  %v2743 = vunpack.c.l.b16 %v2680
  %v2744 = vunpack.c.l.b16 %v2681
  %v2745 = vunpack.c.l.b16 %v2682
  %v2746 = vunpack.c.l.b16 %v2683
  %v2747 = vunpack.c.l.b16 %v2684
  %v2748 = vunpack.c.l.b16 %v2685
  %v2749 = vunpack.c.l.b16 %v2686
  %v2750 = vunpack.c.l.b16 %v2687
  %v2751 = vunpack.c.l.b16 %v2688
  %v2752 = vunpack.c.l.b16 %v2689
  %v2753 = vunpack.c.l.b16 %v2690
  %v2754 = vunpack.c.l.b16 %v2691
  %v2755 = vpack.c.b16 %v2732, %v2731
  %v2756 = vpack.c.b16 %v2734, %v2733
  %v2757 = vpack.c.b16 %v2736, %v2735
  %v2758 = vpack.c.b16 %v2738, %v2737
  %v2759 = vpack.c.b16 %v2740, %v2739
  %v2760 = vpack.c.b16 %v2742, %v2741
  %v2761 = vpack.c.b16 %v2744, %v2743
  %v2762 = vpack.c.b16 %v2746, %v2745
  %v2763 = vpack.c.b16 %v2748, %v2747
  %v2764 = vpack.c.b16 %v2750, %v2749
  %v2765 = vpack.c.b16 %v2752, %v2751
  %v2766 = vpack.c.b16 %v2754, %v2753
  %v2779 = vsel %vm2299, %v2693, 0
  %v2782 = vsel %vm2299, %v2695, 0
  %v2785 = vsel %vm2299, %v2697, 0
  %v2788 = vsel %vm2299, %v2699, 0
  %v2791 = vsel %vm2303, %v2766, 0
  %2793 = vmatprep.subr.bf16.mxu0 0
  %2794 = vmatpush1.bf16.msra.mxu0 %v2755
  %2795 = vmatprep.subr.bf16.mxu0 0
  %2796 = vmatpush1.bf16.msra.mxu0 %v2756
  %2797 = vmatprep.subr.bf16.mxu0 0
  %2798 = vmatpush1.bf16.msra.mxu0 %v2757
  %2799 = vmatprep.subr.bf16.mxu0 0
  %2800 = vmatpush1.bf16.msra.mxu0 %v2758
  %2801 = vmatprep.subr.bf16.mxu0 0
  %2802 = vmatpush1.bf16.msra.mxu0 %v2759
  %2803 = vmatprep.subr.bf16.mxu0 0
  %2804 = vmatpush1.bf16.msra.mxu0 %v2760
  %2805 = vmatprep.subr.bf16.mxu0 0
  %2806 = vmatpush1.bf16.msra.mxu0 %v2761
  %2807 = vmatprep.subr.bf16.mxu0 0
  %2808 = vmatpush1.bf16.msra.mxu0 %v2762
  %2809 = vmatprep.subr.bf16.mxu0 0
  %2810 = vmatpush1.bf16.msra.mxu0 %v2763
  %2811 = vmatprep.subr.bf16.mxu0 0
  %2812 = vmatpush1.bf16.msra.mxu0 %v2764
  %2813 = vmatprep.subr.bf16.mxu0 0
  %2814 = vmatpush1.bf16.msra.mxu0 %v2765
  %2815 = vmatprep.subr.bf16.mxu0 0
  %2816 = vmatpush1.bf16.msra.mxu0 %v2791
  %2817 = vmatprep.subr.bf16.mxu0 0
  %2818 = vmatpush1.bf16.msra.mxu0 0
  %2819 = vmatprep.subr.bf16.mxu0 0
  %2820 = vmatpush1.bf16.msra.mxu0 0
  %2821 = vmatprep.subr.bf16.mxu0 0
  %2822 = vmatpush1.bf16.msra.mxu0 0
  %2823 = vmatprep.subr.bf16.mxu0 0
  %2824 = vmatpush1.bf16.msra.mxu0 0
  %2825 = vmatprep.mubr.bf16.mxu0 %v2779
  %2826 = vmatmul.mubr.bf16.gmra.mrb[0].mxu0 %v2692
  %v2827 = vpop.f32.mrb[0].mxu0
  %v2828 = vadd.f32 %v2705, %v2827
  %v2829 = vpop.f32.mrb[0].mxu0
  %v2830 = vpop.f32.mrb[0].mxu0
  %v2831 = vadd.f32 %v2705, %v2830
  %v2832 = vpop.f32.mrb[0].mxu0
  %2833 = vmatprep.mubr.bf16.mxu0 %v2782
  %2834 = vmatmul.mubr.bf16.gmra.mrb[0].mxu0 %v2694
  %v2835 = vpop.f32.mrb[0].mxu0
  %v2836 = vadd.f32 %v2705, %v2835
  %v2837 = vpop.f32.mrb[0].mxu0
  %v2838 = vpop.f32.mrb[0].mxu0
  %v2839 = vadd.f32 %v2705, %v2838
  %v2840 = vpop.f32.mrb[0].mxu0
  %2841 = vmatprep.mubr.bf16.mxu0 %v2785
  %2842 = vmatmul.mubr.bf16.gmra.mrb[0].mxu0 %v2696
  %v2843 = vpop.f32.mrb[0].mxu0
  %v2844 = vadd.f32 %v2705, %v2843
  %v2845 = vpop.f32.mrb[0].mxu0
  %v2846 = vpop.f32.mrb[0].mxu0
  %v2847 = vadd.f32 %v2705, %v2846
  %v2848 = vpop.f32.mrb[0].mxu0
  %2849 = vmatprep.mubr.bf16.mxu0 %v2788
  %2850 = vmatmul.mubr.bf16.gmra.mrb[0].mxu0 %v2698
  %v2851 = vpop.f32.mrb[0].mxu0
  %v2852 = vadd.f32 %v2705, %v2851
  %v2853 = vpop.f32.mrb[0].mxu0
  %v2854 = vpop.f32.mrb[0].mxu0
  %v2855 = vadd.f32 %v2705, %v2854
  %v2856 = vpop.f32.mrb[0].mxu0
  %2857 = vdwg.mxu0
  %v2858 = vmul.f32 %v2828, 0.02
  %v2859 = vmul.f32 %v2831, 0.02
  %v2860 = vmul.f32 %v2836, 0.02
  %v2861 = vmul.f32 %v2839, 0.02
  %v2862 = vmul.f32 %v2844, 0.02
  %v2863 = vmul.f32 %v2847, 0.02
  %v2864 = vmul.f32 %v2852, 0.02
  %v2865 = vmul.f32 %v2855, 0.02
  %v2866 = vtanh.pop %v2858
  %v2867 = vtanh.pop %v2859
  %v2868 = vtanh.pop %v2860
  %v2869 = vtanh.pop %v2861
  %v2870 = vtanh.pop %v2862
  %v2871 = vtanh.pop %v2863
  %v2872 = vtanh.pop %v2864
  %v2873 = vtanh.pop %v2865
  %v2874 = vmul.f32 %v2866, 50.0
  %v2875 = vmul.f32 %v2867, 50.0
  %v2876 = vmul.f32 %v2868, 50.0
  %v2877 = vmul.f32 %v2869, 50.0
  %v2878 = vmul.f32 %v2870, 50.0
  %v2879 = vmul.f32 %v2871, 50.0
  %v2880 = vmul.f32 %v2872, 50.0
  %v2881 = vmul.f32 %v2873, 50.0
  %v2882 = vmul.f32 %v2874, 0.5
  %v2883 = vmul.f32 %v2875, 0.5
  %v2884 = vmul.f32 %v2876, 0.5
  %v2885 = vmul.f32 %v2877, 0.5
  %v2886 = vmul.f32 %v2878, 0.5
  %v2887 = vmul.f32 %v2879, 0.5
  %v2888 = vmul.f32 %v2880, 0.5
  %v2889 = vmul.f32 %v2881, 0.5
  %v2890 = vmul.f32 %v2882, 1.442695
  %v2891 = vpow.pop %v2890
  %v2892 = vmul.f32 %v2883, 1.442695
  %v2893 = vpow.pop %v2892
  %v2894 = vmul.f32 %v2884, 1.442695
  %v2895 = vpow.pop %v2894
  %v2896 = vmul.f32 %v2885, 1.442695
  %v2897 = vpow.pop %v2896
  %v2898 = vmul.f32 %v2886, 1.442695
  %v2899 = vpow.pop %v2898
  %v2900 = vmul.f32 %v2887, 1.442695
  %v2901 = vpow.pop %v2900
  %v2902 = vmul.f32 %v2888, 1.442695
  %v2903 = vpow.pop %v2902
  %v2904 = vmul.f32 %v2889, 1.442695
  %v2905 = vpow.pop %v2904
  %v2906 = vmul.f32 %v2891, 0.5
  %v2907 = vmul.f32 %v2893, 0.5
  %v2908 = vmul.f32 %v2895, 0.5
  %v2909 = vmul.f32 %v2897, 0.5
  %v2910 = vmul.f32 %v2899, 0.5
  %v2911 = vmul.f32 %v2901, 0.5
  %v2912 = vmul.f32 %v2903, 0.5
  %v2913 = vmul.f32 %v2905, 0.5
  %v2914 = vmul.f32 %v2874, 0.25
  %v2915 = vmul.f32 %v2875, 0.25
  %v2916 = vmul.f32 %v2876, 0.25
  %v2917 = vmul.f32 %v2877, 0.25
  %v2918 = vmul.f32 %v2878, 0.25
  %v2919 = vmul.f32 %v2879, 0.25
  %v2920 = vmul.f32 %v2880, 0.25
  %v2921 = vmul.f32 %v2881, 0.25
  %v2922 = vsub.f32 %v2914, 2.5
  %v2923 = vsub.f32 %v2915, 2.5
  %v2924 = vsub.f32 %v2916, 2.5
  %v2925 = vsub.f32 %v2917, 2.5
  %v2926 = vsub.f32 %v2918, 2.5
  %v2927 = vsub.f32 %v2919, 2.5
  %v2928 = vsub.f32 %v2920, 2.5
  %v2929 = vsub.f32 %v2921, 2.5
  %v2930 = vmul.f32 %v2922, -2.0
  %v2931 = vmul.f32 %v2923, -2.0
  %v2932 = vmul.f32 %v2924, -2.0
  %v2933 = vmul.f32 %v2925, -2.0
  %v2934 = vmul.f32 %v2926, -2.0
  %v2935 = vmul.f32 %v2927, -2.0
  %v2936 = vmul.f32 %v2928, -2.0
  %v2937 = vmul.f32 %v2929, -2.0
  %vm2938 = vcmp.gt.f32.partialorder %v2930, 4.0
  %vm2939 = vcmp.gt.f32.partialorder %v2931, 4.0
  %vm2940 = vcmp.gt.f32.partialorder %v2932, 4.0
  %vm2941 = vcmp.gt.f32.partialorder %v2933, 4.0
  %vm2942 = vcmp.gt.f32.partialorder %v2934, 4.0
  %vm2943 = vcmp.gt.f32.partialorder %v2935, 4.0
  %vm2944 = vcmp.gt.f32.partialorder %v2936, 4.0
  %vm2945 = vcmp.gt.f32.partialorder %v2937, 4.0
  %v2946 = vmin.f32 %v2930, 30.0
  %v2947 = vmin.f32 %v2931, 30.0
  %v2948 = vmin.f32 %v2932, 30.0
  %v2949 = vmin.f32 %v2933, 30.0
  %v2950 = vmin.f32 %v2934, 30.0
  %v2951 = vmin.f32 %v2935, 30.0
  %v2952 = vmin.f32 %v2936, 30.0
  %v2953 = vmin.f32 %v2937, 30.0
  %v2954 = vmul.f32 %v2946, 1.442695
  %v2955 = vpow.pop %v2954
  %v2956 = vmul.f32 %v2947, 1.442695
  %v2957 = vpow.pop %v2956
  %v2958 = vmul.f32 %v2948, 1.442695
  %v2959 = vpow.pop %v2958
  %v2960 = vmul.f32 %v2949, 1.442695
  %v2961 = vpow.pop %v2960
  %v2962 = vmul.f32 %v2950, 1.442695
  %v2963 = vpow.pop %v2962
  %v2964 = vmul.f32 %v2951, 1.442695
  %v2965 = vpow.pop %v2964
  %v2966 = vmul.f32 %v2952, 1.442695
  %v2967 = vpow.pop %v2966
  %v2968 = vmul.f32 %v2953, 1.442695
  %v2969 = vpow.pop %v2968
  %v2970 = vadd.f32 %v2955, 1.0
  %v2971 = vadd.f32 %v2957, 1.0
  %v2972 = vadd.f32 %v2959, 1.0
  %v2973 = vadd.f32 %v2961, 1.0
  %v2974 = vadd.f32 %v2963, 1.0
  %v2975 = vadd.f32 %v2965, 1.0
  %v2976 = vadd.f32 %v2967, 1.0
  %v2977 = vadd.f32 %v2969, 1.0
  %v2978 = vlog2.pop %v2970
  %v2979 = vmul.f32 %v2978, 0.6931472
  %v2980 = vlog2.pop %v2971
  %v2981 = vmul.f32 %v2980, 0.6931472
  %v2982 = vlog2.pop %v2972
  %v2983 = vmul.f32 %v2982, 0.6931472
  %v2984 = vlog2.pop %v2973
  %v2985 = vmul.f32 %v2984, 0.6931472
  %v2986 = vlog2.pop %v2974
  %v2987 = vmul.f32 %v2986, 0.6931472
  %v2988 = vlog2.pop %v2975
  %v2989 = vmul.f32 %v2988, 0.6931472
  %v2990 = vlog2.pop %v2976
  %v2991 = vmul.f32 %v2990, 0.6931472
  %v2992 = vlog2.pop %v2977
  %v2993 = vmul.f32 %v2992, 0.6931472
  %v2994 = vmul.f32 %v2979, -0.5
  %v2995 = vmul.f32 %v2981, -0.5
  %v2996 = vmul.f32 %v2983, -0.5
  %v2997 = vmul.f32 %v2985, -0.5
  %v2998 = vmul.f32 %v2987, -0.5
  %v2999 = vmul.f32 %v2989, -0.5
  %v3000 = vmul.f32 %v2991, -0.5
  %v3001 = vmul.f32 %v2993, -0.5
  %v3002 = vsel %vm2938, %v2922, %v2994
  %v3003 = vsel %vm2939, %v2923, %v2995
  %v3004 = vsel %vm2940, %v2924, %v2996
  %v3005 = vsel %vm2941, %v2925, %v2997
  %v3006 = vsel %vm2942, %v2926, %v2998
  %v3007 = vsel %vm2943, %v2927, %v2999
  %v3008 = vsel %vm2944, %v2928, %v3000
  %v3009 = vsel %vm2945, %v2929, %v3001
  %v3010 = vadd.f32 %v3002, 3.0
  %v3011 = vadd.f32 %v3003, 3.0
  %v3012 = vadd.f32 %v3004, 3.0
  %v3013 = vadd.f32 %v3005, 3.0
  %v3014 = vadd.f32 %v3006, 3.0
  %v3015 = vadd.f32 %v3007, 3.0
  %v3016 = vadd.f32 %v3008, 3.0
  %v3017 = vadd.f32 %v3009, 3.0
  %vm3018 = vcmp.lt.f32.partialorder %v2874, 0.0
  %vm3019 = vcmp.lt.f32.partialorder %v2875, 0.0
  %vm3020 = vcmp.lt.f32.partialorder %v2876, 0.0
  %vm3021 = vcmp.lt.f32.partialorder %v2877, 0.0
  %vm3022 = vcmp.lt.f32.partialorder %v2878, 0.0
  %vm3023 = vcmp.lt.f32.partialorder %v2879, 0.0
  %vm3024 = vcmp.lt.f32.partialorder %v2880, 0.0
  %vm3025 = vcmp.lt.f32.partialorder %v2881, 0.0
  %v3026 = vsel %vm3018, %v2906, %v3010
  %v3027 = vsel %vm3019, %v2907, %v3011
  %v3028 = vsel %vm3020, %v2908, %v3012
  %v3029 = vsel %vm3021, %v2909, %v3013
  %v3030 = vsel %vm3022, %v2910, %v3014
  %v3031 = vsel %vm3023, %v2911, %v3015
  %v3032 = vsel %vm3024, %v2912, %v3016
  %v3033 = vsel %vm3025, %v2913, %v3017
  %3034 = vrot.lane.b32.xlu0 %v860, 106
  %v3035 = vpop.permute.xlu0 %3034
  %3036 = vrot.lane.b32.xlu0 %v861, 106
  %v3037 = vpop.permute.xlu0 %3036
  %3038 = vrot.lane.b32.xlu0 %v862, 106
  %v3039 = vpop.permute.xlu0 %3038
  %3040 = vrot.lane.b32.xlu0 %v863, 106
  %v3041 = vpop.permute.xlu0 %3040
  %3042 = vrot.lane.b32.xlu0 %v864, 106
  %v3043 = vpop.permute.xlu0 %3042
  %3044 = vrot.lane.b32.xlu0 %v865, 106
  %v3045 = vpop.permute.xlu0 %3044
  %3046 = vrot.lane.b32.xlu0 %v866, 106
  %v3047 = vpop.permute.xlu0 %3046
  %3048 = vrot.lane.b32.xlu0 %v867, 106
  %v3049 = vpop.permute.xlu0 %3048
  %v3058 = vmul.f32 %v3026, %v3035
  %v3059 = vmul.f32 %v3027, %v3037
  %v3060 = vmul.f32 %v3028, %v3039
  %v3061 = vmul.f32 %v3029, %v3041
  %v3062 = vmul.f32 %v3030, %v3043
  %v3063 = vmul.f32 %v3031, %v3045
  %v3064 = vmul.f32 %v3032, %v3047
  %v3065 = vmul.f32 %v3033, %v3049
  %v3066 = vtanh.pop %v2828
  %v3067 = vtanh.pop %v2831
  %v3068 = vtanh.pop %v2836
  %v3069 = vtanh.pop %v2839
  %v3070 = vtanh.pop %v2844
  %v3071 = vtanh.pop %v2847
  %v3072 = vtanh.pop %v2852
  %v3073 = vtanh.pop %v2855
  %v3074 = vadd.f32 %v3066, %v3035
  %v3075 = vadd.f32 %v3067, %v3037
  %v3076 = vadd.f32 %v3068, %v3039
  %v3077 = vadd.f32 %v3069, %v3041
  %v3078 = vadd.f32 %v3070, %v3043
  %v3079 = vadd.f32 %v3071, %v3045
  %v3080 = vadd.f32 %v3072, %v3047
  %v3081 = vadd.f32 %v3073, %v3049
  %v3082 = vsub.f32 0.0, %v3074
  %v3083 = vsub.f32 0.0, %v3075
  %v3084 = vsub.f32 0.0, %v3076
  %v3085 = vsub.f32 0.0, %v3077
  %v3086 = vsub.f32 0.0, %v3078
  %v3087 = vsub.f32 0.0, %v3079
  %v3088 = vsub.f32 0.0, %v3080
  %v3089 = vsub.f32 0.0, %v3081
  %v3090 = vmul.f32 %v3082, 1.442695
  %v3091 = vpow.pop %v3090
  %v3092 = vmul.f32 %v3083, 1.442695
  %v3093 = vpow.pop %v3092
  %v3094 = vmul.f32 %v3084, 1.442695
  %v3095 = vpow.pop %v3094
  %v3096 = vmul.f32 %v3085, 1.442695
  %v3097 = vpow.pop %v3096
  %v3098 = vmul.f32 %v3086, 1.442695
  %v3099 = vpow.pop %v3098
  %v3100 = vmul.f32 %v3087, 1.442695
  %v3101 = vpow.pop %v3100
  %v3102 = vmul.f32 %v3088, 1.442695
  %v3103 = vpow.pop %v3102
  %v3104 = vmul.f32 %v3089, 1.442695
  %v3105 = vpow.pop %v3104
  %v3106 = vadd.f32 %v3091, 1.0
  %v3107 = vadd.f32 %v3093, 1.0
  %v3108 = vadd.f32 %v3095, 1.0
  %v3109 = vadd.f32 %v3097, 1.0
  %v3110 = vadd.f32 %v3099, 1.0
  %v3111 = vadd.f32 %v3101, 1.0
  %v3112 = vadd.f32 %v3103, 1.0
  %v3113 = vadd.f32 %v3105, 1.0
  %v3114 = vrcp.pop %v3106
  %v3115 = vmul.f32 1.0, %v3114
  %v3116 = vrcp.pop %v3107
  %v3117 = vmul.f32 1.0, %v3116
  %v3118 = vrcp.pop %v3108
  %v3119 = vmul.f32 1.0, %v3118
  %v3120 = vrcp.pop %v3109
  %v3121 = vmul.f32 1.0, %v3120
  %v3122 = vrcp.pop %v3110
  %v3123 = vmul.f32 1.0, %v3122
  %v3124 = vrcp.pop %v3111
  %v3125 = vmul.f32 1.0, %v3124
  %v3126 = vrcp.pop %v3112
  %v3127 = vmul.f32 1.0, %v3126
  %v3128 = vrcp.pop %v3113
  %v3129 = vmul.f32 1.0, %v3128
  %v3130 = vsub.f32 0.0, %v2828
  %v3131 = vsub.f32 0.0, %v2831
  %v3132 = vsub.f32 0.0, %v2836
  %v3133 = vsub.f32 0.0, %v2839
  %v3134 = vsub.f32 0.0, %v2844
  %v3135 = vsub.f32 0.0, %v2847
  %v3136 = vsub.f32 0.0, %v2852
  %v3137 = vsub.f32 0.0, %v2855
  %v3138 = vmul.f32 %v3130, 1.442695
  %v3139 = vpow.pop %v3138
  %v3140 = vmul.f32 %v3131, 1.442695
  %v3141 = vpow.pop %v3140
  %v3142 = vmul.f32 %v3132, 1.442695
  %v3143 = vpow.pop %v3142
  %v3144 = vmul.f32 %v3133, 1.442695
  %v3145 = vpow.pop %v3144
  %v3146 = vmul.f32 %v3134, 1.442695
  %v3147 = vpow.pop %v3146
  %v3148 = vmul.f32 %v3135, 1.442695
  %v3149 = vpow.pop %v3148
  %v3150 = vmul.f32 %v3136, 1.442695
  %v3151 = vpow.pop %v3150
  %v3152 = vmul.f32 %v3137, 1.442695
  %v3153 = vpow.pop %v3152
  %v3154 = vadd.f32 %v3139, 1.0
  %v3155 = vadd.f32 %v3141, 1.0
  %v3156 = vadd.f32 %v3143, 1.0
  %v3157 = vadd.f32 %v3145, 1.0
  %v3158 = vadd.f32 %v3147, 1.0
  %v3159 = vadd.f32 %v3149, 1.0
  %v3160 = vadd.f32 %v3151, 1.0
  %v3161 = vadd.f32 %v3153, 1.0
  %v3162 = vrcp.pop %v3154
  %v3163 = vmul.f32 1.0, %v3162
  %v3164 = vrcp.pop %v3155
  %v3165 = vmul.f32 1.0, %v3164
  %v3166 = vrcp.pop %v3156
  %v3167 = vmul.f32 1.0, %v3166
  %v3168 = vrcp.pop %v3157
  %v3169 = vmul.f32 1.0, %v3168
  %v3170 = vrcp.pop %v3158
  %v3171 = vmul.f32 1.0, %v3170
  %v3172 = vrcp.pop %v3159
  %v3173 = vmul.f32 1.0, %v3172
  %v3174 = vrcp.pop %v3160
  %v3175 = vmul.f32 1.0, %v3174
  %v3176 = vrcp.pop %v3161
  %v3177 = vmul.f32 1.0, %v3176
  %3186 = vrot.lane.b32.xlu0 %v3058, 2
  %v3187 = vpop.permute.xlu0 %3186
  %3188 = vrot.lane.b32.xlu0 %v3059, 2
  %v3189 = vpop.permute.xlu0 %3188
  %3190 = vrot.lane.b32.xlu0 %v3060, 2
  %v3191 = vpop.permute.xlu0 %3190
  %3192 = vrot.lane.b32.xlu0 %v3061, 2
  %v3193 = vpop.permute.xlu0 %3192
  %3194 = vrot.lane.b32.xlu0 %v3062, 2
  %v3195 = vpop.permute.xlu0 %3194
  %3196 = vrot.lane.b32.xlu0 %v3063, 2
  %v3197 = vpop.permute.xlu0 %3196
  %3198 = vrot.lane.b32.xlu0 %v3064, 2
  %v3199 = vpop.permute.xlu0 %3198
  %3200 = vrot.lane.b32.xlu0 %v3065, 2
  %v3201 = vpop.permute.xlu0 %3200
  %3218 = vrot.lane.b32.xlu0 %v3115, 2
  %v3219 = vpop.permute.xlu0 %3218
  %3220 = vrot.lane.b32.xlu0 %v3117, 2
  %v3221 = vpop.permute.xlu0 %3220
  %3222 = vrot.lane.b32.xlu0 %v3119, 2
  %v3223 = vpop.permute.xlu0 %3222
  %3224 = vrot.lane.b32.xlu0 %v3121, 2
  %v3225 = vpop.permute.xlu0 %3224
  %3226 = vrot.lane.b32.xlu0 %v3123, 2
  %v3227 = vpop.permute.xlu0 %3226
  %3228 = vrot.lane.b32.xlu0 %v3125, 2
  %v3229 = vpop.permute.xlu0 %3228
  %3230 = vrot.lane.b32.xlu0 %v3127, 2
  %v3231 = vpop.permute.xlu0 %3230
  %3232 = vrot.lane.b32.xlu0 %v3129, 2
  %v3233 = vpop.permute.xlu0 %3232
  %3250 = vrot.lane.b32.xlu0 %v3163, 2
  %v3251 = vpop.permute.xlu0 %3250
  %3252 = vrot.lane.b32.xlu0 %v3165, 2
  %v3253 = vpop.permute.xlu0 %3252
  %3254 = vrot.lane.b32.xlu0 %v3167, 2
  %v3255 = vpop.permute.xlu0 %3254
  %3256 = vrot.lane.b32.xlu0 %v3169, 2
  %v3257 = vpop.permute.xlu0 %3256
  %3258 = vrot.lane.b32.xlu0 %v3171, 2
  %v3259 = vpop.permute.xlu0 %3258
  %3260 = vrot.lane.b32.xlu0 %v3173, 2
  %v3261 = vpop.permute.xlu0 %3260
  %3262 = vrot.lane.b32.xlu0 %v3175, 2
  %v3263 = vpop.permute.xlu0 %3262
  %3264 = vrot.lane.b32.xlu0 %v3177, 2
  %v3265 = vpop.permute.xlu0 %3264
  %v3274 = vsel %vm2095, %v1558, %v3187
  %v3275 = vsel %vm2095, %v1559, %v3189
  %v3276 = vsel %vm2095, %v1560, %v3191
  %v3277 = vsel %vm2095, %v1561, %v3193
  %v3278 = vsel %vm2095, %v1562, %v3195
  %v3279 = vsel %vm2095, %v1563, %v3197
  %v3280 = vsel %vm2095, %v1564, %v3199
  %v3281 = vsel %vm2095, %v1565, %v3201
  %v3282 = vsel %vm2104, %v3274, %v3219
  %v3283 = vsel %vm2104, %v3275, %v3221
  %v3284 = vsel %vm2104, %v3276, %v3223
  %v3285 = vsel %vm2104, %v3277, %v3225
  %v3286 = vsel %vm2104, %v3278, %v3227
  %v3287 = vsel %vm2104, %v3279, %v3229
  %v3288 = vsel %vm2104, %v3280, %v3231
  %v3289 = vsel %vm2104, %v3281, %v3233
  %vm3290 = vcmask 39936
  %v3291 = vsel %vm3290, %v3282, %v3251
  %v3292 = vsel %vm3290, %v3283, %v3253
  %v3293 = vsel %vm3290, %v3284, %v3255
  %v3294 = vsel %vm3290, %v3285, %v3257
  %v3295 = vsel %vm3290, %v3286, %v3259
  %v3296 = vsel %vm3290, %v3287, %v3261
  %v3297 = vsel %vm3290, %v3288, %v3263
  %v3298 = vsel %vm3290, %v3289, %v3265
  %v3299 = vsel %vm2113, %v3291, 0.0
  %v3300 = vsel %vm2113, %v3292, 0.0
  %v3301 = vsel %vm2113, %v3293, 0.0
  %v3302 = vsel %vm2113, %v3294, 0.0
  %v3303 = vsel %vm2113, %v3295, 0.0
  %v3304 = vsel %vm2113, %v3296, 0.0
  %v3305 = vsel %vm2113, %v3297, 0.0
  %v3306 = vsel %vm2113, %v3298, 0.0
  %3307 = vst [vmem:[%s7] sm:$0xff] %v3299
  %3308 = vst [vmem:[%s7 + $0x8] sm:$0xff] %v3300
  %3309 = vst [vmem:[%s7 + $0x10] sm:$0xff] %v3301
  %3310 = vst [vmem:[%s7 + $0x18] sm:$0xff] %v3302
  %3311 = vst [vmem:[%s7 + $0x20] sm:$0xff] %v3303
  %3312 = vst [vmem:[%s7 + $0x28] sm:$0xff] %v3304
  %3313 = vst [vmem:[%s7 + $0x30] sm:$0xff] %v3305
  %3314 = vst [vmem:[%s7 + $0x38] sm:$0xff] %v3306
  // Predicated region
  $region30: #{init_net_forward.3} parent=0 // pred_check
    _
  $region31: #{init_net_forward.3} parent=0 // pred_check_branch
    %3316 = sbr.rel (0) target = $region33
  $region32: #{init_net_forward.3} parent=0 // pred_region
    _
  $region33: #{init_net_forward.3} parent=0 // pred_fallthru
    _
  // Predicated region
  $region34: #{init_net_forward.3} parent=0 // pred_check
    _
  $region35: #{init_net_forward.3} parent=0 // pred_check_branch
    %3318 = sbr.rel (0) target = $region37
  $region36: #{init_net_forward.3} parent=0 // pred_region
    _
  $region37: #{init_net_forward.3} parent=0 // pred_fallthru
    _

</llo_original>
